<compile_context>
chip_gen: v7x
topology: tpu7x:2x2x1
jax: 0.10.0
libtpu: 0.0.40
codegen_flags: <defaults>
</compile_context>

<pallas_src>
from functools import partial

import jax
import jax.numpy as jnp
from jax.experimental import pallas as pl
from jax.experimental.pallas import tpu as pltpu

IMG_FLAT = 784          # 28*28
D_PAD = 896             # 7 * 128  (labels, ones column and zero pad live in cols 784..895)
H1 = 1024
H2 = 256
OUT_PAD = 128           # lane-dense padded output width (logit in column 0)


def _round_up(n, m):
    return ((n + m - 1) // m) * m


def _pick_tb(b):
    """Batch-tile heuristic: large tiles amortize per-grid-step overhead, but
    keep row-padding waste no worse than the 256-row MXU floor."""
    if b <= 256:
        return _round_up(max(b, 16), 16)      # single tile, 16-row (bf16) aligned
    best_tb = 256
    best_waste = _round_up(b, 256) - b
    for cand in (512, 1024):
        waste = _round_up(b, cand) - b
        if waste <= best_waste:               # prefer the larger tile on ties
            best_tb, best_waste = cand, waste
    return best_tb


def _mlp_kernel(x_ref, w1_ref, w2_ref, b2_ref, w3_ref, o_ref):
    # Layer 1: (tb, 896)bf16 @ (896, 1024)bf16 -> f32 acc.
    # b1 is folded into w1 via the ones column of x, so no separate bias add.
    h1 = jnp.dot(x_ref[...], w1_ref[...], preferred_element_type=jnp.float32)
    # bf16 epilogue: cast first, ReLU in bf16 (ReLU commutes with rounding).
    h1 = jnp.maximum(h1.astype(jnp.bfloat16), 0.0)
    # Dropout(p=0.0) == identity.

    # Layer 2: (tb, 1024)bf16 @ (1024, 256)bf16 -> f32, + b2 (f32, tiny), ReLU bf16.
    h2 = jnp.dot(h1, w2_ref[...], preferred_element_type=jnp.float32) + b2_ref[...]
    h2 = jnp.maximum(h2.astype(jnp.bfloat16), 0.0)

    # Layer 3: (tb, 256)bf16 @ (256, 128)bf16 -> f32.  Only column 0 carries the
    # real logit; the other 127 columns have zero weights -> lane-dense store.
    o_ref[...] = jnp.dot(h2, w3_ref[...], preferred_element_type=jnp.float32)


@partial(jax.jit, static_argnames=("nc",))
def discriminator_forward(x, y, params, *, nc):
    """x: (B, 1, 28, 28) float32 NCHW; y: (B,) int32 labels. Returns (B,) logits."""
    b = x.shape[0]
    w1, b1, w2, b2, w3, b3 = params
    d_in = IMG_FLAT + nc
    if d_in + 1 > D_PAD:
        raise ValueError(
            f"nc={nc} too large: need 784 + nc + 1 (bias column) <= {D_PAD}")

    # ---- batch tiling ----------------------------------------------------
    tb = _pick_tb(b)
    b_pad = _round_up(b, tb)
    n_tiles = b_pad // tb
    grid = (n_tiles,)

    # ---- fused padded, lane-aligned input: [flatten | one_hot | 1 | zeros] -
    x_flat = x.reshape(b, -1).astype(jnp.bfloat16)               # (B, 784)
    y_oh = jax.nn.one_hot(y, nc, dtype=jnp.bfloat16)             # (B, nc)
    ones_col = jnp.ones((b, 1), jnp.bfloat16)                    # bias column
    pieces = [x_flat, y_oh, ones_col]
    pad_cols = D_PAD - (d_in + 1)
    if pad_cols:
        pieces.append(jnp.zeros((b, pad_cols), jnp.bfloat16))
    x_in = jnp.concatenate(pieces, axis=1)                       # (B, 896) bf16
    if b_pad > b:
        x_in = jnp.pad(x_in, ((0, b_pad - b), (0, 0)))           # (B_pad, 896)

    # ---- weight prep (one-time in real use): pad + bf16, fold b1 ----------
    w1p = jnp.zeros((D_PAD, H1), jnp.float32)
    w1p = w1p.at[:d_in, :].set(w1)
    w1p = w1p.at[d_in, :].set(b1.reshape(H1))    # bias row * ones column == +b1
    w1p = w1p.astype(jnp.bfloat16)                               # (896, 1024)
    w2b = w2.astype(jnp.bfloat16)                                # (1024, 256)
    w3p = jnp.zeros((H2, OUT_PAD), jnp.float32).at[:, 0:1].set(w3)
    w3p = w3p.astype(jnp.bfloat16)                               # (256, 128)
    b2f = b2.reshape(1, H2).astype(jnp.float32)                  # (1, 256)

    # Megacore sharding only pays off when there are enough tiles to split;
    # otherwise it just duplicates the resident-weight DMA (v7x).
    dim_sem = ("parallel",) if n_tiles >= 4 else ("arbitrary",)

    out = pl.pallas_call(
        _mlp_kernel,
        out_shape=jax.ShapeDtypeStruct((b_pad, OUT_PAD), jnp.float32),
        grid=grid,
        in_specs=[
            pl.BlockSpec((tb, D_PAD), lambda i: (i, 0)),         # x tile, pipelined
            pl.BlockSpec((D_PAD, H1), lambda i: (0, 0)),         # weights resident
            pl.BlockSpec((H1, H2), lambda i: (0, 0)),
            pl.BlockSpec((1, H2), lambda i: (0, 0)),
            pl.BlockSpec((H2, OUT_PAD), lambda i: (0, 0)),
        ],
        out_specs=pl.BlockSpec((tb, OUT_PAD), lambda i: (i, 0)),
        compiler_params=pltpu.CompilerParams(
            dimension_semantics=dim_sem,
            vmem_limit_bytes=32 * 1024 * 1024,
        ),
    )(x_in, w1p, w2b, b2f, w3p)

    # Slice the real logits (column 0, first B rows) and fold the scalar b3.
    return out[:b, 0] + b3.reshape(())


def init_params(key, nc):
    """Deterministic init mimicking PyTorch nn.Linear default (U(-1/sqrt(fan_in), +))."""
    d_in = IMG_FLAT + nc
    ks = jax.random.split(key, 6)

    def lin(kw, kb, fan_in, fan_out):
        bound = 1.0 / (fan_in ** 0.5)
        w = jax.random.uniform(kw, (fan_in, fan_out), jnp.float32, -bound, bound)
        b = jax.random.uniform(kb, (1, fan_out), jnp.float32, -bound, bound)
        return w, b

    w1, b1 = lin(ks[0], ks[1], d_in, H1)
    w2, b2 = lin(ks[2], ks[3], H1, H2)
    w3, b3 = lin(ks[4], ks[5], H2, 1)
    return (w1, b1, w2, b2, w3, b3)


def _reference(x, y, params, nc, quantize):
    """Plain-JAX reference.  quantize=True mirrors the kernel's bf16 matmul
    inputs (f32 accumulation); quantize=False is the original f32 module."""
    b = x.shape[0]
    x_flat = x.reshape(b, -1).astype(jnp.float32)
    y_oh = jax.nn.one_hot(y, nc, dtype=jnp.float32)
    h = jnp.concatenate([x_flat, y_oh], axis=1)
    w1, b1, w2, b2, w3, b3 = params

    def q(a):
        return a.astype(jnp.bfloat16) if quantize else a

    h = jnp.maximum(jnp.dot(q(h), q(w1), preferred_element_type=jnp.float32) + b1, 0.0)
    h = jnp.maximum(jnp.dot(q(h), q(w2), preferred_element_type=jnp.float32) + b2, 0.0)
    out = jnp.dot(q(h), q(w3), preferred_element_type=jnp.float32) + b3
    return out.reshape(-1)


if __name__ == "__main__":
    nc = 10
    batch = 4

    key = jax.random.PRNGKey(0)
    k_params, k_x, k_y = jax.random.split(key, 3)

    params = init_params(k_params, nc)
    x = jax.random.normal(k_x, (batch, 1, 28, 28), dtype=jnp.float32)
    y = jax.random.randint(k_y, (batch,), 0, nc, dtype=jnp.int32)

    logits = discriminator_forward(x, y, params, nc=nc)
    jax.block_until_ready(logits)

    assert logits.shape == (batch,)

    # Check vs a reference using the same bf16 matmul inputs (bias-fold / bf16
    # epilogue introduce only tiny additional rounding).
    ref_q = _reference(x, y, params, nc, quantize=True)
    assert jnp.allclose(logits, ref_q, atol=1e-2, rtol=1e-2), "mismatch vs bf16 reference"

    # Loose check vs the original full-f32 module semantics.
    ref_f32 = _reference(x, y, params, nc, quantize=False)
    assert jnp.allclose(logits, ref_f32, atol=1e-1, rtol=1e-1), "mismatch vs f32 reference"

    print("KERNEL_OK")
</pallas_src>

<mosaic_0001>
module attributes {stable_mosaic.version = 11 : i64} {
  func.func @_mlp_kernel(%arg0: i32, %arg1: memref<16x896xbf16, #tpu.memory_space<vmem>>, %arg2: memref<896x1024xbf16, #tpu.memory_space<vmem>>, %arg3: memref<1024x256xbf16, #tpu.memory_space<vmem>>, %arg4: memref<1x256xf32, #tpu.memory_space<vmem>>, %arg5: memref<256x128xbf16, #tpu.memory_space<vmem>>, %arg6: memref<16x128xf32, #tpu.memory_space<vmem>>) attributes {dimension_semantics = [#tpu.dimension_semantics<arbitrary>], iteration_bounds = array<i64: 1>, scalar_prefetch = 0 : i64, scratch_operands = 0 : i64, tpu.core_type = #tpu.core_type<tc>, window_params = [{transform_indices = @transform_0, window_bounds = array<i64: 16, 896>}, {pipeline_mode = #tpu.pipeline_mode<synchronous>, transform_indices = @transform_1, window_bounds = array<i64: 896, 1024>}, {pipeline_mode = #tpu.pipeline_mode<synchronous>, transform_indices = @transform_2, window_bounds = array<i64: 1024, 256>}, {pipeline_mode = #tpu.pipeline_mode<synchronous>, transform_indices = @transform_3, window_bounds = array<i64: 1, 256>}, {pipeline_mode = #tpu.pipeline_mode<synchronous>, transform_indices = @transform_4, window_bounds = array<i64: 256, 128>}, {transform_indices = @transform_5, window_bounds = array<i64: 16, 128>}]} {
    %c0 = arith.constant 0 : index
    %c0_0 = arith.constant 0 : index
    %0 = vector.load %arg1[%c0, %c0_0] : memref<16x896xbf16, #tpu.memory_space<vmem>>, vector<16x896xbf16>
    %c0_1 = arith.constant 0 : index
    %c0_2 = arith.constant 0 : index
    %1 = vector.load %arg2[%c0_1, %c0_2] : memref<896x1024xbf16, #tpu.memory_space<vmem>>, vector<896x1024xbf16>
    %cst = arith.constant dense<0.000000e+00> : vector<16x1024xf32>
    %2 = tpu.matmul %0, %1, %cst {dimension_numbers = #tpu.dot_dimension_numbers<[1], [0], [0], [1], [0, 0, 1, 1], [], []>} : vector<16x896xbf16>, vector<896x1024xbf16>, vector<16x1024xf32> -> vector<16x1024xf32>
    %3 = arith.truncf %2 : vector<16x1024xf32> to vector<16x1024xbf16>
    %cst_3 = arith.constant 0.000000e+00 : bf16
    %4 = vector.broadcast %cst_3 : bf16 to vector<16x1024xbf16>
    %5 = arith.maximumf %3, %4 : vector<16x1024xbf16>
    %c0_4 = arith.constant 0 : index
    %c0_5 = arith.constant 0 : index
    %6 = vector.load %arg3[%c0_4, %c0_5] : memref<1024x256xbf16, #tpu.memory_space<vmem>>, vector<1024x256xbf16>
    %cst_6 = arith.constant dense<0.000000e+00> : vector<16x256xf32>
    %7 = tpu.matmul %5, %6, %cst_6 {dimension_numbers = #tpu.dot_dimension_numbers<[1], [0], [0], [1], [0, 0, 1, 1], [], []>} : vector<16x1024xbf16>, vector<1024x256xbf16>, vector<16x256xf32> -> vector<16x256xf32>
    %c0_7 = arith.constant 0 : index
    %c0_8 = arith.constant 0 : index
    %8 = vector.load %arg4[%c0_7, %c0_8] : memref<1x256xf32, #tpu.memory_space<vmem>>, vector<1x256xf32>
    %9 = vector.broadcast %8 : vector<1x256xf32> to vector<16x256xf32>
    %10 = arith.addf %7, %9 : vector<16x256xf32>
    %11 = arith.truncf %10 : vector<16x256xf32> to vector<16x256xbf16>
    %cst_9 = arith.constant 0.000000e+00 : bf16
    %12 = vector.broadcast %cst_9 : bf16 to vector<16x256xbf16>
    %13 = arith.maximumf %11, %12 : vector<16x256xbf16>
    %c0_10 = arith.constant 0 : index
    %c0_11 = arith.constant 0 : index
    %14 = vector.load %arg5[%c0_10, %c0_11] : memref<256x128xbf16, #tpu.memory_space<vmem>>, vector<256x128xbf16>
    %cst_12 = arith.constant dense<0.000000e+00> : vector<16x128xf32>
    %15 = tpu.matmul %13, %14, %cst_12 {dimension_numbers = #tpu.dot_dimension_numbers<[1], [0], [0], [1], [0, 0, 1, 1], [], []>} : vector<16x256xbf16>, vector<256x128xbf16>, vector<16x128xf32> -> vector<16x128xf32>
    %c0_13 = arith.constant 0 : index
    %c0_14 = arith.constant 0 : index
    %16 = vector.load %arg6[%c0_13, %c0_14] : memref<16x128xf32, #tpu.memory_space<vmem>>, vector<16x128xf32>
    tpu.vector_store %arg6[%c0_13, %c0_14], %15 {strides = array<i32>} : memref<16x128xf32, #tpu.memory_space<vmem>>, vector<16x128xf32>,
    return
  }
  func.func @transform_0(%arg0: i32) -> (i32, i32) {
    %c0_i32 = arith.constant 0 : i32
    %c0_i32_0 = arith.constant 0 : i32
    return %arg0, %c0_i32 : i32, i32
  }
  func.func @transform_1(%arg0: i32) -> (i32, i32) {
    %c0_i32 = arith.constant 0 : i32
    %c0_i32_0 = arith.constant 0 : i32
    %c0_i32_1 = arith.constant 0 : i32
    return %c0_i32, %c0_i32_0 : i32, i32
  }
  func.func @transform_2(%arg0: i32) -> (i32, i32) {
    %c0_i32 = arith.constant 0 : i32
    %c0_i32_0 = arith.constant 0 : i32
    %c0_i32_1 = arith.constant 0 : i32
    return %c0_i32, %c0_i32_0 : i32, i32
  }
  func.func @transform_3(%arg0: i32) -> (i32, i32) {
    %c0_i32 = arith.constant 0 : i32
    %c0_i32_0 = arith.constant 0 : i32
    %c0_i32_1 = arith.constant 0 : i32
    return %c0_i32, %c0_i32_0 : i32, i32
  }
  func.func @transform_4(%arg0: i32) -> (i32, i32) {
    %c0_i32 = arith.constant 0 : i32
    %c0_i32_0 = arith.constant 0 : i32
    %c0_i32_1 = arith.constant 0 : i32
    return %c0_i32, %c0_i32_0 : i32, i32
  }
  func.func @transform_5(%arg0: i32) -> (i32, i32) {
    %c0_i32 = arith.constant 0 : i32
    %c0_i32_0 = arith.constant 0 : i32
    return %arg0, %c0_i32 : i32, i32
  }
}

</mosaic_0001>

<llo_original>
// kernel: discriminator_forward.1
$region0: #{discriminator_forward.1}
  #allocation0 [shape = 'u32[]', space=smem, size = 0x4, offset = 0x4, fixed_abs, tag = 'smem constant byte address 0x4 - core index']
  #allocation1 [shape = 'u32[144,128]{1,0:T(1,128)}', space=vmem, size = 0x12000, scoped, tag = 'internal scratch']
  %s0 = inlined_call_operand.vmem [shape: bf16[16,896], index: 0, kind: input, shape index: {}]
  %s1 = inlined_call_operand.vmem [shape: bf16[896,1024], index: 1, kind: input, shape index: {}]
  %s2 = inlined_call_operand.vmem [shape: bf16[1024,256], index: 2, kind: input, shape index: {}]
  %s3 = inlined_call_operand.vmem [shape: f32[1,256], index: 3, kind: input, shape index: {}]
  %s4 = inlined_call_operand.vmem [shape: bf16[256,128], index: 4, kind: input, shape index: {}]
  %s5 = inlined_call_operand.vmem [shape: f32[16,128], index: 5, kind: output, shape index: {}]
  %s6 = sld [smem:[#allocation0]]
  $region30: #{discriminator_forward.1} parent=0
    _
  %s8 = ssub.s32 1, %s6
  %s9 = scalar_select 0, %s8, %s6
  // Predicated region
  $region2: #{discriminator_forward.1} parent=0 // pred_check
    _
  $region3: #{discriminator_forward.1} parent=0 // pred_check_branch
    %11 = sbr.rel (0) target = $region5
  $region4: #{discriminator_forward.1} parent=0 // pred_region
    _
  $region5: #{discriminator_forward.1} parent=0 // pred_fallthru
    _
  // Predicated region
  $region6: #{discriminator_forward.1} parent=0 // pred_check
    _
  $region7: #{discriminator_forward.1} parent=0 // pred_check_branch
    %13 = sbr.rel (0) target = $region9
  $region8: #{discriminator_forward.1} parent=0 // pred_region
    _
  $region9: #{discriminator_forward.1} parent=0 // pred_fallthru
    _
  // Predicated region
  $region10: #{discriminator_forward.1} parent=0 // pred_check
    _
  $region11: #{discriminator_forward.1} parent=0 // pred_check_branch
    %15 = sbr.rel (0) target = $region13
  $region12: #{discriminator_forward.1} parent=0 // pred_region
    _
  $region13: #{discriminator_forward.1} parent=0 // pred_fallthru
    _
  // Predicated region
  $region14: #{discriminator_forward.1} parent=0 // pred_check
    _
  $region15: #{discriminator_forward.1} parent=0 // pred_check_branch
    %17 = sbr.rel (0) target = $region17
  $region16: #{discriminator_forward.1} parent=0 // pred_region
    _
  $region17: #{discriminator_forward.1} parent=0 // pred_fallthru
    _
  // Predicated region
  $region18: #{discriminator_forward.1} parent=0 // pred_check
    _
  $region19: #{discriminator_forward.1} parent=0 // pred_check_branch
    %19 = sbr.rel (0) target = $region21
  $region20: #{discriminator_forward.1} parent=0 // pred_region
    _
  $region21: #{discriminator_forward.1} parent=0 // pred_fallthru
    _
  %v21 = vld [vmem:[%s0] sm:$0xff]
  %v22 = vld [vmem:[%s0 + $0x8] sm:$0xff]
  %v23 = vld [vmem:[%s0 + $0x10] sm:$0xff]
  %v24 = vld [vmem:[%s0 + $0x18] sm:$0xf]
  %v25 = vld [vmem:[%s0 + $0x1c] sm:$0xff]
  %v26 = vld [vmem:[%s0 + $0x24] sm:$0xff]
  %v27 = vld [vmem:[%s0 + $0x2c] sm:$0xff]
  %v28 = vld [vmem:[%s0 + $0x34] sm:$0xf]
  %v29 = vld [vmem:[%s1] sm:$0xff]
  %v30 = vld [vmem:[%s1 + $0x8] sm:$0xff]
  %v31 = vld [vmem:[%s1 + $0x10] sm:$0xff]
  %v32 = vld [vmem:[%s1 + $0x18] sm:$0xff]
  %v33 = vld [vmem:[%s1 + $0x20] sm:$0xff]
  %v34 = vld [vmem:[%s1 + $0x28] sm:$0xff]
  %v35 = vld [vmem:[%s1 + $0x30] sm:$0xff]
  %v36 = vld [vmem:[%s1 + $0x38] sm:$0xff]
  %v37 = vld [vmem:[%s1 + $0x40] sm:$0xff]
  %v38 = vld [vmem:[%s1 + $0x48] sm:$0xff]
  %v39 = vld [vmem:[%s1 + $0x50] sm:$0xff]
  %v40 = vld [vmem:[%s1 + $0x58] sm:$0xff]
  %v41 = vld [vmem:[%s1 + $0x60] sm:$0xff]
  %v42 = vld [vmem:[%s1 + $0x68] sm:$0xff]
  %v43 = vld [vmem:[%s1 + $0x70] sm:$0xff]
  %v44 = vld [vmem:[%s1 + $0x78] sm:$0xff]
  %v45 = vld [vmem:[%s1 + $0x80] sm:$0xff]
  %v46 = vld [vmem:[%s1 + $0x88] sm:$0xff]
  %v47 = vld [vmem:[%s1 + $0x90] sm:$0xff]
  %v48 = vld [vmem:[%s1 + $0x98] sm:$0xff]
  %v49 = vld [vmem:[%s1 + $0xa0] sm:$0xff]
  %v50 = vld [vmem:[%s1 + $0xa8] sm:$0xff]
  %v51 = vld [vmem:[%s1 + $0xb0] sm:$0xff]
  %v52 = vld [vmem:[%s1 + $0xb8] sm:$0xff]
  %v53 = vld [vmem:[%s1 + $0xc0] sm:$0xff]
  %v54 = vld [vmem:[%s1 + $0xc8] sm:$0xff]
  %v55 = vld [vmem:[%s1 + $0xd0] sm:$0xff]
  %v56 = vld [vmem:[%s1 + $0xd8] sm:$0xff]
  %v57 = vld [vmem:[%s1 + $0xe0] sm:$0xff]
  %v58 = vld [vmem:[%s1 + $0xe8] sm:$0xff]
  %v59 = vld [vmem:[%s1 + $0xf0] sm:$0xff]
  %v60 = vld [vmem:[%s1 + $0xf8] sm:$0xff]
  %v61 = vld [vmem:[%s1 + $0x100] sm:$0xff]
  %v62 = vld [vmem:[%s1 + $0x108] sm:$0xff]
  %v63 = vld [vmem:[%s1 + $0x110] sm:$0xff]
  %v64 = vld [vmem:[%s1 + $0x118] sm:$0xff]
  %v65 = vld [vmem:[%s1 + $0x120] sm:$0xff]
  %v66 = vld [vmem:[%s1 + $0x128] sm:$0xff]
  %v67 = vld [vmem:[%s1 + $0x130] sm:$0xff]
  %v68 = vld [vmem:[%s1 + $0x138] sm:$0xff]
  %v69 = vld [vmem:[%s1 + $0x140] sm:$0xff]
  %v70 = vld [vmem:[%s1 + $0x148] sm:$0xff]
  %v71 = vld [vmem:[%s1 + $0x150] sm:$0xff]
  %v72 = vld [vmem:[%s1 + $0x158] sm:$0xff]
  %v73 = vld [vmem:[%s1 + $0x160] sm:$0xff]
  %v74 = vld [vmem:[%s1 + $0x168] sm:$0xff]
  %v75 = vld [vmem:[%s1 + $0x170] sm:$0xff]
  %v76 = vld [vmem:[%s1 + $0x178] sm:$0xff]
  %v77 = vld [vmem:[%s1 + $0x180] sm:$0xff]
  %v78 = vld [vmem:[%s1 + $0x188] sm:$0xff]
  %v79 = vld [vmem:[%s1 + $0x190] sm:$0xff]
  %v80 = vld [vmem:[%s1 + $0x198] sm:$0xff]
  %v81 = vld [vmem:[%s1 + $0x1a0] sm:$0xff]
  %v82 = vld [vmem:[%s1 + $0x1a8] sm:$0xff]
  %v83 = vld [vmem:[%s1 + $0x1b0] sm:$0xff]
  %v84 = vld [vmem:[%s1 + $0x1b8] sm:$0xff]
  %v85 = vld [vmem:[%s1 + $0x1c0] sm:$0xff]
  %v86 = vld [vmem:[%s1 + $0x1c8] sm:$0xff]
  %v87 = vld [vmem:[%s1 + $0x1d0] sm:$0xff]
  %v88 = vld [vmem:[%s1 + $0x1d8] sm:$0xff]
  %v89 = vld [vmem:[%s1 + $0x1e0] sm:$0xff]
  %v90 = vld [vmem:[%s1 + $0x1e8] sm:$0xff]
  %v91 = vld [vmem:[%s1 + $0x1f0] sm:$0xff]
  %v92 = vld [vmem:[%s1 + $0x1f8] sm:$0xff]
  %v93 = vld [vmem:[%s1 + $0x200] sm:$0xff]
  %v94 = vld [vmem:[%s1 + $0x208] sm:$0xff]
  %v95 = vld [vmem:[%s1 + $0x210] sm:$0xff]
  %v96 = vld [vmem:[%s1 + $0x218] sm:$0xff]
  %v97 = vld [vmem:[%s1 + $0x220] sm:$0xff]
  %v98 = vld [vmem:[%s1 + $0x228] sm:$0xff]
  %v99 = vld [vmem:[%s1 + $0x230] sm:$0xff]
  %v100 = vld [vmem:[%s1 + $0x238] sm:$0xff]
  %v101 = vld [vmem:[%s1 + $0x240] sm:$0xff]
  %v102 = vld [vmem:[%s1 + $0x248] sm:$0xff]
  %v103 = vld [vmem:[%s1 + $0x250] sm:$0xff]
  %v104 = vld [vmem:[%s1 + $0x258] sm:$0xff]
  %v105 = vld [vmem:[%s1 + $0x260] sm:$0xff]
  %v106 = vld [vmem:[%s1 + $0x268] sm:$0xff]
  %v107 = vld [vmem:[%s1 + $0x270] sm:$0xff]
  %v108 = vld [vmem:[%s1 + $0x278] sm:$0xff]
  %v109 = vld [vmem:[%s1 + $0x280] sm:$0xff]
  %v110 = vld [vmem:[%s1 + $0x288] sm:$0xff]
  %v111 = vld [vmem:[%s1 + $0x290] sm:$0xff]
  %v112 = vld [vmem:[%s1 + $0x298] sm:$0xff]
  %v113 = vld [vmem:[%s1 + $0x2a0] sm:$0xff]
  %v114 = vld [vmem:[%s1 + $0x2a8] sm:$0xff]
  %v115 = vld [vmem:[%s1 + $0x2b0] sm:$0xff]
  %v116 = vld [vmem:[%s1 + $0x2b8] sm:$0xff]
  %v117 = vld [vmem:[%s1 + $0x2c0] sm:$0xff]
  %v118 = vld [vmem:[%s1 + $0x2c8] sm:$0xff]
  %v119 = vld [vmem:[%s1 + $0x2d0] sm:$0xff]
  %v120 = vld [vmem:[%s1 + $0x2d8] sm:$0xff]
  %v121 = vld [vmem:[%s1 + $0x2e0] sm:$0xff]
  %v122 = vld [vmem:[%s1 + $0x2e8] sm:$0xff]
  %v123 = vld [vmem:[%s1 + $0x2f0] sm:$0xff]
  %v124 = vld [vmem:[%s1 + $0x2f8] sm:$0xff]
  %v125 = vld [vmem:[%s1 + $0x300] sm:$0xff]
  %v126 = vld [vmem:[%s1 + $0x308] sm:$0xff]
  %v127 = vld [vmem:[%s1 + $0x310] sm:$0xff]
  %v128 = vld [vmem:[%s1 + $0x318] sm:$0xff]
  %v129 = vld [vmem:[%s1 + $0x320] sm:$0xff]
  %v130 = vld [vmem:[%s1 + $0x328] sm:$0xff]
  %v131 = vld [vmem:[%s1 + $0x330] sm:$0xff]
  %v132 = vld [vmem:[%s1 + $0x338] sm:$0xff]
  %v133 = vld [vmem:[%s1 + $0x340] sm:$0xff]
  %v134 = vld [vmem:[%s1 + $0x348] sm:$0xff]
  %v135 = vld [vmem:[%s1 + $0x350] sm:$0xff]
  %v136 = vld [vmem:[%s1 + $0x358] sm:$0xff]
  %v137 = vld [vmem:[%s1 + $0x360] sm:$0xff]
  %v138 = vld [vmem:[%s1 + $0x368] sm:$0xff]
  %v139 = vld [vmem:[%s1 + $0x370] sm:$0xff]
  %v140 = vld [vmem:[%s1 + $0x378] sm:$0xff]
  %v141 = vld [vmem:[%s1 + $0x380] sm:$0xff]
  %v142 = vld [vmem:[%s1 + $0x388] sm:$0xff]
  %v143 = vld [vmem:[%s1 + $0x390] sm:$0xff]
  %v144 = vld [vmem:[%s1 + $0x398] sm:$0xff]
  %v145 = vld [vmem:[%s1 + $0x3a0] sm:$0xff]
  %v146 = vld [vmem:[%s1 + $0x3a8] sm:$0xff]
  %v147 = vld [vmem:[%s1 + $0x3b0] sm:$0xff]
  %v148 = vld [vmem:[%s1 + $0x3b8] sm:$0xff]
  %v149 = vld [vmem:[%s1 + $0x3c0] sm:$0xff]
  %v150 = vld [vmem:[%s1 + $0x3c8] sm:$0xff]
  %v151 = vld [vmem:[%s1 + $0x3d0] sm:$0xff]
  %v152 = vld [vmem:[%s1 + $0x3d8] sm:$0xff]
  %v153 = vld [vmem:[%s1 + $0x3e0] sm:$0xff]
  %v154 = vld [vmem:[%s1 + $0x3e8] sm:$0xff]
  %v155 = vld [vmem:[%s1 + $0x3f0] sm:$0xff]
  %v156 = vld [vmem:[%s1 + $0x3f8] sm:$0xff]
  %v157 = vld [vmem:[%s1 + $0x400] sm:$0xff]
  %v158 = vld [vmem:[%s1 + $0x408] sm:$0xff]
  %v159 = vld [vmem:[%s1 + $0x410] sm:$0xff]
  %v160 = vld [vmem:[%s1 + $0x418] sm:$0xff]
  %v161 = vld [vmem:[%s1 + $0x420] sm:$0xff]
  %v162 = vld [vmem:[%s1 + $0x428] sm:$0xff]
  %v163 = vld [vmem:[%s1 + $0x430] sm:$0xff]
  %v164 = vld [vmem:[%s1 + $0x438] sm:$0xff]
  %v165 = vld [vmem:[%s1 + $0x440] sm:$0xff]
  %v166 = vld [vmem:[%s1 + $0x448] sm:$0xff]
  %v167 = vld [vmem:[%s1 + $0x450] sm:$0xff]
  %v168 = vld [vmem:[%s1 + $0x458] sm:$0xff]
  %v169 = vld [vmem:[%s1 + $0x460] sm:$0xff]
  %v170 = vld [vmem:[%s1 + $0x468] sm:$0xff]
  %v171 = vld [vmem:[%s1 + $0x470] sm:$0xff]
  %v172 = vld [vmem:[%s1 + $0x478] sm:$0xff]
  %v173 = vld [vmem:[%s1 + $0x480] sm:$0xff]
  %v174 = vld [vmem:[%s1 + $0x488] sm:$0xff]
  %v175 = vld [vmem:[%s1 + $0x490] sm:$0xff]
  %v176 = vld [vmem:[%s1 + $0x498] sm:$0xff]
  %v177 = vld [vmem:[%s1 + $0x4a0] sm:$0xff]
  %v178 = vld [vmem:[%s1 + $0x4a8] sm:$0xff]
  %v179 = vld [vmem:[%s1 + $0x4b0] sm:$0xff]
  %v180 = vld [vmem:[%s1 + $0x4b8] sm:$0xff]
  %v181 = vld [vmem:[%s1 + $0x4c0] sm:$0xff]
  %v182 = vld [vmem:[%s1 + $0x4c8] sm:$0xff]
  %v183 = vld [vmem:[%s1 + $0x4d0] sm:$0xff]
  %v184 = vld [vmem:[%s1 + $0x4d8] sm:$0xff]
  %v185 = vld [vmem:[%s1 + $0x4e0] sm:$0xff]
  %v186 = vld [vmem:[%s1 + $0x4e8] sm:$0xff]
  %v187 = vld [vmem:[%s1 + $0x4f0] sm:$0xff]
  %v188 = vld [vmem:[%s1 + $0x4f8] sm:$0xff]
  %v189 = vld [vmem:[%s1 + $0x500] sm:$0xff]
  %v190 = vld [vmem:[%s1 + $0x508] sm:$0xff]
  %v191 = vld [vmem:[%s1 + $0x510] sm:$0xff]
  %v192 = vld [vmem:[%s1 + $0x518] sm:$0xff]
  %v193 = vld [vmem:[%s1 + $0x520] sm:$0xff]
  %v194 = vld [vmem:[%s1 + $0x528] sm:$0xff]
  %v195 = vld [vmem:[%s1 + $0x530] sm:$0xff]
  %v196 = vld [vmem:[%s1 + $0x538] sm:$0xff]
  %v197 = vld [vmem:[%s1 + $0x540] sm:$0xff]
  %v198 = vld [vmem:[%s1 + $0x548] sm:$0xff]
  %v199 = vld [vmem:[%s1 + $0x550] sm:$0xff]
  %v200 = vld [vmem:[%s1 + $0x558] sm:$0xff]
  %v201 = vld [vmem:[%s1 + $0x560] sm:$0xff]
  %v202 = vld [vmem:[%s1 + $0x568] sm:$0xff]
  %v203 = vld [vmem:[%s1 + $0x570] sm:$0xff]
  %v204 = vld [vmem:[%s1 + $0x578] sm:$0xff]
  %v205 = vld [vmem:[%s1 + $0x580] sm:$0xff]
  %v206 = vld [vmem:[%s1 + $0x588] sm:$0xff]
  %v207 = vld [vmem:[%s1 + $0x590] sm:$0xff]
  %v208 = vld [vmem:[%s1 + $0x598] sm:$0xff]
  %v209 = vld [vmem:[%s1 + $0x5a0] sm:$0xff]
  %v210 = vld [vmem:[%s1 + $0x5a8] sm:$0xff]
  %v211 = vld [vmem:[%s1 + $0x5b0] sm:$0xff]
  %v212 = vld [vmem:[%s1 + $0x5b8] sm:$0xff]
  %v213 = vld [vmem:[%s1 + $0x5c0] sm:$0xff]
  %v214 = vld [vmem:[%s1 + $0x5c8] sm:$0xff]
  %v215 = vld [vmem:[%s1 + $0x5d0] sm:$0xff]
  %v216 = vld [vmem:[%s1 + $0x5d8] sm:$0xff]
  %v217 = vld [vmem:[%s1 + $0x5e0] sm:$0xff]
  %v218 = vld [vmem:[%s1 + $0x5e8] sm:$0xff]
  %v219 = vld [vmem:[%s1 + $0x5f0] sm:$0xff]
  %v220 = vld [vmem:[%s1 + $0x5f8] sm:$0xff]
  %v221 = vld [vmem:[%s1 + $0x600] sm:$0xff]
  %v222 = vld [vmem:[%s1 + $0x608] sm:$0xff]
  %v223 = vld [vmem:[%s1 + $0x610] sm:$0xff]
  %v224 = vld [vmem:[%s1 + $0x618] sm:$0xff]
  %v225 = vld [vmem:[%s1 + $0x620] sm:$0xff]
  %v226 = vld [vmem:[%s1 + $0x628] sm:$0xff]
  %v227 = vld [vmem:[%s1 + $0x630] sm:$0xff]
  %v228 = vld [vmem:[%s1 + $0x638] sm:$0xff]
  %v229 = vld [vmem:[%s1 + $0x640] sm:$0xff]
  %v230 = vld [vmem:[%s1 + $0x648] sm:$0xff]
  %v231 = vld [vmem:[%s1 + $0x650] sm:$0xff]
  %v232 = vld [vmem:[%s1 + $0x658] sm:$0xff]
  %v233 = vld [vmem:[%s1 + $0x660] sm:$0xff]
  %v234 = vld [vmem:[%s1 + $0x668] sm:$0xff]
  %v235 = vld [vmem:[%s1 + $0x670] sm:$0xff]
  %v236 = vld [vmem:[%s1 + $0x678] sm:$0xff]
  %v237 = vld [vmem:[%s1 + $0x680] sm:$0xff]
  %v238 = vld [vmem:[%s1 + $0x688] sm:$0xff]
  %v239 = vld [vmem:[%s1 + $0x690] sm:$0xff]
  %v240 = vld [vmem:[%s1 + $0x698] sm:$0xff]
  %v241 = vld [vmem:[%s1 + $0x6a0] sm:$0xff]
  %v242 = vld [vmem:[%s1 + $0x6a8] sm:$0xff]
  %v243 = vld [vmem:[%s1 + $0x6b0] sm:$0xff]
  %v244 = vld [vmem:[%s1 + $0x6b8] sm:$0xff]
  %v245 = vld [vmem:[%s1 + $0x6c0] sm:$0xff]
  %v246 = vld [vmem:[%s1 + $0x6c8] sm:$0xff]
  %v247 = vld [vmem:[%s1 + $0x6d0] sm:$0xff]
  %v248 = vld [vmem:[%s1 + $0x6d8] sm:$0xff]
  %v249 = vld [vmem:[%s1 + $0x6e0] sm:$0xff]
  %v250 = vld [vmem:[%s1 + $0x6e8] sm:$0xff]
  %v251 = vld [vmem:[%s1 + $0x6f0] sm:$0xff]
  %v252 = vld [vmem:[%s1 + $0x6f8] sm:$0xff]
  %v253 = vld [vmem:[%s1 + $0x700] sm:$0xff]
  %v254 = vld [vmem:[%s1 + $0x708] sm:$0xff]
  %v255 = vld [vmem:[%s1 + $0x710] sm:$0xff]
  %v256 = vld [vmem:[%s1 + $0x718] sm:$0xff]
  %v257 = vld [vmem:[%s1 + $0x720] sm:$0xff]
  %v258 = vld [vmem:[%s1 + $0x728] sm:$0xff]
  %v259 = vld [vmem:[%s1 + $0x730] sm:$0xff]
  %v260 = vld [vmem:[%s1 + $0x738] sm:$0xff]
  %v261 = vld [vmem:[%s1 + $0x740] sm:$0xff]
  %v262 = vld [vmem:[%s1 + $0x748] sm:$0xff]
  %v263 = vld [vmem:[%s1 + $0x750] sm:$0xff]
  %v264 = vld [vmem:[%s1 + $0x758] sm:$0xff]
  %v265 = vld [vmem:[%s1 + $0x760] sm:$0xff]
  %v266 = vld [vmem:[%s1 + $0x768] sm:$0xff]
  %v267 = vld [vmem:[%s1 + $0x770] sm:$0xff]
  %v268 = vld [vmem:[%s1 + $0x778] sm:$0xff]
  %v269 = vld [vmem:[%s1 + $0x780] sm:$0xff]
  %v270 = vld [vmem:[%s1 + $0x788] sm:$0xff]
  %v271 = vld [vmem:[%s1 + $0x790] sm:$0xff]
  %v272 = vld [vmem:[%s1 + $0x798] sm:$0xff]
  %v273 = vld [vmem:[%s1 + $0x7a0] sm:$0xff]
  %v274 = vld [vmem:[%s1 + $0x7a8] sm:$0xff]
  %v275 = vld [vmem:[%s1 + $0x7b0] sm:$0xff]
  %v276 = vld [vmem:[%s1 + $0x7b8] sm:$0xff]
  %v277 = vld [vmem:[%s1 + $0x7c0] sm:$0xff]
  %v278 = vld [vmem:[%s1 + $0x7c8] sm:$0xff]
  %v279 = vld [vmem:[%s1 + $0x7d0] sm:$0xff]
  %v280 = vld [vmem:[%s1 + $0x7d8] sm:$0xff]
  %v281 = vld [vmem:[%s1 + $0x7e0] sm:$0xff]
  %v282 = vld [vmem:[%s1 + $0x7e8] sm:$0xff]
  %v283 = vld [vmem:[%s1 + $0x7f0] sm:$0xff]
  %v284 = vld [vmem:[%s1 + $0x7f8] sm:$0xff]
  %v285 = vld [vmem:[%s1 + $0x800] sm:$0xff]
  %v286 = vld [vmem:[%s1 + $0x808] sm:$0xff]
  %v287 = vld [vmem:[%s1 + $0x810] sm:$0xff]
  %v288 = vld [vmem:[%s1 + $0x818] sm:$0xff]
  %v289 = vld [vmem:[%s1 + $0x820] sm:$0xff]
  %v290 = vld [vmem:[%s1 + $0x828] sm:$0xff]
  %v291 = vld [vmem:[%s1 + $0x830] sm:$0xff]
  %v292 = vld [vmem:[%s1 + $0x838] sm:$0xff]
  %v293 = vld [vmem:[%s1 + $0x840] sm:$0xff]
  %v294 = vld [vmem:[%s1 + $0x848] sm:$0xff]
  %v295 = vld [vmem:[%s1 + $0x850] sm:$0xff]
  %v296 = vld [vmem:[%s1 + $0x858] sm:$0xff]
  %v297 = vld [vmem:[%s1 + $0x860] sm:$0xff]
  %v298 = vld [vmem:[%s1 + $0x868] sm:$0xff]
  %v299 = vld [vmem:[%s1 + $0x870] sm:$0xff]
  %v300 = vld [vmem:[%s1 + $0x878] sm:$0xff]
  %v301 = vld [vmem:[%s1 + $0x880] sm:$0xff]
  %v302 = vld [vmem:[%s1 + $0x888] sm:$0xff]
  %v303 = vld [vmem:[%s1 + $0x890] sm:$0xff]
  %v304 = vld [vmem:[%s1 + $0x898] sm:$0xff]
  %v305 = vld [vmem:[%s1 + $0x8a0] sm:$0xff]
  %v306 = vld [vmem:[%s1 + $0x8a8] sm:$0xff]
  %v307 = vld [vmem:[%s1 + $0x8b0] sm:$0xff]
  %v308 = vld [vmem:[%s1 + $0x8b8] sm:$0xff]
  %v309 = vld [vmem:[%s1 + $0x8c0] sm:$0xff]
  %v310 = vld [vmem:[%s1 + $0x8c8] sm:$0xff]
  %v311 = vld [vmem:[%s1 + $0x8d0] sm:$0xff]
  %v312 = vld [vmem:[%s1 + $0x8d8] sm:$0xff]
  %v313 = vld [vmem:[%s1 + $0x8e0] sm:$0xff]
  %v314 = vld [vmem:[%s1 + $0x8e8] sm:$0xff]
  %v315 = vld [vmem:[%s1 + $0x8f0] sm:$0xff]
  %v316 = vld [vmem:[%s1 + $0x8f8] sm:$0xff]
  %v317 = vld [vmem:[%s1 + $0x900] sm:$0xff]
  %v318 = vld [vmem:[%s1 + $0x908] sm:$0xff]
  %v319 = vld [vmem:[%s1 + $0x910] sm:$0xff]
  %v320 = vld [vmem:[%s1 + $0x918] sm:$0xff]
  %v321 = vld [vmem:[%s1 + $0x920] sm:$0xff]
  %v322 = vld [vmem:[%s1 + $0x928] sm:$0xff]
  %v323 = vld [vmem:[%s1 + $0x930] sm:$0xff]
  %v324 = vld [vmem:[%s1 + $0x938] sm:$0xff]
  %v325 = vld [vmem:[%s1 + $0x940] sm:$0xff]
  %v326 = vld [vmem:[%s1 + $0x948] sm:$0xff]
  %v327 = vld [vmem:[%s1 + $0x950] sm:$0xff]
  %v328 = vld [vmem:[%s1 + $0x958] sm:$0xff]
  %v329 = vld [vmem:[%s1 + $0x960] sm:$0xff]
  %v330 = vld [vmem:[%s1 + $0x968] sm:$0xff]
  %v331 = vld [vmem:[%s1 + $0x970] sm:$0xff]
  %v332 = vld [vmem:[%s1 + $0x978] sm:$0xff]
  %v333 = vld [vmem:[%s1 + $0x980] sm:$0xff]
  %v334 = vld [vmem:[%s1 + $0x988] sm:$0xff]
  %v335 = vld [vmem:[%s1 + $0x990] sm:$0xff]
  %v336 = vld [vmem:[%s1 + $0x998] sm:$0xff]
  %v337 = vld [vmem:[%s1 + $0x9a0] sm:$0xff]
  %v338 = vld [vmem:[%s1 + $0x9a8] sm:$0xff]
  %v339 = vld [vmem:[%s1 + $0x9b0] sm:$0xff]
  %v340 = vld [vmem:[%s1 + $0x9b8] sm:$0xff]
  %v341 = vld [vmem:[%s1 + $0x9c0] sm:$0xff]
  %v342 = vld [vmem:[%s1 + $0x9c8] sm:$0xff]
  %v343 = vld [vmem:[%s1 + $0x9d0] sm:$0xff]
  %v344 = vld [vmem:[%s1 + $0x9d8] sm:$0xff]
  %v345 = vld [vmem:[%s1 + $0x9e0] sm:$0xff]
  %v346 = vld [vmem:[%s1 + $0x9e8] sm:$0xff]
  %v347 = vld [vmem:[%s1 + $0x9f0] sm:$0xff]
  %v348 = vld [vmem:[%s1 + $0x9f8] sm:$0xff]
  %v349 = vld [vmem:[%s1 + $0xa00] sm:$0xff]
  %v350 = vld [vmem:[%s1 + $0xa08] sm:$0xff]
  %v351 = vld [vmem:[%s1 + $0xa10] sm:$0xff]
  %v352 = vld [vmem:[%s1 + $0xa18] sm:$0xff]
  %v353 = vld [vmem:[%s1 + $0xa20] sm:$0xff]
  %v354 = vld [vmem:[%s1 + $0xa28] sm:$0xff]
  %v355 = vld [vmem:[%s1 + $0xa30] sm:$0xff]
  %v356 = vld [vmem:[%s1 + $0xa38] sm:$0xff]
  %v357 = vld [vmem:[%s1 + $0xa40] sm:$0xff]
  %v358 = vld [vmem:[%s1 + $0xa48] sm:$0xff]
  %v359 = vld [vmem:[%s1 + $0xa50] sm:$0xff]
  %v360 = vld [vmem:[%s1 + $0xa58] sm:$0xff]
  %v361 = vld [vmem:[%s1 + $0xa60] sm:$0xff]
  %v362 = vld [vmem:[%s1 + $0xa68] sm:$0xff]
  %v363 = vld [vmem:[%s1 + $0xa70] sm:$0xff]
  %v364 = vld [vmem:[%s1 + $0xa78] sm:$0xff]
  %v365 = vld [vmem:[%s1 + $0xa80] sm:$0xff]
  %v366 = vld [vmem:[%s1 + $0xa88] sm:$0xff]
  %v367 = vld [vmem:[%s1 + $0xa90] sm:$0xff]
  %v368 = vld [vmem:[%s1 + $0xa98] sm:$0xff]
  %v369 = vld [vmem:[%s1 + $0xaa0] sm:$0xff]
  %v370 = vld [vmem:[%s1 + $0xaa8] sm:$0xff]
  %v371 = vld [vmem:[%s1 + $0xab0] sm:$0xff]
  %v372 = vld [vmem:[%s1 + $0xab8] sm:$0xff]
  %v373 = vld [vmem:[%s1 + $0xac0] sm:$0xff]
  %v374 = vld [vmem:[%s1 + $0xac8] sm:$0xff]
  %v375 = vld [vmem:[%s1 + $0xad0] sm:$0xff]
  %v376 = vld [vmem:[%s1 + $0xad8] sm:$0xff]
  %v377 = vld [vmem:[%s1 + $0xae0] sm:$0xff]
  %v378 = vld [vmem:[%s1 + $0xae8] sm:$0xff]
  %v379 = vld [vmem:[%s1 + $0xaf0] sm:$0xff]
  %v380 = vld [vmem:[%s1 + $0xaf8] sm:$0xff]
  %v381 = vld [vmem:[%s1 + $0xb00] sm:$0xff]
  %v382 = vld [vmem:[%s1 + $0xb08] sm:$0xff]
  %v383 = vld [vmem:[%s1 + $0xb10] sm:$0xff]
  %v384 = vld [vmem:[%s1 + $0xb18] sm:$0xff]
  %v385 = vld [vmem:[%s1 + $0xb20] sm:$0xff]
  %v386 = vld [vmem:[%s1 + $0xb28] sm:$0xff]
  %v387 = vld [vmem:[%s1 + $0xb30] sm:$0xff]
  %v388 = vld [vmem:[%s1 + $0xb38] sm:$0xff]
  %v389 = vld [vmem:[%s1 + $0xb40] sm:$0xff]
  %v390 = vld [vmem:[%s1 + $0xb48] sm:$0xff]
  %v391 = vld [vmem:[%s1 + $0xb50] sm:$0xff]
  %v392 = vld [vmem:[%s1 + $0xb58] sm:$0xff]
  %v393 = vld [vmem:[%s1 + $0xb60] sm:$0xff]
  %v394 = vld [vmem:[%s1 + $0xb68] sm:$0xff]
  %v395 = vld [vmem:[%s1 + $0xb70] sm:$0xff]
  %v396 = vld [vmem:[%s1 + $0xb78] sm:$0xff]
  %v397 = vld [vmem:[%s1 + $0xb80] sm:$0xff]
  %v398 = vld [vmem:[%s1 + $0xb88] sm:$0xff]
  %v399 = vld [vmem:[%s1 + $0xb90] sm:$0xff]
  %v400 = vld [vmem:[%s1 + $0xb98] sm:$0xff]
  %v401 = vld [vmem:[%s1 + $0xba0] sm:$0xff]
  %v402 = vld [vmem:[%s1 + $0xba8] sm:$0xff]
  %v403 = vld [vmem:[%s1 + $0xbb0] sm:$0xff]
  %v404 = vld [vmem:[%s1 + $0xbb8] sm:$0xff]
  %v405 = vld [vmem:[%s1 + $0xbc0] sm:$0xff]
  %v406 = vld [vmem:[%s1 + $0xbc8] sm:$0xff]
  %v407 = vld [vmem:[%s1 + $0xbd0] sm:$0xff]
  %v408 = vld [vmem:[%s1 + $0xbd8] sm:$0xff]
  %v409 = vld [vmem:[%s1 + $0xbe0] sm:$0xff]
  %v410 = vld [vmem:[%s1 + $0xbe8] sm:$0xff]
  %v411 = vld [vmem:[%s1 + $0xbf0] sm:$0xff]
  %v412 = vld [vmem:[%s1 + $0xbf8] sm:$0xff]
  %v413 = vld [vmem:[%s1 + $0xc00] sm:$0xff]
  %v414 = vld [vmem:[%s1 + $0xc08] sm:$0xff]
  %v415 = vld [vmem:[%s1 + $0xc10] sm:$0xff]
  %v416 = vld [vmem:[%s1 + $0xc18] sm:$0xff]
  %v417 = vld [vmem:[%s1 + $0xc20] sm:$0xff]
  %v418 = vld [vmem:[%s1 + $0xc28] sm:$0xff]
  %v419 = vld [vmem:[%s1 + $0xc30] sm:$0xff]
  %v420 = vld [vmem:[%s1 + $0xc38] sm:$0xff]
  %v421 = vld [vmem:[%s1 + $0xc40] sm:$0xff]
  %v422 = vld [vmem:[%s1 + $0xc48] sm:$0xff]
  %v423 = vld [vmem:[%s1 + $0xc50] sm:$0xff]
  %v424 = vld [vmem:[%s1 + $0xc58] sm:$0xff]
  %v425 = vld [vmem:[%s1 + $0xc60] sm:$0xff]
  %v426 = vld [vmem:[%s1 + $0xc68] sm:$0xff]
  %v427 = vld [vmem:[%s1 + $0xc70] sm:$0xff]
  %v428 = vld [vmem:[%s1 + $0xc78] sm:$0xff]
  %v429 = vld [vmem:[%s1 + $0xc80] sm:$0xff]
  %v430 = vld [vmem:[%s1 + $0xc88] sm:$0xff]
  %v431 = vld [vmem:[%s1 + $0xc90] sm:$0xff]
  %v432 = vld [vmem:[%s1 + $0xc98] sm:$0xff]
  %v433 = vld [vmem:[%s1 + $0xca0] sm:$0xff]
  %v434 = vld [vmem:[%s1 + $0xca8] sm:$0xff]
  %v435 = vld [vmem:[%s1 + $0xcb0] sm:$0xff]
  %v436 = vld [vmem:[%s1 + $0xcb8] sm:$0xff]
  %v437 = vld [vmem:[%s1 + $0xcc0] sm:$0xff]
  %v438 = vld [vmem:[%s1 + $0xcc8] sm:$0xff]
  %v439 = vld [vmem:[%s1 + $0xcd0] sm:$0xff]
  %v440 = vld [vmem:[%s1 + $0xcd8] sm:$0xff]
  %v441 = vld [vmem:[%s1 + $0xce0] sm:$0xff]
  %v442 = vld [vmem:[%s1 + $0xce8] sm:$0xff]
  %v443 = vld [vmem:[%s1 + $0xcf0] sm:$0xff]
  %v444 = vld [vmem:[%s1 + $0xcf8] sm:$0xff]
  %v445 = vld [vmem:[%s1 + $0xd00] sm:$0xff]
  %v446 = vld [vmem:[%s1 + $0xd08] sm:$0xff]
  %v447 = vld [vmem:[%s1 + $0xd10] sm:$0xff]
  %v448 = vld [vmem:[%s1 + $0xd18] sm:$0xff]
  %v449 = vld [vmem:[%s1 + $0xd20] sm:$0xff]
  %v450 = vld [vmem:[%s1 + $0xd28] sm:$0xff]
  %v451 = vld [vmem:[%s1 + $0xd30] sm:$0xff]
  %v452 = vld [vmem:[%s1 + $0xd38] sm:$0xff]
  %v453 = vld [vmem:[%s1 + $0xd40] sm:$0xff]
  %v454 = vld [vmem:[%s1 + $0xd48] sm:$0xff]
  %v455 = vld [vmem:[%s1 + $0xd50] sm:$0xff]
  %v456 = vld [vmem:[%s1 + $0xd58] sm:$0xff]
  %v457 = vld [vmem:[%s1 + $0xd60] sm:$0xff]
  %v458 = vld [vmem:[%s1 + $0xd68] sm:$0xff]
  %v459 = vld [vmem:[%s1 + $0xd70] sm:$0xff]
  %v460 = vld [vmem:[%s1 + $0xd78] sm:$0xff]
  %v461 = vld [vmem:[%s1 + $0xd80] sm:$0xff]
  %v462 = vld [vmem:[%s1 + $0xd88] sm:$0xff]
  %v463 = vld [vmem:[%s1 + $0xd90] sm:$0xff]
  %v464 = vld [vmem:[%s1 + $0xd98] sm:$0xff]
  %v465 = vld [vmem:[%s1 + $0xda0] sm:$0xff]
  %v466 = vld [vmem:[%s1 + $0xda8] sm:$0xff]
  %v467 = vld [vmem:[%s1 + $0xdb0] sm:$0xff]
  %v468 = vld [vmem:[%s1 + $0xdb8] sm:$0xff]
  %v469 = vld [vmem:[%s1 + $0xdc0] sm:$0xff]
  %v470 = vld [vmem:[%s1 + $0xdc8] sm:$0xff]
  %v471 = vld [vmem:[%s1 + $0xdd0] sm:$0xff]
  %v472 = vld [vmem:[%s1 + $0xdd8] sm:$0xff]
  %v473 = vld [vmem:[%s1 + $0xde0] sm:$0xff]
  %v474 = vld [vmem:[%s1 + $0xde8] sm:$0xff]
  %v475 = vld [vmem:[%s1 + $0xdf0] sm:$0xff]
  %v476 = vld [vmem:[%s1 + $0xdf8] sm:$0xff]
  %v485 = vunpack.c.l.b16 %v21
  %v486 = vunpack.c.h.b16 %v21
  %v487 = vunpack.c.l.b16 %v22
  %v488 = vunpack.c.h.b16 %v22
  %v489 = vunpack.c.l.b16 %v23
  %v490 = vunpack.c.h.b16 %v23
  %v491 = vunpack.c.l.b16 %v24
  %v492 = vunpack.c.l.b16 %v25
  %v493 = vunpack.c.h.b16 %v25
  %v494 = vunpack.c.l.b16 %v26
  %v495 = vunpack.c.h.b16 %v26
  %v496 = vunpack.c.l.b16 %v27
  %v497 = vunpack.c.h.b16 %v27
  %v498 = vunpack.c.l.b16 %v28
  %v499 = vpack.c.b16 %v492, %v485
  %v500 = vpack.c.b16 %v493, %v486
  %v501 = vpack.c.b16 %v494, %v487
  %v502 = vpack.c.b16 %v495, %v488
  %v503 = vpack.c.b16 %v496, %v489
  %v504 = vpack.c.b16 %v497, %v490
  %v505 = vpack.c.b16 %v498, %v491
  %v961 = vunpack.c.l.b16 %v29
  %v962 = vunpack.c.h.b16 %v29
  %v963 = vunpack.c.l.b16 %v30
  %v964 = vunpack.c.h.b16 %v30
  %v965 = vunpack.c.l.b16 %v31
  %v966 = vunpack.c.h.b16 %v31
  %v967 = vunpack.c.l.b16 %v32
  %v968 = vunpack.c.h.b16 %v32
  %v969 = vunpack.c.l.b16 %v33
  %v970 = vunpack.c.h.b16 %v33
  %v971 = vunpack.c.l.b16 %v34
  %v972 = vunpack.c.h.b16 %v34
  %v973 = vunpack.c.l.b16 %v35
  %v974 = vunpack.c.h.b16 %v35
  %v975 = vunpack.c.l.b16 %v36
  %v976 = vunpack.c.h.b16 %v36
  %v977 = vunpack.c.l.b16 %v37
  %v978 = vunpack.c.h.b16 %v37
  %v979 = vunpack.c.l.b16 %v38
  %v980 = vunpack.c.h.b16 %v38
  %v981 = vunpack.c.l.b16 %v39
  %v982 = vunpack.c.h.b16 %v39
  %v983 = vunpack.c.l.b16 %v40
  %v984 = vunpack.c.h.b16 %v40
  %v985 = vunpack.c.l.b16 %v41
  %v986 = vunpack.c.h.b16 %v41
  %v987 = vunpack.c.l.b16 %v42
  %v988 = vunpack.c.h.b16 %v42
  %v989 = vunpack.c.l.b16 %v43
  %v990 = vunpack.c.h.b16 %v43
  %v991 = vunpack.c.l.b16 %v44
  %v992 = vunpack.c.h.b16 %v44
  %v993 = vunpack.c.l.b16 %v45
  %v994 = vunpack.c.h.b16 %v45
  %v995 = vunpack.c.l.b16 %v46
  %v996 = vunpack.c.h.b16 %v46
  %v997 = vunpack.c.l.b16 %v47
  %v998 = vunpack.c.h.b16 %v47
  %v999 = vunpack.c.l.b16 %v48
  %v1000 = vunpack.c.h.b16 %v48
  %v1001 = vunpack.c.l.b16 %v49
  %v1002 = vunpack.c.h.b16 %v49
  %v1003 = vunpack.c.l.b16 %v50
  %v1004 = vunpack.c.h.b16 %v50
  %v1005 = vunpack.c.l.b16 %v51
  %v1006 = vunpack.c.h.b16 %v51
  %v1007 = vunpack.c.l.b16 %v52
  %v1008 = vunpack.c.h.b16 %v52
  %v1009 = vunpack.c.l.b16 %v53
  %v1010 = vunpack.c.h.b16 %v53
  %v1011 = vunpack.c.l.b16 %v54
  %v1012 = vunpack.c.h.b16 %v54
  %v1013 = vunpack.c.l.b16 %v55
  %v1014 = vunpack.c.h.b16 %v55
  %v1015 = vunpack.c.l.b16 %v56
  %v1016 = vunpack.c.h.b16 %v56
  %v1017 = vunpack.c.l.b16 %v57
  %v1018 = vunpack.c.h.b16 %v57
  %v1019 = vunpack.c.l.b16 %v58
  %v1020 = vunpack.c.h.b16 %v58
  %v1021 = vunpack.c.l.b16 %v59
  %v1022 = vunpack.c.h.b16 %v59
  %v1023 = vunpack.c.l.b16 %v60
  %v1024 = vunpack.c.h.b16 %v60
  %v1025 = vunpack.c.l.b16 %v61
  %v1026 = vunpack.c.h.b16 %v61
  %v1027 = vunpack.c.l.b16 %v62
  %v1028 = vunpack.c.h.b16 %v62
  %v1029 = vunpack.c.l.b16 %v63
  %v1030 = vunpack.c.h.b16 %v63
  %v1031 = vunpack.c.l.b16 %v64
  %v1032 = vunpack.c.h.b16 %v64
  %v1033 = vunpack.c.l.b16 %v65
  %v1034 = vunpack.c.h.b16 %v65
  %v1035 = vunpack.c.l.b16 %v66
  %v1036 = vunpack.c.h.b16 %v66
  %v1037 = vunpack.c.l.b16 %v67
  %v1038 = vunpack.c.h.b16 %v67
  %v1039 = vunpack.c.l.b16 %v68
  %v1040 = vunpack.c.h.b16 %v68
  %v1041 = vunpack.c.l.b16 %v69
  %v1042 = vunpack.c.h.b16 %v69
  %v1043 = vunpack.c.l.b16 %v70
  %v1044 = vunpack.c.h.b16 %v70
  %v1045 = vunpack.c.l.b16 %v71
  %v1046 = vunpack.c.h.b16 %v71
  %v1047 = vunpack.c.l.b16 %v72
  %v1048 = vunpack.c.h.b16 %v72
  %v1049 = vunpack.c.l.b16 %v73
  %v1050 = vunpack.c.h.b16 %v73
  %v1051 = vunpack.c.l.b16 %v74
  %v1052 = vunpack.c.h.b16 %v74
  %v1053 = vunpack.c.l.b16 %v75
  %v1054 = vunpack.c.h.b16 %v75
  %v1055 = vunpack.c.l.b16 %v76
  %v1056 = vunpack.c.h.b16 %v76
  %v1057 = vunpack.c.l.b16 %v77
  %v1058 = vunpack.c.h.b16 %v77
  %v1059 = vunpack.c.l.b16 %v78
  %v1060 = vunpack.c.h.b16 %v78
  %v1061 = vunpack.c.l.b16 %v79
  %v1062 = vunpack.c.h.b16 %v79
  %v1063 = vunpack.c.l.b16 %v80
  %v1064 = vunpack.c.h.b16 %v80
  %v1065 = vunpack.c.l.b16 %v81
  %v1066 = vunpack.c.h.b16 %v81
  %v1067 = vunpack.c.l.b16 %v82
  %v1068 = vunpack.c.h.b16 %v82
  %v1069 = vunpack.c.l.b16 %v83
  %v1070 = vunpack.c.h.b16 %v83
  %v1071 = vunpack.c.l.b16 %v84
  %v1072 = vunpack.c.h.b16 %v84
  %v1073 = vunpack.c.l.b16 %v85
  %v1074 = vunpack.c.h.b16 %v85
  %v1075 = vunpack.c.l.b16 %v86
  %v1076 = vunpack.c.h.b16 %v86
  %v1077 = vunpack.c.l.b16 %v87
  %v1078 = vunpack.c.h.b16 %v87
  %v1079 = vunpack.c.l.b16 %v88
  %v1080 = vunpack.c.h.b16 %v88
  %v1081 = vunpack.c.l.b16 %v89
  %v1082 = vunpack.c.h.b16 %v89
  %v1083 = vunpack.c.l.b16 %v90
  %v1084 = vunpack.c.h.b16 %v90
  %v1085 = vunpack.c.l.b16 %v91
  %v1086 = vunpack.c.h.b16 %v91
  %v1087 = vunpack.c.l.b16 %v92
  %v1088 = vunpack.c.h.b16 %v92
  %v1089 = vunpack.c.l.b16 %v93
  %v1090 = vunpack.c.h.b16 %v93
  %v1091 = vunpack.c.l.b16 %v94
  %v1092 = vunpack.c.h.b16 %v94
  %v1093 = vunpack.c.l.b16 %v95
  %v1094 = vunpack.c.h.b16 %v95
  %v1095 = vunpack.c.l.b16 %v96
  %v1096 = vunpack.c.h.b16 %v96
  %v1097 = vunpack.c.l.b16 %v97
  %v1098 = vunpack.c.h.b16 %v97
  %v1099 = vunpack.c.l.b16 %v98
  %v1100 = vunpack.c.h.b16 %v98
  %v1101 = vunpack.c.l.b16 %v99
  %v1102 = vunpack.c.h.b16 %v99
  %v1103 = vunpack.c.l.b16 %v100
  %v1104 = vunpack.c.h.b16 %v100
  %v1105 = vunpack.c.l.b16 %v101
  %v1106 = vunpack.c.h.b16 %v101
  %v1107 = vunpack.c.l.b16 %v102
  %v1108 = vunpack.c.h.b16 %v102
  %v1109 = vunpack.c.l.b16 %v103
  %v1110 = vunpack.c.h.b16 %v103
  %v1111 = vunpack.c.l.b16 %v104
  %v1112 = vunpack.c.h.b16 %v104
  %v1113 = vunpack.c.l.b16 %v105
  %v1114 = vunpack.c.h.b16 %v105
  %v1115 = vunpack.c.l.b16 %v106
  %v1116 = vunpack.c.h.b16 %v106
  %v1117 = vunpack.c.l.b16 %v107
  %v1118 = vunpack.c.h.b16 %v107
  %v1119 = vunpack.c.l.b16 %v108
  %v1120 = vunpack.c.h.b16 %v108
  %v1121 = vunpack.c.l.b16 %v109
  %v1122 = vunpack.c.h.b16 %v109
  %v1123 = vunpack.c.l.b16 %v110
  %v1124 = vunpack.c.h.b16 %v110
  %v1125 = vunpack.c.l.b16 %v111
  %v1126 = vunpack.c.h.b16 %v111
  %v1127 = vunpack.c.l.b16 %v112
  %v1128 = vunpack.c.h.b16 %v112
  %v1129 = vunpack.c.l.b16 %v113
  %v1130 = vunpack.c.h.b16 %v113
  %v1131 = vunpack.c.l.b16 %v114
  %v1132 = vunpack.c.h.b16 %v114
  %v1133 = vunpack.c.l.b16 %v115
  %v1134 = vunpack.c.h.b16 %v115
  %v1135 = vunpack.c.l.b16 %v116
  %v1136 = vunpack.c.h.b16 %v116
  %v1137 = vunpack.c.l.b16 %v117
  %v1138 = vunpack.c.h.b16 %v117
  %v1139 = vunpack.c.l.b16 %v118
  %v1140 = vunpack.c.h.b16 %v118
  %v1141 = vunpack.c.l.b16 %v119
  %v1142 = vunpack.c.h.b16 %v119
  %v1143 = vunpack.c.l.b16 %v120
  %v1144 = vunpack.c.h.b16 %v120
  %v1145 = vunpack.c.l.b16 %v121
  %v1146 = vunpack.c.h.b16 %v121
  %v1147 = vunpack.c.l.b16 %v122
  %v1148 = vunpack.c.h.b16 %v122
  %v1149 = vunpack.c.l.b16 %v123
  %v1150 = vunpack.c.h.b16 %v123
  %v1151 = vunpack.c.l.b16 %v124
  %v1152 = vunpack.c.h.b16 %v124
  %v1153 = vunpack.c.l.b16 %v125
  %v1154 = vunpack.c.h.b16 %v125
  %v1155 = vunpack.c.l.b16 %v126
  %v1156 = vunpack.c.h.b16 %v126
  %v1157 = vunpack.c.l.b16 %v127
  %v1158 = vunpack.c.h.b16 %v127
  %v1159 = vunpack.c.l.b16 %v128
  %v1160 = vunpack.c.h.b16 %v128
  %v1161 = vunpack.c.l.b16 %v129
  %v1162 = vunpack.c.h.b16 %v129
  %v1163 = vunpack.c.l.b16 %v130
  %v1164 = vunpack.c.h.b16 %v130
  %v1165 = vunpack.c.l.b16 %v131
  %v1166 = vunpack.c.h.b16 %v131
  %v1167 = vunpack.c.l.b16 %v132
  %v1168 = vunpack.c.h.b16 %v132
  %v1169 = vunpack.c.l.b16 %v133
  %v1170 = vunpack.c.h.b16 %v133
  %v1171 = vunpack.c.l.b16 %v134
  %v1172 = vunpack.c.h.b16 %v134
  %v1173 = vunpack.c.l.b16 %v135
  %v1174 = vunpack.c.h.b16 %v135
  %v1175 = vunpack.c.l.b16 %v136
  %v1176 = vunpack.c.h.b16 %v136
  %v1177 = vunpack.c.l.b16 %v137
  %v1178 = vunpack.c.h.b16 %v137
  %v1179 = vunpack.c.l.b16 %v138
  %v1180 = vunpack.c.h.b16 %v138
  %v1181 = vunpack.c.l.b16 %v139
  %v1182 = vunpack.c.h.b16 %v139
  %v1183 = vunpack.c.l.b16 %v140
  %v1184 = vunpack.c.h.b16 %v140
  %v1185 = vunpack.c.l.b16 %v141
  %v1186 = vunpack.c.h.b16 %v141
  %v1187 = vunpack.c.l.b16 %v142
  %v1188 = vunpack.c.h.b16 %v142
  %v1189 = vunpack.c.l.b16 %v143
  %v1190 = vunpack.c.h.b16 %v143
  %v1191 = vunpack.c.l.b16 %v144
  %v1192 = vunpack.c.h.b16 %v144
  %v1193 = vunpack.c.l.b16 %v145
  %v1194 = vunpack.c.h.b16 %v145
  %v1195 = vunpack.c.l.b16 %v146
  %v1196 = vunpack.c.h.b16 %v146
  %v1197 = vunpack.c.l.b16 %v147
  %v1198 = vunpack.c.h.b16 %v147
  %v1199 = vunpack.c.l.b16 %v148
  %v1200 = vunpack.c.h.b16 %v148
  %v1201 = vunpack.c.l.b16 %v149
  %v1202 = vunpack.c.h.b16 %v149
  %v1203 = vunpack.c.l.b16 %v150
  %v1204 = vunpack.c.h.b16 %v150
  %v1205 = vunpack.c.l.b16 %v151
  %v1206 = vunpack.c.h.b16 %v151
  %v1207 = vunpack.c.l.b16 %v152
  %v1208 = vunpack.c.h.b16 %v152
  %v1209 = vunpack.c.l.b16 %v153
  %v1210 = vunpack.c.h.b16 %v153
  %v1211 = vunpack.c.l.b16 %v154
  %v1212 = vunpack.c.h.b16 %v154
  %v1213 = vunpack.c.l.b16 %v155
  %v1214 = vunpack.c.h.b16 %v155
  %v1215 = vunpack.c.l.b16 %v156
  %v1216 = vunpack.c.h.b16 %v156
  %v1217 = vunpack.c.l.b16 %v157
  %v1218 = vunpack.c.h.b16 %v157
  %v1219 = vunpack.c.l.b16 %v158
  %v1220 = vunpack.c.h.b16 %v158
  %v1221 = vunpack.c.l.b16 %v159
  %v1222 = vunpack.c.h.b16 %v159
  %v1223 = vunpack.c.l.b16 %v160
  %v1224 = vunpack.c.h.b16 %v160
  %v1225 = vunpack.c.l.b16 %v161
  %v1226 = vunpack.c.h.b16 %v161
  %v1227 = vunpack.c.l.b16 %v162
  %v1228 = vunpack.c.h.b16 %v162
  %v1229 = vunpack.c.l.b16 %v163
  %v1230 = vunpack.c.h.b16 %v163
  %v1231 = vunpack.c.l.b16 %v164
  %v1232 = vunpack.c.h.b16 %v164
  %v1233 = vunpack.c.l.b16 %v165
  %v1234 = vunpack.c.h.b16 %v165
  %v1235 = vunpack.c.l.b16 %v166
  %v1236 = vunpack.c.h.b16 %v166
  %v1237 = vunpack.c.l.b16 %v167
  %v1238 = vunpack.c.h.b16 %v167
  %v1239 = vunpack.c.l.b16 %v168
  %v1240 = vunpack.c.h.b16 %v168
  %v1241 = vunpack.c.l.b16 %v169
  %v1242 = vunpack.c.h.b16 %v169
  %v1243 = vunpack.c.l.b16 %v170
  %v1244 = vunpack.c.h.b16 %v170
  %v1245 = vunpack.c.l.b16 %v171
  %v1246 = vunpack.c.h.b16 %v171
  %v1247 = vunpack.c.l.b16 %v172
  %v1248 = vunpack.c.h.b16 %v172
  %v1249 = vunpack.c.l.b16 %v173
  %v1250 = vunpack.c.h.b16 %v173
  %v1251 = vunpack.c.l.b16 %v174
  %v1252 = vunpack.c.h.b16 %v174
  %v1253 = vunpack.c.l.b16 %v175
  %v1254 = vunpack.c.h.b16 %v175
  %v1255 = vunpack.c.l.b16 %v176
  %v1256 = vunpack.c.h.b16 %v176
  %v1257 = vunpack.c.l.b16 %v177
  %v1258 = vunpack.c.h.b16 %v177
  %v1259 = vunpack.c.l.b16 %v178
  %v1260 = vunpack.c.h.b16 %v178
  %v1261 = vunpack.c.l.b16 %v179
  %v1262 = vunpack.c.h.b16 %v179
  %v1263 = vunpack.c.l.b16 %v180
  %v1264 = vunpack.c.h.b16 %v180
  %v1265 = vunpack.c.l.b16 %v181
  %v1266 = vunpack.c.h.b16 %v181
  %v1267 = vunpack.c.l.b16 %v182
  %v1268 = vunpack.c.h.b16 %v182
  %v1269 = vunpack.c.l.b16 %v183
  %v1270 = vunpack.c.h.b16 %v183
  %v1271 = vunpack.c.l.b16 %v184
  %v1272 = vunpack.c.h.b16 %v184
  %v1273 = vunpack.c.l.b16 %v185
  %v1274 = vunpack.c.h.b16 %v185
  %v1275 = vunpack.c.l.b16 %v186
  %v1276 = vunpack.c.h.b16 %v186
  %v1277 = vunpack.c.l.b16 %v187
  %v1278 = vunpack.c.h.b16 %v187
  %v1279 = vunpack.c.l.b16 %v188
  %v1280 = vunpack.c.h.b16 %v188
  %v1281 = vunpack.c.l.b16 %v189
  %v1282 = vunpack.c.h.b16 %v189
  %v1283 = vunpack.c.l.b16 %v190
  %v1284 = vunpack.c.h.b16 %v190
  %v1285 = vunpack.c.l.b16 %v191
  %v1286 = vunpack.c.h.b16 %v191
  %v1287 = vunpack.c.l.b16 %v192
  %v1288 = vunpack.c.h.b16 %v192
  %v1289 = vunpack.c.l.b16 %v193
  %v1290 = vunpack.c.h.b16 %v193
  %v1291 = vunpack.c.l.b16 %v194
  %v1292 = vunpack.c.h.b16 %v194
  %v1293 = vunpack.c.l.b16 %v195
  %v1294 = vunpack.c.h.b16 %v195
  %v1295 = vunpack.c.l.b16 %v196
  %v1296 = vunpack.c.h.b16 %v196
  %v1297 = vunpack.c.l.b16 %v197
  %v1298 = vunpack.c.h.b16 %v197
  %v1299 = vunpack.c.l.b16 %v198
  %v1300 = vunpack.c.h.b16 %v198
  %v1301 = vunpack.c.l.b16 %v199
  %v1302 = vunpack.c.h.b16 %v199
  %v1303 = vunpack.c.l.b16 %v200
  %v1304 = vunpack.c.h.b16 %v200
  %v1305 = vunpack.c.l.b16 %v201
  %v1306 = vunpack.c.h.b16 %v201
  %v1307 = vunpack.c.l.b16 %v202
  %v1308 = vunpack.c.h.b16 %v202
  %v1309 = vunpack.c.l.b16 %v203
  %v1310 = vunpack.c.h.b16 %v203
  %v1311 = vunpack.c.l.b16 %v204
  %v1312 = vunpack.c.h.b16 %v204
  %v1313 = vunpack.c.l.b16 %v205
  %v1314 = vunpack.c.h.b16 %v205
  %v1315 = vunpack.c.l.b16 %v206
  %v1316 = vunpack.c.h.b16 %v206
  %v1317 = vunpack.c.l.b16 %v207
  %v1318 = vunpack.c.h.b16 %v207
  %v1319 = vunpack.c.l.b16 %v208
  %v1320 = vunpack.c.h.b16 %v208
  %v1321 = vunpack.c.l.b16 %v209
  %v1322 = vunpack.c.h.b16 %v209
  %v1323 = vunpack.c.l.b16 %v210
  %v1324 = vunpack.c.h.b16 %v210
  %v1325 = vunpack.c.l.b16 %v211
  %v1326 = vunpack.c.h.b16 %v211
  %v1327 = vunpack.c.l.b16 %v212
  %v1328 = vunpack.c.h.b16 %v212
  %v1329 = vunpack.c.l.b16 %v213
  %v1330 = vunpack.c.h.b16 %v213
  %v1331 = vunpack.c.l.b16 %v214
  %v1332 = vunpack.c.h.b16 %v214
  %v1333 = vunpack.c.l.b16 %v215
  %v1334 = vunpack.c.h.b16 %v215
  %v1335 = vunpack.c.l.b16 %v216
  %v1336 = vunpack.c.h.b16 %v216
  %v1337 = vunpack.c.l.b16 %v217
  %v1338 = vunpack.c.h.b16 %v217
  %v1339 = vunpack.c.l.b16 %v218
  %v1340 = vunpack.c.h.b16 %v218
  %v1341 = vunpack.c.l.b16 %v219
  %v1342 = vunpack.c.h.b16 %v219
  %v1343 = vunpack.c.l.b16 %v220
  %v1344 = vunpack.c.h.b16 %v220
  %v1345 = vunpack.c.l.b16 %v221
  %v1346 = vunpack.c.h.b16 %v221
  %v1347 = vunpack.c.l.b16 %v222
  %v1348 = vunpack.c.h.b16 %v222
  %v1349 = vunpack.c.l.b16 %v223
  %v1350 = vunpack.c.h.b16 %v223
  %v1351 = vunpack.c.l.b16 %v224
  %v1352 = vunpack.c.h.b16 %v224
  %v1353 = vunpack.c.l.b16 %v225
  %v1354 = vunpack.c.h.b16 %v225
  %v1355 = vunpack.c.l.b16 %v226
  %v1356 = vunpack.c.h.b16 %v226
  %v1357 = vunpack.c.l.b16 %v227
  %v1358 = vunpack.c.h.b16 %v227
  %v1359 = vunpack.c.l.b16 %v228
  %v1360 = vunpack.c.h.b16 %v228
  %v1361 = vunpack.c.l.b16 %v229
  %v1362 = vunpack.c.h.b16 %v229
  %v1363 = vunpack.c.l.b16 %v230
  %v1364 = vunpack.c.h.b16 %v230
  %v1365 = vunpack.c.l.b16 %v231
  %v1366 = vunpack.c.h.b16 %v231
  %v1367 = vunpack.c.l.b16 %v232
  %v1368 = vunpack.c.h.b16 %v232
  %v1369 = vunpack.c.l.b16 %v233
  %v1370 = vunpack.c.h.b16 %v233
  %v1371 = vunpack.c.l.b16 %v234
  %v1372 = vunpack.c.h.b16 %v234
  %v1373 = vunpack.c.l.b16 %v235
  %v1374 = vunpack.c.h.b16 %v235
  %v1375 = vunpack.c.l.b16 %v236
  %v1376 = vunpack.c.h.b16 %v236
  %v1377 = vunpack.c.l.b16 %v237
  %v1378 = vunpack.c.h.b16 %v237
  %v1379 = vunpack.c.l.b16 %v238
  %v1380 = vunpack.c.h.b16 %v238
  %v1381 = vunpack.c.l.b16 %v239
  %v1382 = vunpack.c.h.b16 %v239
  %v1383 = vunpack.c.l.b16 %v240
  %v1384 = vunpack.c.h.b16 %v240
  %v1385 = vunpack.c.l.b16 %v241
  %v1386 = vunpack.c.h.b16 %v241
  %v1387 = vunpack.c.l.b16 %v242
  %v1388 = vunpack.c.h.b16 %v242
  %v1389 = vunpack.c.l.b16 %v243
  %v1390 = vunpack.c.h.b16 %v243
  %v1391 = vunpack.c.l.b16 %v244
  %v1392 = vunpack.c.h.b16 %v244
  %v1393 = vunpack.c.l.b16 %v245
  %v1394 = vunpack.c.h.b16 %v245
  %v1395 = vunpack.c.l.b16 %v246
  %v1396 = vunpack.c.h.b16 %v246
  %v1397 = vunpack.c.l.b16 %v247
  %v1398 = vunpack.c.h.b16 %v247
  %v1399 = vunpack.c.l.b16 %v248
  %v1400 = vunpack.c.h.b16 %v248
  %v1401 = vunpack.c.l.b16 %v249
  %v1402 = vunpack.c.h.b16 %v249
  %v1403 = vunpack.c.l.b16 %v250
  %v1404 = vunpack.c.h.b16 %v250
  %v1405 = vunpack.c.l.b16 %v251
  %v1406 = vunpack.c.h.b16 %v251
  %v1407 = vunpack.c.l.b16 %v252
  %v1408 = vunpack.c.h.b16 %v252
  %v1409 = vunpack.c.l.b16 %v253
  %v1410 = vunpack.c.h.b16 %v253
  %v1411 = vunpack.c.l.b16 %v254
  %v1412 = vunpack.c.h.b16 %v254
  %v1413 = vunpack.c.l.b16 %v255
  %v1414 = vunpack.c.h.b16 %v255
  %v1415 = vunpack.c.l.b16 %v256
  %v1416 = vunpack.c.h.b16 %v256
  %v1417 = vunpack.c.l.b16 %v257
  %v1418 = vunpack.c.h.b16 %v257
  %v1419 = vunpack.c.l.b16 %v258
  %v1420 = vunpack.c.h.b16 %v258
  %v1421 = vunpack.c.l.b16 %v259
  %v1422 = vunpack.c.h.b16 %v259
  %v1423 = vunpack.c.l.b16 %v260
  %v1424 = vunpack.c.h.b16 %v260
  %v1425 = vunpack.c.l.b16 %v261
  %v1426 = vunpack.c.h.b16 %v261
  %v1427 = vunpack.c.l.b16 %v262
  %v1428 = vunpack.c.h.b16 %v262
  %v1429 = vunpack.c.l.b16 %v263
  %v1430 = vunpack.c.h.b16 %v263
  %v1431 = vunpack.c.l.b16 %v264
  %v1432 = vunpack.c.h.b16 %v264
  %v1433 = vunpack.c.l.b16 %v265
  %v1434 = vunpack.c.h.b16 %v265
  %v1435 = vunpack.c.l.b16 %v266
  %v1436 = vunpack.c.h.b16 %v266
  %v1437 = vunpack.c.l.b16 %v267
  %v1438 = vunpack.c.h.b16 %v267
  %v1439 = vunpack.c.l.b16 %v268
  %v1440 = vunpack.c.h.b16 %v268
  %v1441 = vunpack.c.l.b16 %v269
  %v1442 = vunpack.c.h.b16 %v269
  %v1443 = vunpack.c.l.b16 %v270
  %v1444 = vunpack.c.h.b16 %v270
  %v1445 = vunpack.c.l.b16 %v271
  %v1446 = vunpack.c.h.b16 %v271
  %v1447 = vunpack.c.l.b16 %v272
  %v1448 = vunpack.c.h.b16 %v272
  %v1449 = vunpack.c.l.b16 %v273
  %v1450 = vunpack.c.h.b16 %v273
  %v1451 = vunpack.c.l.b16 %v274
  %v1452 = vunpack.c.h.b16 %v274
  %v1453 = vunpack.c.l.b16 %v275
  %v1454 = vunpack.c.h.b16 %v275
  %v1455 = vunpack.c.l.b16 %v276
  %v1456 = vunpack.c.h.b16 %v276
  %v1457 = vunpack.c.l.b16 %v277
  %v1458 = vunpack.c.h.b16 %v277
  %v1459 = vunpack.c.l.b16 %v278
  %v1460 = vunpack.c.h.b16 %v278
  %v1461 = vunpack.c.l.b16 %v279
  %v1462 = vunpack.c.h.b16 %v279
  %v1463 = vunpack.c.l.b16 %v280
  %v1464 = vunpack.c.h.b16 %v280
  %v1465 = vunpack.c.l.b16 %v281
  %v1466 = vunpack.c.h.b16 %v281
  %v1467 = vunpack.c.l.b16 %v282
  %v1468 = vunpack.c.h.b16 %v282
  %v1469 = vunpack.c.l.b16 %v283
  %v1470 = vunpack.c.h.b16 %v283
  %v1471 = vunpack.c.l.b16 %v284
  %v1472 = vunpack.c.h.b16 %v284
  %v1473 = vunpack.c.l.b16 %v285
  %v1474 = vunpack.c.h.b16 %v285
  %v1475 = vunpack.c.l.b16 %v286
  %v1476 = vunpack.c.h.b16 %v286
  %v1477 = vunpack.c.l.b16 %v287
  %v1478 = vunpack.c.h.b16 %v287
  %v1479 = vunpack.c.l.b16 %v288
  %v1480 = vunpack.c.h.b16 %v288
  %v1481 = vunpack.c.l.b16 %v289
  %v1482 = vunpack.c.h.b16 %v289
  %v1483 = vunpack.c.l.b16 %v290
  %v1484 = vunpack.c.h.b16 %v290
  %v1485 = vunpack.c.l.b16 %v291
  %v1486 = vunpack.c.h.b16 %v291
  %v1487 = vunpack.c.l.b16 %v292
  %v1488 = vunpack.c.h.b16 %v292
  %v1489 = vunpack.c.l.b16 %v293
  %v1490 = vunpack.c.h.b16 %v293
  %v1491 = vunpack.c.l.b16 %v294
  %v1492 = vunpack.c.h.b16 %v294
  %v1493 = vunpack.c.l.b16 %v295
  %v1494 = vunpack.c.h.b16 %v295
  %v1495 = vunpack.c.l.b16 %v296
  %v1496 = vunpack.c.h.b16 %v296
  %v1497 = vunpack.c.l.b16 %v297
  %v1498 = vunpack.c.h.b16 %v297
  %v1499 = vunpack.c.l.b16 %v298
  %v1500 = vunpack.c.h.b16 %v298
  %v1501 = vunpack.c.l.b16 %v299
  %v1502 = vunpack.c.h.b16 %v299
  %v1503 = vunpack.c.l.b16 %v300
  %v1504 = vunpack.c.h.b16 %v300
  %v1505 = vunpack.c.l.b16 %v301
  %v1506 = vunpack.c.h.b16 %v301
  %v1507 = vunpack.c.l.b16 %v302
  %v1508 = vunpack.c.h.b16 %v302
  %v1509 = vunpack.c.l.b16 %v303
  %v1510 = vunpack.c.h.b16 %v303
  %v1511 = vunpack.c.l.b16 %v304
  %v1512 = vunpack.c.h.b16 %v304
  %v1513 = vunpack.c.l.b16 %v305
  %v1514 = vunpack.c.h.b16 %v305
  %v1515 = vunpack.c.l.b16 %v306
  %v1516 = vunpack.c.h.b16 %v306
  %v1517 = vunpack.c.l.b16 %v307
  %v1518 = vunpack.c.h.b16 %v307
  %v1519 = vunpack.c.l.b16 %v308
  %v1520 = vunpack.c.h.b16 %v308
  %v1521 = vunpack.c.l.b16 %v309
  %v1522 = vunpack.c.h.b16 %v309
  %v1523 = vunpack.c.l.b16 %v310
  %v1524 = vunpack.c.h.b16 %v310
  %v1525 = vunpack.c.l.b16 %v311
  %v1526 = vunpack.c.h.b16 %v311
  %v1527 = vunpack.c.l.b16 %v312
  %v1528 = vunpack.c.h.b16 %v312
  %v1529 = vunpack.c.l.b16 %v313
  %v1530 = vunpack.c.h.b16 %v313
  %v1531 = vunpack.c.l.b16 %v314
  %v1532 = vunpack.c.h.b16 %v314
  %v1533 = vunpack.c.l.b16 %v315
  %v1534 = vunpack.c.h.b16 %v315
  %v1535 = vunpack.c.l.b16 %v316
  %v1536 = vunpack.c.h.b16 %v316
  %v1537 = vunpack.c.l.b16 %v317
  %v1538 = vunpack.c.h.b16 %v317
  %v1539 = vunpack.c.l.b16 %v318
  %v1540 = vunpack.c.h.b16 %v318
  %v1541 = vunpack.c.l.b16 %v319
  %v1542 = vunpack.c.h.b16 %v319
  %v1543 = vunpack.c.l.b16 %v320
  %v1544 = vunpack.c.h.b16 %v320
  %v1545 = vunpack.c.l.b16 %v321
  %v1546 = vunpack.c.h.b16 %v321
  %v1547 = vunpack.c.l.b16 %v322
  %v1548 = vunpack.c.h.b16 %v322
  %v1549 = vunpack.c.l.b16 %v323
  %v1550 = vunpack.c.h.b16 %v323
  %v1551 = vunpack.c.l.b16 %v324
  %v1552 = vunpack.c.h.b16 %v324
  %v1553 = vunpack.c.l.b16 %v325
  %v1554 = vunpack.c.h.b16 %v325
  %v1555 = vunpack.c.l.b16 %v326
  %v1556 = vunpack.c.h.b16 %v326
  %v1557 = vunpack.c.l.b16 %v327
  %v1558 = vunpack.c.h.b16 %v327
  %v1559 = vunpack.c.l.b16 %v328
  %v1560 = vunpack.c.h.b16 %v328
  %v1561 = vunpack.c.l.b16 %v329
  %v1562 = vunpack.c.h.b16 %v329
  %v1563 = vunpack.c.l.b16 %v330
  %v1564 = vunpack.c.h.b16 %v330
  %v1565 = vunpack.c.l.b16 %v331
  %v1566 = vunpack.c.h.b16 %v331
  %v1567 = vunpack.c.l.b16 %v332
  %v1568 = vunpack.c.h.b16 %v332
  %v1569 = vunpack.c.l.b16 %v333
  %v1570 = vunpack.c.h.b16 %v333
  %v1571 = vunpack.c.l.b16 %v334
  %v1572 = vunpack.c.h.b16 %v334
  %v1573 = vunpack.c.l.b16 %v335
  %v1574 = vunpack.c.h.b16 %v335
  %v1575 = vunpack.c.l.b16 %v336
  %v1576 = vunpack.c.h.b16 %v336
  %v1577 = vunpack.c.l.b16 %v337
  %v1578 = vunpack.c.h.b16 %v337
  %v1579 = vunpack.c.l.b16 %v338
  %v1580 = vunpack.c.h.b16 %v338
  %v1581 = vunpack.c.l.b16 %v339
  %v1582 = vunpack.c.h.b16 %v339
  %v1583 = vunpack.c.l.b16 %v340
  %v1584 = vunpack.c.h.b16 %v340
  %v1585 = vunpack.c.l.b16 %v341
  %v1586 = vunpack.c.h.b16 %v341
  %v1587 = vunpack.c.l.b16 %v342
  %v1588 = vunpack.c.h.b16 %v342
  %v1589 = vunpack.c.l.b16 %v343
  %v1590 = vunpack.c.h.b16 %v343
  %v1591 = vunpack.c.l.b16 %v344
  %v1592 = vunpack.c.h.b16 %v344
  %v1593 = vunpack.c.l.b16 %v345
  %v1594 = vunpack.c.h.b16 %v345
  %v1595 = vunpack.c.l.b16 %v346
  %v1596 = vunpack.c.h.b16 %v346
  %v1597 = vunpack.c.l.b16 %v347
  %v1598 = vunpack.c.h.b16 %v347
  %v1599 = vunpack.c.l.b16 %v348
  %v1600 = vunpack.c.h.b16 %v348
  %v1601 = vunpack.c.l.b16 %v349
  %v1602 = vunpack.c.h.b16 %v349
  %v1603 = vunpack.c.l.b16 %v350
  %v1604 = vunpack.c.h.b16 %v350
  %v1605 = vunpack.c.l.b16 %v351
  %v1606 = vunpack.c.h.b16 %v351
  %v1607 = vunpack.c.l.b16 %v352
  %v1608 = vunpack.c.h.b16 %v352
  %v1609 = vunpack.c.l.b16 %v353
  %v1610 = vunpack.c.h.b16 %v353
  %v1611 = vunpack.c.l.b16 %v354
  %v1612 = vunpack.c.h.b16 %v354
  %v1613 = vunpack.c.l.b16 %v355
  %v1614 = vunpack.c.h.b16 %v355
  %v1615 = vunpack.c.l.b16 %v356
  %v1616 = vunpack.c.h.b16 %v356
  %v1617 = vunpack.c.l.b16 %v357
  %v1618 = vunpack.c.h.b16 %v357
  %v1619 = vunpack.c.l.b16 %v358
  %v1620 = vunpack.c.h.b16 %v358
  %v1621 = vunpack.c.l.b16 %v359
  %v1622 = vunpack.c.h.b16 %v359
  %v1623 = vunpack.c.l.b16 %v360
  %v1624 = vunpack.c.h.b16 %v360
  %v1625 = vunpack.c.l.b16 %v361
  %v1626 = vunpack.c.h.b16 %v361
  %v1627 = vunpack.c.l.b16 %v362
  %v1628 = vunpack.c.h.b16 %v362
  %v1629 = vunpack.c.l.b16 %v363
  %v1630 = vunpack.c.h.b16 %v363
  %v1631 = vunpack.c.l.b16 %v364
  %v1632 = vunpack.c.h.b16 %v364
  %v1633 = vunpack.c.l.b16 %v365
  %v1634 = vunpack.c.h.b16 %v365
  %v1635 = vunpack.c.l.b16 %v366
  %v1636 = vunpack.c.h.b16 %v366
  %v1637 = vunpack.c.l.b16 %v367
  %v1638 = vunpack.c.h.b16 %v367
  %v1639 = vunpack.c.l.b16 %v368
  %v1640 = vunpack.c.h.b16 %v368
  %v1641 = vunpack.c.l.b16 %v369
  %v1642 = vunpack.c.h.b16 %v369
  %v1643 = vunpack.c.l.b16 %v370
  %v1644 = vunpack.c.h.b16 %v370
  %v1645 = vunpack.c.l.b16 %v371
  %v1646 = vunpack.c.h.b16 %v371
  %v1647 = vunpack.c.l.b16 %v372
  %v1648 = vunpack.c.h.b16 %v372
  %v1649 = vunpack.c.l.b16 %v373
  %v1650 = vunpack.c.h.b16 %v373
  %v1651 = vunpack.c.l.b16 %v374
  %v1652 = vunpack.c.h.b16 %v374
  %v1653 = vunpack.c.l.b16 %v375
  %v1654 = vunpack.c.h.b16 %v375
  %v1655 = vunpack.c.l.b16 %v376
  %v1656 = vunpack.c.h.b16 %v376
  %v1657 = vunpack.c.l.b16 %v377
  %v1658 = vunpack.c.h.b16 %v377
  %v1659 = vunpack.c.l.b16 %v378
  %v1660 = vunpack.c.h.b16 %v378
  %v1661 = vunpack.c.l.b16 %v379
  %v1662 = vunpack.c.h.b16 %v379
  %v1663 = vunpack.c.l.b16 %v380
  %v1664 = vunpack.c.h.b16 %v380
  %v1665 = vunpack.c.l.b16 %v381
  %v1666 = vunpack.c.h.b16 %v381
  %v1667 = vunpack.c.l.b16 %v382
  %v1668 = vunpack.c.h.b16 %v382
  %v1669 = vunpack.c.l.b16 %v383
  %v1670 = vunpack.c.h.b16 %v383
  %v1671 = vunpack.c.l.b16 %v384
  %v1672 = vunpack.c.h.b16 %v384
  %v1673 = vunpack.c.l.b16 %v385
  %v1674 = vunpack.c.h.b16 %v385
  %v1675 = vunpack.c.l.b16 %v386
  %v1676 = vunpack.c.h.b16 %v386
  %v1677 = vunpack.c.l.b16 %v387
  %v1678 = vunpack.c.h.b16 %v387
  %v1679 = vunpack.c.l.b16 %v388
  %v1680 = vunpack.c.h.b16 %v388
  %v1681 = vunpack.c.l.b16 %v389
  %v1682 = vunpack.c.h.b16 %v389
  %v1683 = vunpack.c.l.b16 %v390
  %v1684 = vunpack.c.h.b16 %v390
  %v1685 = vunpack.c.l.b16 %v391
  %v1686 = vunpack.c.h.b16 %v391
  %v1687 = vunpack.c.l.b16 %v392
  %v1688 = vunpack.c.h.b16 %v392
  %v1689 = vunpack.c.l.b16 %v393
  %v1690 = vunpack.c.h.b16 %v393
  %v1691 = vunpack.c.l.b16 %v394
  %v1692 = vunpack.c.h.b16 %v394
  %v1693 = vunpack.c.l.b16 %v395
  %v1694 = vunpack.c.h.b16 %v395
  %v1695 = vunpack.c.l.b16 %v396
  %v1696 = vunpack.c.h.b16 %v396
  %v1697 = vunpack.c.l.b16 %v397
  %v1698 = vunpack.c.h.b16 %v397
  %v1699 = vunpack.c.l.b16 %v398
  %v1700 = vunpack.c.h.b16 %v398
  %v1701 = vunpack.c.l.b16 %v399
  %v1702 = vunpack.c.h.b16 %v399
  %v1703 = vunpack.c.l.b16 %v400
  %v1704 = vunpack.c.h.b16 %v400
  %v1705 = vunpack.c.l.b16 %v401
  %v1706 = vunpack.c.h.b16 %v401
  %v1707 = vunpack.c.l.b16 %v402
  %v1708 = vunpack.c.h.b16 %v402
  %v1709 = vunpack.c.l.b16 %v403
  %v1710 = vunpack.c.h.b16 %v403
  %v1711 = vunpack.c.l.b16 %v404
  %v1712 = vunpack.c.h.b16 %v404
  %v1713 = vunpack.c.l.b16 %v405
  %v1714 = vunpack.c.h.b16 %v405
  %v1715 = vunpack.c.l.b16 %v406
  %v1716 = vunpack.c.h.b16 %v406
  %v1717 = vunpack.c.l.b16 %v407
  %v1718 = vunpack.c.h.b16 %v407
  %v1719 = vunpack.c.l.b16 %v408
  %v1720 = vunpack.c.h.b16 %v408
  %v1721 = vunpack.c.l.b16 %v409
  %v1722 = vunpack.c.h.b16 %v409
  %v1723 = vunpack.c.l.b16 %v410
  %v1724 = vunpack.c.h.b16 %v410
  %v1725 = vunpack.c.l.b16 %v411
  %v1726 = vunpack.c.h.b16 %v411
  %v1727 = vunpack.c.l.b16 %v412
  %v1728 = vunpack.c.h.b16 %v412
  %v1729 = vunpack.c.l.b16 %v413
  %v1730 = vunpack.c.h.b16 %v413
  %v1731 = vunpack.c.l.b16 %v414
  %v1732 = vunpack.c.h.b16 %v414
  %v1733 = vunpack.c.l.b16 %v415
  %v1734 = vunpack.c.h.b16 %v415
  %v1735 = vunpack.c.l.b16 %v416
  %v1736 = vunpack.c.h.b16 %v416
  %v1737 = vunpack.c.l.b16 %v417
  %v1738 = vunpack.c.h.b16 %v417
  %v1739 = vunpack.c.l.b16 %v418
  %v1740 = vunpack.c.h.b16 %v418
  %v1741 = vunpack.c.l.b16 %v419
  %v1742 = vunpack.c.h.b16 %v419
  %v1743 = vunpack.c.l.b16 %v420
  %v1744 = vunpack.c.h.b16 %v420
  %v1745 = vunpack.c.l.b16 %v421
  %v1746 = vunpack.c.h.b16 %v421
  %v1747 = vunpack.c.l.b16 %v422
  %v1748 = vunpack.c.h.b16 %v422
  %v1749 = vunpack.c.l.b16 %v423
  %v1750 = vunpack.c.h.b16 %v423
  %v1751 = vunpack.c.l.b16 %v424
  %v1752 = vunpack.c.h.b16 %v424
  %v1753 = vunpack.c.l.b16 %v425
  %v1754 = vunpack.c.h.b16 %v425
  %v1755 = vunpack.c.l.b16 %v426
  %v1756 = vunpack.c.h.b16 %v426
  %v1757 = vunpack.c.l.b16 %v427
  %v1758 = vunpack.c.h.b16 %v427
  %v1759 = vunpack.c.l.b16 %v428
  %v1760 = vunpack.c.h.b16 %v428
  %v1761 = vunpack.c.l.b16 %v429
  %v1762 = vunpack.c.h.b16 %v429
  %v1763 = vunpack.c.l.b16 %v430
  %v1764 = vunpack.c.h.b16 %v430
  %v1765 = vunpack.c.l.b16 %v431
  %v1766 = vunpack.c.h.b16 %v431
  %v1767 = vunpack.c.l.b16 %v432
  %v1768 = vunpack.c.h.b16 %v432
  %v1769 = vunpack.c.l.b16 %v433
  %v1770 = vunpack.c.h.b16 %v433
  %v1771 = vunpack.c.l.b16 %v434
  %v1772 = vunpack.c.h.b16 %v434
  %v1773 = vunpack.c.l.b16 %v435
  %v1774 = vunpack.c.h.b16 %v435
  %v1775 = vunpack.c.l.b16 %v436
  %v1776 = vunpack.c.h.b16 %v436
  %v1777 = vunpack.c.l.b16 %v437
  %v1778 = vunpack.c.h.b16 %v437
  %v1779 = vunpack.c.l.b16 %v438
  %v1780 = vunpack.c.h.b16 %v438
  %v1781 = vunpack.c.l.b16 %v439
  %v1782 = vunpack.c.h.b16 %v439
  %v1783 = vunpack.c.l.b16 %v440
  %v1784 = vunpack.c.h.b16 %v440
  %v1785 = vunpack.c.l.b16 %v441
  %v1786 = vunpack.c.h.b16 %v441
  %v1787 = vunpack.c.l.b16 %v442
  %v1788 = vunpack.c.h.b16 %v442
  %v1789 = vunpack.c.l.b16 %v443
  %v1790 = vunpack.c.h.b16 %v443
  %v1791 = vunpack.c.l.b16 %v444
  %v1792 = vunpack.c.h.b16 %v444
  %v1793 = vunpack.c.l.b16 %v445
  %v1794 = vunpack.c.h.b16 %v445
  %v1795 = vunpack.c.l.b16 %v446
  %v1796 = vunpack.c.h.b16 %v446
  %v1797 = vunpack.c.l.b16 %v447
  %v1798 = vunpack.c.h.b16 %v447
  %v1799 = vunpack.c.l.b16 %v448
  %v1800 = vunpack.c.h.b16 %v448
  %v1801 = vunpack.c.l.b16 %v449
  %v1802 = vunpack.c.h.b16 %v449
  %v1803 = vunpack.c.l.b16 %v450
  %v1804 = vunpack.c.h.b16 %v450
  %v1805 = vunpack.c.l.b16 %v451
  %v1806 = vunpack.c.h.b16 %v451
  %v1807 = vunpack.c.l.b16 %v452
  %v1808 = vunpack.c.h.b16 %v452
  %v1809 = vunpack.c.l.b16 %v453
  %v1810 = vunpack.c.h.b16 %v453
  %v1811 = vunpack.c.l.b16 %v454
  %v1812 = vunpack.c.h.b16 %v454
  %v1813 = vunpack.c.l.b16 %v455
  %v1814 = vunpack.c.h.b16 %v455
  %v1815 = vunpack.c.l.b16 %v456
  %v1816 = vunpack.c.h.b16 %v456
  %v1817 = vunpack.c.l.b16 %v457
  %v1818 = vunpack.c.h.b16 %v457
  %v1819 = vunpack.c.l.b16 %v458
  %v1820 = vunpack.c.h.b16 %v458
  %v1821 = vunpack.c.l.b16 %v459
  %v1822 = vunpack.c.h.b16 %v459
  %v1823 = vunpack.c.l.b16 %v460
  %v1824 = vunpack.c.h.b16 %v460
  %v1825 = vunpack.c.l.b16 %v461
  %v1826 = vunpack.c.h.b16 %v461
  %v1827 = vunpack.c.l.b16 %v462
  %v1828 = vunpack.c.h.b16 %v462
  %v1829 = vunpack.c.l.b16 %v463
  %v1830 = vunpack.c.h.b16 %v463
  %v1831 = vunpack.c.l.b16 %v464
  %v1832 = vunpack.c.h.b16 %v464
  %v1833 = vunpack.c.l.b16 %v465
  %v1834 = vunpack.c.h.b16 %v465
  %v1835 = vunpack.c.l.b16 %v466
  %v1836 = vunpack.c.h.b16 %v466
  %v1837 = vunpack.c.l.b16 %v467
  %v1838 = vunpack.c.h.b16 %v467
  %v1839 = vunpack.c.l.b16 %v468
  %v1840 = vunpack.c.h.b16 %v468
  %v1841 = vunpack.c.l.b16 %v469
  %v1842 = vunpack.c.h.b16 %v469
  %v1843 = vunpack.c.l.b16 %v470
  %v1844 = vunpack.c.h.b16 %v470
  %v1845 = vunpack.c.l.b16 %v471
  %v1846 = vunpack.c.h.b16 %v471
  %v1847 = vunpack.c.l.b16 %v472
  %v1848 = vunpack.c.h.b16 %v472
  %v1849 = vunpack.c.l.b16 %v473
  %v1850 = vunpack.c.h.b16 %v473
  %v1851 = vunpack.c.l.b16 %v474
  %v1852 = vunpack.c.h.b16 %v474
  %v1853 = vunpack.c.l.b16 %v475
  %v1854 = vunpack.c.h.b16 %v475
  %v1855 = vunpack.c.l.b16 %v476
  %v1856 = vunpack.c.h.b16 %v476
  %v1857 = vpack.c.b16 %v969, %v961
  %v1858 = vpack.c.b16 %v970, %v962
  %v1859 = vpack.c.b16 %v971, %v963
  %v1860 = vpack.c.b16 %v972, %v964
  %v1861 = vpack.c.b16 %v973, %v965
  %v1862 = vpack.c.b16 %v974, %v966
  %v1863 = vpack.c.b16 %v975, %v967
  %v1864 = vpack.c.b16 %v976, %v968
  %v1865 = vpack.c.b16 %v985, %v977
  %v1866 = vpack.c.b16 %v986, %v978
  %v1867 = vpack.c.b16 %v987, %v979
  %v1868 = vpack.c.b16 %v988, %v980
  %v1869 = vpack.c.b16 %v989, %v981
  %v1870 = vpack.c.b16 %v990, %v982
  %v1871 = vpack.c.b16 %v991, %v983
  %v1872 = vpack.c.b16 %v992, %v984
  %v1873 = vpack.c.b16 %v1001, %v993
  %v1874 = vpack.c.b16 %v1002, %v994
  %v1875 = vpack.c.b16 %v1003, %v995
  %v1876 = vpack.c.b16 %v1004, %v996
  %v1877 = vpack.c.b16 %v1005, %v997
  %v1878 = vpack.c.b16 %v1006, %v998
  %v1879 = vpack.c.b16 %v1007, %v999
  %v1880 = vpack.c.b16 %v1008, %v1000
  %v1881 = vpack.c.b16 %v1017, %v1009
  %v1882 = vpack.c.b16 %v1018, %v1010
  %v1883 = vpack.c.b16 %v1019, %v1011
  %v1884 = vpack.c.b16 %v1020, %v1012
  %v1885 = vpack.c.b16 %v1021, %v1013
  %v1886 = vpack.c.b16 %v1022, %v1014
  %v1887 = vpack.c.b16 %v1023, %v1015
  %v1888 = vpack.c.b16 %v1024, %v1016
  %v1889 = vpack.c.b16 %v1033, %v1025
  %v1890 = vpack.c.b16 %v1034, %v1026
  %v1891 = vpack.c.b16 %v1035, %v1027
  %v1892 = vpack.c.b16 %v1036, %v1028
  %v1893 = vpack.c.b16 %v1037, %v1029
  %v1894 = vpack.c.b16 %v1038, %v1030
  %v1895 = vpack.c.b16 %v1039, %v1031
  %v1896 = vpack.c.b16 %v1040, %v1032
  %v1897 = vpack.c.b16 %v1049, %v1041
  %v1898 = vpack.c.b16 %v1050, %v1042
  %v1899 = vpack.c.b16 %v1051, %v1043
  %v1900 = vpack.c.b16 %v1052, %v1044
  %v1901 = vpack.c.b16 %v1053, %v1045
  %v1902 = vpack.c.b16 %v1054, %v1046
  %v1903 = vpack.c.b16 %v1055, %v1047
  %v1904 = vpack.c.b16 %v1056, %v1048
  %v1905 = vpack.c.b16 %v1065, %v1057
  %v1906 = vpack.c.b16 %v1066, %v1058
  %v1907 = vpack.c.b16 %v1067, %v1059
  %v1908 = vpack.c.b16 %v1068, %v1060
  %v1909 = vpack.c.b16 %v1069, %v1061
  %v1910 = vpack.c.b16 %v1070, %v1062
  %v1911 = vpack.c.b16 %v1071, %v1063
  %v1912 = vpack.c.b16 %v1072, %v1064
  %v1913 = vpack.c.b16 %v1081, %v1073
  %v1914 = vpack.c.b16 %v1082, %v1074
  %v1915 = vpack.c.b16 %v1083, %v1075
  %v1916 = vpack.c.b16 %v1084, %v1076
  %v1917 = vpack.c.b16 %v1085, %v1077
  %v1918 = vpack.c.b16 %v1086, %v1078
  %v1919 = vpack.c.b16 %v1087, %v1079
  %v1920 = vpack.c.b16 %v1088, %v1080
  %v1921 = vpack.c.b16 %v1097, %v1089
  %v1922 = vpack.c.b16 %v1098, %v1090
  %v1923 = vpack.c.b16 %v1099, %v1091
  %v1924 = vpack.c.b16 %v1100, %v1092
  %v1925 = vpack.c.b16 %v1101, %v1093
  %v1926 = vpack.c.b16 %v1102, %v1094
  %v1927 = vpack.c.b16 %v1103, %v1095
  %v1928 = vpack.c.b16 %v1104, %v1096
  %v1929 = vpack.c.b16 %v1113, %v1105
  %v1930 = vpack.c.b16 %v1114, %v1106
  %v1931 = vpack.c.b16 %v1115, %v1107
  %v1932 = vpack.c.b16 %v1116, %v1108
  %v1933 = vpack.c.b16 %v1117, %v1109
  %v1934 = vpack.c.b16 %v1118, %v1110
  %v1935 = vpack.c.b16 %v1119, %v1111
  %v1936 = vpack.c.b16 %v1120, %v1112
  %v1937 = vpack.c.b16 %v1129, %v1121
  %v1938 = vpack.c.b16 %v1130, %v1122
  %v1939 = vpack.c.b16 %v1131, %v1123
  %v1940 = vpack.c.b16 %v1132, %v1124
  %v1941 = vpack.c.b16 %v1133, %v1125
  %v1942 = vpack.c.b16 %v1134, %v1126
  %v1943 = vpack.c.b16 %v1135, %v1127
  %v1944 = vpack.c.b16 %v1136, %v1128
  %v1945 = vpack.c.b16 %v1145, %v1137
  %v1946 = vpack.c.b16 %v1146, %v1138
  %v1947 = vpack.c.b16 %v1147, %v1139
  %v1948 = vpack.c.b16 %v1148, %v1140
  %v1949 = vpack.c.b16 %v1149, %v1141
  %v1950 = vpack.c.b16 %v1150, %v1142
  %v1951 = vpack.c.b16 %v1151, %v1143
  %v1952 = vpack.c.b16 %v1152, %v1144
  %v1953 = vpack.c.b16 %v1161, %v1153
  %v1954 = vpack.c.b16 %v1162, %v1154
  %v1955 = vpack.c.b16 %v1163, %v1155
  %v1956 = vpack.c.b16 %v1164, %v1156
  %v1957 = vpack.c.b16 %v1165, %v1157
  %v1958 = vpack.c.b16 %v1166, %v1158
  %v1959 = vpack.c.b16 %v1167, %v1159
  %v1960 = vpack.c.b16 %v1168, %v1160
  %v1961 = vpack.c.b16 %v1177, %v1169
  %v1962 = vpack.c.b16 %v1178, %v1170
  %v1963 = vpack.c.b16 %v1179, %v1171
  %v1964 = vpack.c.b16 %v1180, %v1172
  %v1965 = vpack.c.b16 %v1181, %v1173
  %v1966 = vpack.c.b16 %v1182, %v1174
  %v1967 = vpack.c.b16 %v1183, %v1175
  %v1968 = vpack.c.b16 %v1184, %v1176
  %v1969 = vpack.c.b16 %v1193, %v1185
  %v1970 = vpack.c.b16 %v1194, %v1186
  %v1971 = vpack.c.b16 %v1195, %v1187
  %v1972 = vpack.c.b16 %v1196, %v1188
  %v1973 = vpack.c.b16 %v1197, %v1189
  %v1974 = vpack.c.b16 %v1198, %v1190
  %v1975 = vpack.c.b16 %v1199, %v1191
  %v1976 = vpack.c.b16 %v1200, %v1192
  %v1977 = vpack.c.b16 %v1209, %v1201
  %v1978 = vpack.c.b16 %v1210, %v1202
  %v1979 = vpack.c.b16 %v1211, %v1203
  %v1980 = vpack.c.b16 %v1212, %v1204
  %v1981 = vpack.c.b16 %v1213, %v1205
  %v1982 = vpack.c.b16 %v1214, %v1206
  %v1983 = vpack.c.b16 %v1215, %v1207
  %v1984 = vpack.c.b16 %v1216, %v1208
  %v1985 = vpack.c.b16 %v1225, %v1217
  %v1986 = vpack.c.b16 %v1226, %v1218
  %v1987 = vpack.c.b16 %v1227, %v1219
  %v1988 = vpack.c.b16 %v1228, %v1220
  %v1989 = vpack.c.b16 %v1229, %v1221
  %v1990 = vpack.c.b16 %v1230, %v1222
  %v1991 = vpack.c.b16 %v1231, %v1223
  %v1992 = vpack.c.b16 %v1232, %v1224
  %v1993 = vpack.c.b16 %v1241, %v1233
  %v1994 = vpack.c.b16 %v1242, %v1234
  %v1995 = vpack.c.b16 %v1243, %v1235
  %v1996 = vpack.c.b16 %v1244, %v1236
  %v1997 = vpack.c.b16 %v1245, %v1237
  %v1998 = vpack.c.b16 %v1246, %v1238
  %v1999 = vpack.c.b16 %v1247, %v1239
  %v2000 = vpack.c.b16 %v1248, %v1240
  %v2001 = vpack.c.b16 %v1257, %v1249
  %v2002 = vpack.c.b16 %v1258, %v1250
  %v2003 = vpack.c.b16 %v1259, %v1251
  %v2004 = vpack.c.b16 %v1260, %v1252
  %v2005 = vpack.c.b16 %v1261, %v1253
  %v2006 = vpack.c.b16 %v1262, %v1254
  %v2007 = vpack.c.b16 %v1263, %v1255
  %v2008 = vpack.c.b16 %v1264, %v1256
  %v2009 = vpack.c.b16 %v1273, %v1265
  %v2010 = vpack.c.b16 %v1274, %v1266
  %v2011 = vpack.c.b16 %v1275, %v1267
  %v2012 = vpack.c.b16 %v1276, %v1268
  %v2013 = vpack.c.b16 %v1277, %v1269
  %v2014 = vpack.c.b16 %v1278, %v1270
  %v2015 = vpack.c.b16 %v1279, %v1271
  %v2016 = vpack.c.b16 %v1280, %v1272
  %v2017 = vpack.c.b16 %v1289, %v1281
  %v2018 = vpack.c.b16 %v1290, %v1282
  %v2019 = vpack.c.b16 %v1291, %v1283
  %v2020 = vpack.c.b16 %v1292, %v1284
  %v2021 = vpack.c.b16 %v1293, %v1285
  %v2022 = vpack.c.b16 %v1294, %v1286
  %v2023 = vpack.c.b16 %v1295, %v1287
  %v2024 = vpack.c.b16 %v1296, %v1288
  %v2025 = vpack.c.b16 %v1305, %v1297
  %v2026 = vpack.c.b16 %v1306, %v1298
  %v2027 = vpack.c.b16 %v1307, %v1299
  %v2028 = vpack.c.b16 %v1308, %v1300
  %v2029 = vpack.c.b16 %v1309, %v1301
  %v2030 = vpack.c.b16 %v1310, %v1302
  %v2031 = vpack.c.b16 %v1311, %v1303
  %v2032 = vpack.c.b16 %v1312, %v1304
  %v2033 = vpack.c.b16 %v1321, %v1313
  %v2034 = vpack.c.b16 %v1322, %v1314
  %v2035 = vpack.c.b16 %v1323, %v1315
  %v2036 = vpack.c.b16 %v1324, %v1316
  %v2037 = vpack.c.b16 %v1325, %v1317
  %v2038 = vpack.c.b16 %v1326, %v1318
  %v2039 = vpack.c.b16 %v1327, %v1319
  %v2040 = vpack.c.b16 %v1328, %v1320
  %v2041 = vpack.c.b16 %v1337, %v1329
  %v2042 = vpack.c.b16 %v1338, %v1330
  %v2043 = vpack.c.b16 %v1339, %v1331
  %v2044 = vpack.c.b16 %v1340, %v1332
  %v2045 = vpack.c.b16 %v1341, %v1333
  %v2046 = vpack.c.b16 %v1342, %v1334
  %v2047 = vpack.c.b16 %v1343, %v1335
  %v2048 = vpack.c.b16 %v1344, %v1336
  %v2049 = vpack.c.b16 %v1353, %v1345
  %v2050 = vpack.c.b16 %v1354, %v1346
  %v2051 = vpack.c.b16 %v1355, %v1347
  %v2052 = vpack.c.b16 %v1356, %v1348
  %v2053 = vpack.c.b16 %v1357, %v1349
  %v2054 = vpack.c.b16 %v1358, %v1350
  %v2055 = vpack.c.b16 %v1359, %v1351
  %v2056 = vpack.c.b16 %v1360, %v1352
  %v2057 = vpack.c.b16 %v1369, %v1361
  %v2058 = vpack.c.b16 %v1370, %v1362
  %v2059 = vpack.c.b16 %v1371, %v1363
  %v2060 = vpack.c.b16 %v1372, %v1364
  %v2061 = vpack.c.b16 %v1373, %v1365
  %v2062 = vpack.c.b16 %v1374, %v1366
  %v2063 = vpack.c.b16 %v1375, %v1367
  %v2064 = vpack.c.b16 %v1376, %v1368
  %v2065 = vpack.c.b16 %v1385, %v1377
  %v2066 = vpack.c.b16 %v1386, %v1378
  %v2067 = vpack.c.b16 %v1387, %v1379
  %v2068 = vpack.c.b16 %v1388, %v1380
  %v2069 = vpack.c.b16 %v1389, %v1381
  %v2070 = vpack.c.b16 %v1390, %v1382
  %v2071 = vpack.c.b16 %v1391, %v1383
  %v2072 = vpack.c.b16 %v1392, %v1384
  %v2073 = vpack.c.b16 %v1401, %v1393
  %v2074 = vpack.c.b16 %v1402, %v1394
  %v2075 = vpack.c.b16 %v1403, %v1395
  %v2076 = vpack.c.b16 %v1404, %v1396
  %v2077 = vpack.c.b16 %v1405, %v1397
  %v2078 = vpack.c.b16 %v1406, %v1398
  %v2079 = vpack.c.b16 %v1407, %v1399
  %v2080 = vpack.c.b16 %v1408, %v1400
  %v2081 = vpack.c.b16 %v1417, %v1409
  %v2082 = vpack.c.b16 %v1418, %v1410
  %v2083 = vpack.c.b16 %v1419, %v1411
  %v2084 = vpack.c.b16 %v1420, %v1412
  %v2085 = vpack.c.b16 %v1421, %v1413
  %v2086 = vpack.c.b16 %v1422, %v1414
  %v2087 = vpack.c.b16 %v1423, %v1415
  %v2088 = vpack.c.b16 %v1424, %v1416
  %v2089 = vpack.c.b16 %v1433, %v1425
  %v2090 = vpack.c.b16 %v1434, %v1426
  %v2091 = vpack.c.b16 %v1435, %v1427
  %v2092 = vpack.c.b16 %v1436, %v1428
  %v2093 = vpack.c.b16 %v1437, %v1429
  %v2094 = vpack.c.b16 %v1438, %v1430
  %v2095 = vpack.c.b16 %v1439, %v1431
  %v2096 = vpack.c.b16 %v1440, %v1432
  %v2097 = vpack.c.b16 %v1449, %v1441
  %v2098 = vpack.c.b16 %v1450, %v1442
  %v2099 = vpack.c.b16 %v1451, %v1443
  %v2100 = vpack.c.b16 %v1452, %v1444
  %v2101 = vpack.c.b16 %v1453, %v1445
  %v2102 = vpack.c.b16 %v1454, %v1446
  %v2103 = vpack.c.b16 %v1455, %v1447
  %v2104 = vpack.c.b16 %v1456, %v1448
  %v2105 = vpack.c.b16 %v1465, %v1457
  %v2106 = vpack.c.b16 %v1466, %v1458
  %v2107 = vpack.c.b16 %v1467, %v1459
  %v2108 = vpack.c.b16 %v1468, %v1460
  %v2109 = vpack.c.b16 %v1469, %v1461
  %v2110 = vpack.c.b16 %v1470, %v1462
  %v2111 = vpack.c.b16 %v1471, %v1463
  %v2112 = vpack.c.b16 %v1472, %v1464
  %v2113 = vpack.c.b16 %v1481, %v1473
  %v2114 = vpack.c.b16 %v1482, %v1474
  %v2115 = vpack.c.b16 %v1483, %v1475
  %v2116 = vpack.c.b16 %v1484, %v1476
  %v2117 = vpack.c.b16 %v1485, %v1477
  %v2118 = vpack.c.b16 %v1486, %v1478
  %v2119 = vpack.c.b16 %v1487, %v1479
  %v2120 = vpack.c.b16 %v1488, %v1480
  %v2121 = vpack.c.b16 %v1497, %v1489
  %v2122 = vpack.c.b16 %v1498, %v1490
  %v2123 = vpack.c.b16 %v1499, %v1491
  %v2124 = vpack.c.b16 %v1500, %v1492
  %v2125 = vpack.c.b16 %v1501, %v1493
  %v2126 = vpack.c.b16 %v1502, %v1494
  %v2127 = vpack.c.b16 %v1503, %v1495
  %v2128 = vpack.c.b16 %v1504, %v1496
  %v2129 = vpack.c.b16 %v1513, %v1505
  %v2130 = vpack.c.b16 %v1514, %v1506
  %v2131 = vpack.c.b16 %v1515, %v1507
  %v2132 = vpack.c.b16 %v1516, %v1508
  %v2133 = vpack.c.b16 %v1517, %v1509
  %v2134 = vpack.c.b16 %v1518, %v1510
  %v2135 = vpack.c.b16 %v1519, %v1511
  %v2136 = vpack.c.b16 %v1520, %v1512
  %v2137 = vpack.c.b16 %v1529, %v1521
  %v2138 = vpack.c.b16 %v1530, %v1522
  %v2139 = vpack.c.b16 %v1531, %v1523
  %v2140 = vpack.c.b16 %v1532, %v1524
  %v2141 = vpack.c.b16 %v1533, %v1525
  %v2142 = vpack.c.b16 %v1534, %v1526
  %v2143 = vpack.c.b16 %v1535, %v1527
  %v2144 = vpack.c.b16 %v1536, %v1528
  %v2145 = vpack.c.b16 %v1545, %v1537
  %v2146 = vpack.c.b16 %v1546, %v1538
  %v2147 = vpack.c.b16 %v1547, %v1539
  %v2148 = vpack.c.b16 %v1548, %v1540
  %v2149 = vpack.c.b16 %v1549, %v1541
  %v2150 = vpack.c.b16 %v1550, %v1542
  %v2151 = vpack.c.b16 %v1551, %v1543
  %v2152 = vpack.c.b16 %v1552, %v1544
  %v2153 = vpack.c.b16 %v1561, %v1553
  %v2154 = vpack.c.b16 %v1562, %v1554
  %v2155 = vpack.c.b16 %v1563, %v1555
  %v2156 = vpack.c.b16 %v1564, %v1556
  %v2157 = vpack.c.b16 %v1565, %v1557
  %v2158 = vpack.c.b16 %v1566, %v1558
  %v2159 = vpack.c.b16 %v1567, %v1559
  %v2160 = vpack.c.b16 %v1568, %v1560
  %v2161 = vpack.c.b16 %v1577, %v1569
  %v2162 = vpack.c.b16 %v1578, %v1570
  %v2163 = vpack.c.b16 %v1579, %v1571
  %v2164 = vpack.c.b16 %v1580, %v1572
  %v2165 = vpack.c.b16 %v1581, %v1573
  %v2166 = vpack.c.b16 %v1582, %v1574
  %v2167 = vpack.c.b16 %v1583, %v1575
  %v2168 = vpack.c.b16 %v1584, %v1576
  %v2169 = vpack.c.b16 %v1593, %v1585
  %v2170 = vpack.c.b16 %v1594, %v1586
  %v2171 = vpack.c.b16 %v1595, %v1587
  %v2172 = vpack.c.b16 %v1596, %v1588
  %v2173 = vpack.c.b16 %v1597, %v1589
  %v2174 = vpack.c.b16 %v1598, %v1590
  %v2175 = vpack.c.b16 %v1599, %v1591
  %v2176 = vpack.c.b16 %v1600, %v1592
  %v2177 = vpack.c.b16 %v1609, %v1601
  %v2178 = vpack.c.b16 %v1610, %v1602
  %v2179 = vpack.c.b16 %v1611, %v1603
  %v2180 = vpack.c.b16 %v1612, %v1604
  %v2181 = vpack.c.b16 %v1613, %v1605
  %v2182 = vpack.c.b16 %v1614, %v1606
  %v2183 = vpack.c.b16 %v1615, %v1607
  %v2184 = vpack.c.b16 %v1616, %v1608
  %v2185 = vpack.c.b16 %v1625, %v1617
  %v2186 = vpack.c.b16 %v1626, %v1618
  %v2187 = vpack.c.b16 %v1627, %v1619
  %v2188 = vpack.c.b16 %v1628, %v1620
  %v2189 = vpack.c.b16 %v1629, %v1621
  %v2190 = vpack.c.b16 %v1630, %v1622
  %v2191 = vpack.c.b16 %v1631, %v1623
  %v2192 = vpack.c.b16 %v1632, %v1624
  %v2193 = vpack.c.b16 %v1641, %v1633
  %v2194 = vpack.c.b16 %v1642, %v1634
  %v2195 = vpack.c.b16 %v1643, %v1635
  %v2196 = vpack.c.b16 %v1644, %v1636
  %v2197 = vpack.c.b16 %v1645, %v1637
  %v2198 = vpack.c.b16 %v1646, %v1638
  %v2199 = vpack.c.b16 %v1647, %v1639
  %v2200 = vpack.c.b16 %v1648, %v1640
  %v2201 = vpack.c.b16 %v1657, %v1649
  %v2202 = vpack.c.b16 %v1658, %v1650
  %v2203 = vpack.c.b16 %v1659, %v1651
  %v2204 = vpack.c.b16 %v1660, %v1652
  %v2205 = vpack.c.b16 %v1661, %v1653
  %v2206 = vpack.c.b16 %v1662, %v1654
  %v2207 = vpack.c.b16 %v1663, %v1655
  %v2208 = vpack.c.b16 %v1664, %v1656
  %v2209 = vpack.c.b16 %v1673, %v1665
  %v2210 = vpack.c.b16 %v1674, %v1666
  %v2211 = vpack.c.b16 %v1675, %v1667
  %v2212 = vpack.c.b16 %v1676, %v1668
  %v2213 = vpack.c.b16 %v1677, %v1669
  %v2214 = vpack.c.b16 %v1678, %v1670
  %v2215 = vpack.c.b16 %v1679, %v1671
  %v2216 = vpack.c.b16 %v1680, %v1672
  %v2217 = vpack.c.b16 %v1689, %v1681
  %v2218 = vpack.c.b16 %v1690, %v1682
  %v2219 = vpack.c.b16 %v1691, %v1683
  %v2220 = vpack.c.b16 %v1692, %v1684
  %v2221 = vpack.c.b16 %v1693, %v1685
  %v2222 = vpack.c.b16 %v1694, %v1686
  %v2223 = vpack.c.b16 %v1695, %v1687
  %v2224 = vpack.c.b16 %v1696, %v1688
  %v2225 = vpack.c.b16 %v1705, %v1697
  %v2226 = vpack.c.b16 %v1706, %v1698
  %v2227 = vpack.c.b16 %v1707, %v1699
  %v2228 = vpack.c.b16 %v1708, %v1700
  %v2229 = vpack.c.b16 %v1709, %v1701
  %v2230 = vpack.c.b16 %v1710, %v1702
  %v2231 = vpack.c.b16 %v1711, %v1703
  %v2232 = vpack.c.b16 %v1712, %v1704
  %v2233 = vpack.c.b16 %v1721, %v1713
  %v2234 = vpack.c.b16 %v1722, %v1714
  %v2235 = vpack.c.b16 %v1723, %v1715
  %v2236 = vpack.c.b16 %v1724, %v1716
  %v2237 = vpack.c.b16 %v1725, %v1717
  %v2238 = vpack.c.b16 %v1726, %v1718
  %v2239 = vpack.c.b16 %v1727, %v1719
  %v2240 = vpack.c.b16 %v1728, %v1720
  %v2241 = vpack.c.b16 %v1737, %v1729
  %v2242 = vpack.c.b16 %v1738, %v1730
  %v2243 = vpack.c.b16 %v1739, %v1731
  %v2244 = vpack.c.b16 %v1740, %v1732
  %v2245 = vpack.c.b16 %v1741, %v1733
  %v2246 = vpack.c.b16 %v1742, %v1734
  %v2247 = vpack.c.b16 %v1743, %v1735
  %v2248 = vpack.c.b16 %v1744, %v1736
  %v2249 = vpack.c.b16 %v1753, %v1745
  %v2250 = vpack.c.b16 %v1754, %v1746
  %v2251 = vpack.c.b16 %v1755, %v1747
  %v2252 = vpack.c.b16 %v1756, %v1748
  %v2253 = vpack.c.b16 %v1757, %v1749
  %v2254 = vpack.c.b16 %v1758, %v1750
  %v2255 = vpack.c.b16 %v1759, %v1751
  %v2256 = vpack.c.b16 %v1760, %v1752
  %v2257 = vpack.c.b16 %v1769, %v1761
  %v2258 = vpack.c.b16 %v1770, %v1762
  %v2259 = vpack.c.b16 %v1771, %v1763
  %v2260 = vpack.c.b16 %v1772, %v1764
  %v2261 = vpack.c.b16 %v1773, %v1765
  %v2262 = vpack.c.b16 %v1774, %v1766
  %v2263 = vpack.c.b16 %v1775, %v1767
  %v2264 = vpack.c.b16 %v1776, %v1768
  %v2265 = vpack.c.b16 %v1785, %v1777
  %v2266 = vpack.c.b16 %v1786, %v1778
  %v2267 = vpack.c.b16 %v1787, %v1779
  %v2268 = vpack.c.b16 %v1788, %v1780
  %v2269 = vpack.c.b16 %v1789, %v1781
  %v2270 = vpack.c.b16 %v1790, %v1782
  %v2271 = vpack.c.b16 %v1791, %v1783
  %v2272 = vpack.c.b16 %v1792, %v1784
  %v2273 = vpack.c.b16 %v1801, %v1793
  %v2274 = vpack.c.b16 %v1802, %v1794
  %v2275 = vpack.c.b16 %v1803, %v1795
  %v2276 = vpack.c.b16 %v1804, %v1796
  %v2277 = vpack.c.b16 %v1805, %v1797
  %v2278 = vpack.c.b16 %v1806, %v1798
  %v2279 = vpack.c.b16 %v1807, %v1799
  %v2280 = vpack.c.b16 %v1808, %v1800
  %v2281 = vpack.c.b16 %v1817, %v1809
  %v2282 = vpack.c.b16 %v1818, %v1810
  %v2283 = vpack.c.b16 %v1819, %v1811
  %v2284 = vpack.c.b16 %v1820, %v1812
  %v2285 = vpack.c.b16 %v1821, %v1813
  %v2286 = vpack.c.b16 %v1822, %v1814
  %v2287 = vpack.c.b16 %v1823, %v1815
  %v2288 = vpack.c.b16 %v1824, %v1816
  %v2289 = vpack.c.b16 %v1833, %v1825
  %v2290 = vpack.c.b16 %v1834, %v1826
  %v2291 = vpack.c.b16 %v1835, %v1827
  %v2292 = vpack.c.b16 %v1836, %v1828
  %v2293 = vpack.c.b16 %v1837, %v1829
  %v2294 = vpack.c.b16 %v1838, %v1830
  %v2295 = vpack.c.b16 %v1839, %v1831
  %v2296 = vpack.c.b16 %v1840, %v1832
  %v2297 = vpack.c.b16 %v1849, %v1841
  %v2298 = vpack.c.b16 %v1850, %v1842
  %v2299 = vpack.c.b16 %v1851, %v1843
  %v2300 = vpack.c.b16 %v1852, %v1844
  %v2301 = vpack.c.b16 %v1853, %v1845
  %v2302 = vpack.c.b16 %v1854, %v1846
  %v2303 = vpack.c.b16 %v1855, %v1847
  %v2304 = vpack.c.b16 %v1856, %v1848
  %2753 = vmatprep.subr.bf16.mxu0 %v1858
  %2754 = vmatpush1.bf16.msra.mxu0 %v1857
  %2755 = vmatprep.subr.bf16.mxu0 %v1866
  %2756 = vmatpush1.bf16.msra.mxu0 %v1865
  %2757 = vmatprep.subr.bf16.mxu0 %v1874
  %2758 = vmatpush1.bf16.msra.mxu0 %v1873
  %2759 = vmatprep.subr.bf16.mxu0 %v1882
  %2760 = vmatpush1.bf16.msra.mxu0 %v1881
  %2761 = vmatprep.subr.bf16.mxu0 %v1890
  %2762 = vmatpush1.bf16.msra.mxu0 %v1889
  %2763 = vmatprep.subr.bf16.mxu0 %v1898
  %2764 = vmatpush1.bf16.msra.mxu0 %v1897
  %2765 = vmatprep.subr.bf16.mxu0 %v1906
  %2766 = vmatpush1.bf16.msra.mxu0 %v1905
  %2767 = vmatprep.subr.bf16.mxu0 %v1914
  %2768 = vmatpush1.bf16.msra.mxu0 %v1913
  %2769 = vmatprep.subr.bf16.mxu0 %v1922
  %2770 = vmatpush1.bf16.msra.mxu0 %v1921
  %2771 = vmatprep.subr.bf16.mxu0 %v1930
  %2772 = vmatpush1.bf16.msra.mxu0 %v1929
  %2773 = vmatprep.subr.bf16.mxu0 %v1938
  %2774 = vmatpush1.bf16.msra.mxu0 %v1937
  %2775 = vmatprep.subr.bf16.mxu0 %v1946
  %2776 = vmatpush1.bf16.msra.mxu0 %v1945
  %2777 = vmatprep.subr.bf16.mxu0 %v1954
  %2778 = vmatpush1.bf16.msra.mxu0 %v1953
  %2779 = vmatprep.subr.bf16.mxu0 %v1962
  %2780 = vmatpush1.bf16.msra.mxu0 %v1961
  %2781 = vmatprep.subr.bf16.mxu0 %v1970
  %2782 = vmatpush1.bf16.msra.mxu0 %v1969
  %2783 = vmatprep.subr.bf16.mxu0 %v1978
  %2784 = vmatpush1.bf16.msra.mxu0 %v1977
  %2785 = vmatprep.mubr.bf16.mxu0 %v500
  %2786 = vmatmul.mubr.bf16.gmra.mrb[0].mxu0 %v499
  %v2787 = vpop.f32.mrb[0].mxu0
  %v2788 = vadd.f32 0.0, %v2787
  %v2789 = vpop.f32.mrb[0].mxu0
  %v2790 = vadd.f32 0.0, %v2789
  %v2791 = vpop.f32.mrb[0].mxu0
  %v2792 = vadd.f32 0.0, %v2791
  %v2793 = vpop.f32.mrb[0].mxu0
  %v2794 = vadd.f32 0.0, %v2793
  %2795 = vdwg.mxu0
  %2796 = vmatprep.subr.bf16.mxu0 %v1986
  %2797 = vmatpush1.bf16.msra.mxu0 %v1985
  %2798 = vmatprep.subr.bf16.mxu0 %v1994
  %2799 = vmatpush1.bf16.msra.mxu0 %v1993
  %2800 = vmatprep.subr.bf16.mxu0 %v2002
  %2801 = vmatpush1.bf16.msra.mxu0 %v2001
  %2802 = vmatprep.subr.bf16.mxu0 %v2010
  %2803 = vmatpush1.bf16.msra.mxu0 %v2009
  %2804 = vmatprep.subr.bf16.mxu0 %v2018
  %2805 = vmatpush1.bf16.msra.mxu0 %v2017
  %2806 = vmatprep.subr.bf16.mxu0 %v2026
  %2807 = vmatpush1.bf16.msra.mxu0 %v2025
  %2808 = vmatprep.subr.bf16.mxu0 %v2034
  %2809 = vmatpush1.bf16.msra.mxu0 %v2033
  %2810 = vmatprep.subr.bf16.mxu0 %v2042
  %2811 = vmatpush1.bf16.msra.mxu0 %v2041
  %2812 = vmatprep.subr.bf16.mxu0 %v2050
  %2813 = vmatpush1.bf16.msra.mxu0 %v2049
  %2814 = vmatprep.subr.bf16.mxu0 %v2058
  %2815 = vmatpush1.bf16.msra.mxu0 %v2057
  %2816 = vmatprep.subr.bf16.mxu0 %v2066
  %2817 = vmatpush1.bf16.msra.mxu0 %v2065
  %2818 = vmatprep.subr.bf16.mxu0 %v2074
  %2819 = vmatpush1.bf16.msra.mxu0 %v2073
  %2820 = vmatprep.subr.bf16.mxu0 %v2082
  %2821 = vmatpush1.bf16.msra.mxu0 %v2081
  %2822 = vmatprep.subr.bf16.mxu0 %v2090
  %2823 = vmatpush1.bf16.msra.mxu0 %v2089
  %2824 = vmatprep.subr.bf16.mxu0 %v2098
  %2825 = vmatpush1.bf16.msra.mxu0 %v2097
  %2826 = vmatprep.subr.bf16.mxu0 %v2106
  %2827 = vmatpush1.bf16.msra.mxu0 %v2105
  %2828 = vmatprep.mubr.bf16.mxu0 %v502
  %2829 = vmatmul.mubr.bf16.gmra.mrb[0].mxu0 %v501
  %v2830 = vpop.f32.mrb[0].mxu0
  %v2831 = vadd.f32 %v2788, %v2830
  %v2832 = vpop.f32.mrb[0].mxu0
  %v2833 = vadd.f32 %v2790, %v2832
  %v2834 = vpop.f32.mrb[0].mxu0
  %v2835 = vadd.f32 %v2792, %v2834
  %v2836 = vpop.f32.mrb[0].mxu0
  %v2837 = vadd.f32 %v2794, %v2836
  %2838 = vdwg.mxu0
  %2839 = vmatprep.subr.bf16.mxu0 %v2114
  %2840 = vmatpush1.bf16.msra.mxu0 %v2113
  %2841 = vmatprep.subr.bf16.mxu0 %v2122
  %2842 = vmatpush1.bf16.msra.mxu0 %v2121
  %2843 = vmatprep.subr.bf16.mxu0 %v2130
  %2844 = vmatpush1.bf16.msra.mxu0 %v2129
  %2845 = vmatprep.subr.bf16.mxu0 %v2138
  %2846 = vmatpush1.bf16.msra.mxu0 %v2137
  %2847 = vmatprep.subr.bf16.mxu0 %v2146
  %2848 = vmatpush1.bf16.msra.mxu0 %v2145
  %2849 = vmatprep.subr.bf16.mxu0 %v2154
  %2850 = vmatpush1.bf16.msra.mxu0 %v2153
  %2851 = vmatprep.subr.bf16.mxu0 %v2162
  %2852 = vmatpush1.bf16.msra.mxu0 %v2161
  %2853 = vmatprep.subr.bf16.mxu0 %v2170
  %2854 = vmatpush1.bf16.msra.mxu0 %v2169
  %2855 = vmatprep.subr.bf16.mxu0 %v2178
  %2856 = vmatpush1.bf16.msra.mxu0 %v2177
  %2857 = vmatprep.subr.bf16.mxu0 %v2186
  %2858 = vmatpush1.bf16.msra.mxu0 %v2185
  %2859 = vmatprep.subr.bf16.mxu0 %v2194
  %2860 = vmatpush1.bf16.msra.mxu0 %v2193
  %2861 = vmatprep.subr.bf16.mxu0 %v2202
  %2862 = vmatpush1.bf16.msra.mxu0 %v2201
  %2863 = vmatprep.subr.bf16.mxu0 %v2210
  %2864 = vmatpush1.bf16.msra.mxu0 %v2209
  %2865 = vmatprep.subr.bf16.mxu0 %v2218
  %2866 = vmatpush1.bf16.msra.mxu0 %v2217
  %2867 = vmatprep.subr.bf16.mxu0 %v2226
  %2868 = vmatpush1.bf16.msra.mxu0 %v2225
  %2869 = vmatprep.subr.bf16.mxu0 %v2234
  %2870 = vmatpush1.bf16.msra.mxu0 %v2233
  %2871 = vmatprep.mubr.bf16.mxu0 %v504
  %2872 = vmatmul.mubr.bf16.gmra.mrb[0].mxu0 %v503
  %v2873 = vpop.f32.mrb[0].mxu0
  %v2874 = vadd.f32 %v2831, %v2873
  %v2875 = vpop.f32.mrb[0].mxu0
  %v2876 = vadd.f32 %v2833, %v2875
  %v2877 = vpop.f32.mrb[0].mxu0
  %v2878 = vadd.f32 %v2835, %v2877
  %v2879 = vpop.f32.mrb[0].mxu0
  %v2880 = vadd.f32 %v2837, %v2879
  %2881 = vdwg.mxu0
  %2882 = vmatprep.subr.bf16.mxu0 %v2242
  %2883 = vmatpush1.bf16.msra.mxu0 %v2241
  %2884 = vmatprep.subr.bf16.mxu0 %v2250
  %2885 = vmatpush1.bf16.msra.mxu0 %v2249
  %2886 = vmatprep.subr.bf16.mxu0 %v2258
  %2887 = vmatpush1.bf16.msra.mxu0 %v2257
  %2888 = vmatprep.subr.bf16.mxu0 %v2266
  %2889 = vmatpush1.bf16.msra.mxu0 %v2265
  %2890 = vmatprep.subr.bf16.mxu0 %v2274
  %2891 = vmatpush1.bf16.msra.mxu0 %v2273
  %2892 = vmatprep.subr.bf16.mxu0 %v2282
  %2893 = vmatpush1.bf16.msra.mxu0 %v2281
  %2894 = vmatprep.subr.bf16.mxu0 %v2290
  %2895 = vmatpush1.bf16.msra.mxu0 %v2289
  %2896 = vmatprep.subr.bf16.mxu0 %v2298
  %2897 = vmatpush1.bf16.msra.mxu0 %v2297
  %2898 = vmatprep.subr.bf16.mxu0 0
  %2899 = vmatpush1.bf16.msra.mxu0 0
  %2900 = vmatprep.subr.bf16.mxu0 0
  %2901 = vmatpush1.bf16.msra.mxu0 0
  %2902 = vmatprep.subr.bf16.mxu0 0
  %2903 = vmatpush1.bf16.msra.mxu0 0
  %2904 = vmatprep.subr.bf16.mxu0 0
  %2905 = vmatpush1.bf16.msra.mxu0 0
  %2906 = vmatprep.subr.bf16.mxu0 0
  %2907 = vmatpush1.bf16.msra.mxu0 0
  %2908 = vmatprep.subr.bf16.mxu0 0
  %2909 = vmatpush1.bf16.msra.mxu0 0
  %2910 = vmatprep.subr.bf16.mxu0 0
  %2911 = vmatpush1.bf16.msra.mxu0 0
  %2912 = vmatprep.subr.bf16.mxu0 0
  %2913 = vmatpush1.bf16.msra.mxu0 0
  %2914 = vmatprep.mubr.bf16.mxu0 0
  %2915 = vmatmul.mubr.bf16.gmra.mrb[0].mxu0 %v505
  %v2916 = vpop.f32.mrb[0].mxu0
  %v2917 = vadd.f32 %v2874, %v2916
  %v2918 = vpop.f32.mrb[0].mxu0
  %v2919 = vadd.f32 %v2876, %v2918
  %v2920 = vpop.f32.mrb[0].mxu0
  %v2921 = vadd.f32 %v2878, %v2920
  %v2922 = vpop.f32.mrb[0].mxu0
  %v2923 = vadd.f32 %v2880, %v2922
  %2924 = vdwg.mxu0
  %2925 = vmatprep.subr.bf16.mxu0 %v1860
  %2926 = vmatpush1.bf16.msra.mxu0 %v1859
  %2927 = vmatprep.subr.bf16.mxu0 %v1868
  %2928 = vmatpush1.bf16.msra.mxu0 %v1867
  %2929 = vmatprep.subr.bf16.mxu0 %v1876
  %2930 = vmatpush1.bf16.msra.mxu0 %v1875
  %2931 = vmatprep.subr.bf16.mxu0 %v1884
  %2932 = vmatpush1.bf16.msra.mxu0 %v1883
  %2933 = vmatprep.subr.bf16.mxu0 %v1892
  %2934 = vmatpush1.bf16.msra.mxu0 %v1891
  %2935 = vmatprep.subr.bf16.mxu0 %v1900
  %2936 = vmatpush1.bf16.msra.mxu0 %v1899
  %2937 = vmatprep.subr.bf16.mxu0 %v1908
  %2938 = vmatpush1.bf16.msra.mxu0 %v1907
  %2939 = vmatprep.subr.bf16.mxu0 %v1916
  %2940 = vmatpush1.bf16.msra.mxu0 %v1915
  %2941 = vmatprep.subr.bf16.mxu0 %v1924
  %2942 = vmatpush1.bf16.msra.mxu0 %v1923
  %2943 = vmatprep.subr.bf16.mxu0 %v1932
  %2944 = vmatpush1.bf16.msra.mxu0 %v1931
  %2945 = vmatprep.subr.bf16.mxu0 %v1940
  %2946 = vmatpush1.bf16.msra.mxu0 %v1939
  %2947 = vmatprep.subr.bf16.mxu0 %v1948
  %2948 = vmatpush1.bf16.msra.mxu0 %v1947
  %2949 = vmatprep.subr.bf16.mxu0 %v1956
  %2950 = vmatpush1.bf16.msra.mxu0 %v1955
  %2951 = vmatprep.subr.bf16.mxu0 %v1964
  %2952 = vmatpush1.bf16.msra.mxu0 %v1963
  %2953 = vmatprep.subr.bf16.mxu0 %v1972
  %2954 = vmatpush1.bf16.msra.mxu0 %v1971
  %2955 = vmatprep.subr.bf16.mxu0 %v1980
  %2956 = vmatpush1.bf16.msra.mxu0 %v1979
  %2957 = vmatprep.mubr.bf16.mxu0 %v500
  %2958 = vmatmul.mubr.bf16.gmra.mrb[0].mxu0 %v499
  %v2959 = vpop.f32.mrb[0].mxu0
  %v2960 = vadd.f32 0.0, %v2959
  %v2961 = vpop.f32.mrb[0].mxu0
  %v2962 = vadd.f32 0.0, %v2961
  %v2963 = vpop.f32.mrb[0].mxu0
  %v2964 = vadd.f32 0.0, %v2963
  %v2965 = vpop.f32.mrb[0].mxu0
  %v2966 = vadd.f32 0.0, %v2965
  %2967 = vdwg.mxu0
  %2968 = vmatprep.subr.bf16.mxu0 %v1988
  %2969 = vmatpush1.bf16.msra.mxu0 %v1987
  %2970 = vmatprep.subr.bf16.mxu0 %v1996
  %2971 = vmatpush1.bf16.msra.mxu0 %v1995
  %2972 = vmatprep.subr.bf16.mxu0 %v2004
  %2973 = vmatpush1.bf16.msra.mxu0 %v2003
  %2974 = vmatprep.subr.bf16.mxu0 %v2012
  %2975 = vmatpush1.bf16.msra.mxu0 %v2011
  %2976 = vmatprep.subr.bf16.mxu0 %v2020
  %2977 = vmatpush1.bf16.msra.mxu0 %v2019
  %2978 = vmatprep.subr.bf16.mxu0 %v2028
  %2979 = vmatpush1.bf16.msra.mxu0 %v2027
  %2980 = vmatprep.subr.bf16.mxu0 %v2036
  %2981 = vmatpush1.bf16.msra.mxu0 %v2035
  %2982 = vmatprep.subr.bf16.mxu0 %v2044
  %2983 = vmatpush1.bf16.msra.mxu0 %v2043
  %2984 = vmatprep.subr.bf16.mxu0 %v2052
  %2985 = vmatpush1.bf16.msra.mxu0 %v2051
  %2986 = vmatprep.subr.bf16.mxu0 %v2060
  %2987 = vmatpush1.bf16.msra.mxu0 %v2059
  %2988 = vmatprep.subr.bf16.mxu0 %v2068
  %2989 = vmatpush1.bf16.msra.mxu0 %v2067
  %2990 = vmatprep.subr.bf16.mxu0 %v2076
  %2991 = vmatpush1.bf16.msra.mxu0 %v2075
  %2992 = vmatprep.subr.bf16.mxu0 %v2084
  %2993 = vmatpush1.bf16.msra.mxu0 %v2083
  %2994 = vmatprep.subr.bf16.mxu0 %v2092
  %2995 = vmatpush1.bf16.msra.mxu0 %v2091
  %2996 = vmatprep.subr.bf16.mxu0 %v2100
  %2997 = vmatpush1.bf16.msra.mxu0 %v2099
  %2998 = vmatprep.subr.bf16.mxu0 %v2108
  %2999 = vmatpush1.bf16.msra.mxu0 %v2107
  %3000 = vmatprep.mubr.bf16.mxu0 %v502
  %3001 = vmatmul.mubr.bf16.gmra.mrb[0].mxu0 %v501
  %v3002 = vpop.f32.mrb[0].mxu0
  %v3003 = vadd.f32 %v2960, %v3002
  %v3004 = vpop.f32.mrb[0].mxu0
  %v3005 = vadd.f32 %v2962, %v3004
  %v3006 = vpop.f32.mrb[0].mxu0
  %v3007 = vadd.f32 %v2964, %v3006
  %v3008 = vpop.f32.mrb[0].mxu0
  %v3009 = vadd.f32 %v2966, %v3008
  %3010 = vdwg.mxu0
  %3011 = vmatprep.subr.bf16.mxu0 %v2116
  %3012 = vmatpush1.bf16.msra.mxu0 %v2115
  %3013 = vmatprep.subr.bf16.mxu0 %v2124
  %3014 = vmatpush1.bf16.msra.mxu0 %v2123
  %3015 = vmatprep.subr.bf16.mxu0 %v2132
  %3016 = vmatpush1.bf16.msra.mxu0 %v2131
  %3017 = vmatprep.subr.bf16.mxu0 %v2140
  %3018 = vmatpush1.bf16.msra.mxu0 %v2139
  %3019 = vmatprep.subr.bf16.mxu0 %v2148
  %3020 = vmatpush1.bf16.msra.mxu0 %v2147
  %3021 = vmatprep.subr.bf16.mxu0 %v2156
  %3022 = vmatpush1.bf16.msra.mxu0 %v2155
  %3023 = vmatprep.subr.bf16.mxu0 %v2164
  %3024 = vmatpush1.bf16.msra.mxu0 %v2163
  %3025 = vmatprep.subr.bf16.mxu0 %v2172
  %3026 = vmatpush1.bf16.msra.mxu0 %v2171
  %3027 = vmatprep.subr.bf16.mxu0 %v2180
  %3028 = vmatpush1.bf16.msra.mxu0 %v2179
  %3029 = vmatprep.subr.bf16.mxu0 %v2188
  %3030 = vmatpush1.bf16.msra.mxu0 %v2187
  %3031 = vmatprep.subr.bf16.mxu0 %v2196
  %3032 = vmatpush1.bf16.msra.mxu0 %v2195
  %3033 = vmatprep.subr.bf16.mxu0 %v2204
  %3034 = vmatpush1.bf16.msra.mxu0 %v2203
  %3035 = vmatprep.subr.bf16.mxu0 %v2212
  %3036 = vmatpush1.bf16.msra.mxu0 %v2211
  %3037 = vmatprep.subr.bf16.mxu0 %v2220
  %3038 = vmatpush1.bf16.msra.mxu0 %v2219
  %3039 = vmatprep.subr.bf16.mxu0 %v2228
  %3040 = vmatpush1.bf16.msra.mxu0 %v2227
  %3041 = vmatprep.subr.bf16.mxu0 %v2236
  %3042 = vmatpush1.bf16.msra.mxu0 %v2235
  %3043 = vmatprep.mubr.bf16.mxu0 %v504
  %3044 = vmatmul.mubr.bf16.gmra.mrb[0].mxu0 %v503
  %v3045 = vpop.f32.mrb[0].mxu0
  %v3046 = vadd.f32 %v3003, %v3045
  %v3047 = vpop.f32.mrb[0].mxu0
  %v3048 = vadd.f32 %v3005, %v3047
  %v3049 = vpop.f32.mrb[0].mxu0
  %v3050 = vadd.f32 %v3007, %v3049
  %v3051 = vpop.f32.mrb[0].mxu0
  %v3052 = vadd.f32 %v3009, %v3051
  %3053 = vdwg.mxu0
  %3054 = vmatprep.subr.bf16.mxu0 %v2244
  %3055 = vmatpush1.bf16.msra.mxu0 %v2243
  %3056 = vmatprep.subr.bf16.mxu0 %v2252
  %3057 = vmatpush1.bf16.msra.mxu0 %v2251
  %3058 = vmatprep.subr.bf16.mxu0 %v2260
  %3059 = vmatpush1.bf16.msra.mxu0 %v2259
  %3060 = vmatprep.subr.bf16.mxu0 %v2268
  %3061 = vmatpush1.bf16.msra.mxu0 %v2267
  %3062 = vmatprep.subr.bf16.mxu0 %v2276
  %3063 = vmatpush1.bf16.msra.mxu0 %v2275
  %3064 = vmatprep.subr.bf16.mxu0 %v2284
  %3065 = vmatpush1.bf16.msra.mxu0 %v2283
  %3066 = vmatprep.subr.bf16.mxu0 %v2292
  %3067 = vmatpush1.bf16.msra.mxu0 %v2291
  %3068 = vmatprep.subr.bf16.mxu0 %v2300
  %3069 = vmatpush1.bf16.msra.mxu0 %v2299
  %3070 = vmatprep.subr.bf16.mxu0 0
  %3071 = vmatpush1.bf16.msra.mxu0 0
  %3072 = vmatprep.subr.bf16.mxu0 0
  %3073 = vmatpush1.bf16.msra.mxu0 0
  %3074 = vmatprep.subr.bf16.mxu0 0
  %3075 = vmatpush1.bf16.msra.mxu0 0
  %3076 = vmatprep.subr.bf16.mxu0 0
  %3077 = vmatpush1.bf16.msra.mxu0 0
  %3078 = vmatprep.subr.bf16.mxu0 0
  %3079 = vmatpush1.bf16.msra.mxu0 0
  %3080 = vmatprep.subr.bf16.mxu0 0
  %3081 = vmatpush1.bf16.msra.mxu0 0
  %3082 = vmatprep.subr.bf16.mxu0 0
  %3083 = vmatpush1.bf16.msra.mxu0 0
  %3084 = vmatprep.subr.bf16.mxu0 0
  %3085 = vmatpush1.bf16.msra.mxu0 0
  %3086 = vmatprep.mubr.bf16.mxu0 0
  %3087 = vmatmul.mubr.bf16.gmra.mrb[0].mxu0 %v505
  %v3088 = vpop.f32.mrb[0].mxu0
  %v3089 = vadd.f32 %v3046, %v3088
  %v3090 = vpop.f32.mrb[0].mxu0
  %v3091 = vadd.f32 %v3048, %v3090
  %v3092 = vpop.f32.mrb[0].mxu0
  %v3093 = vadd.f32 %v3050, %v3092
  %v3094 = vpop.f32.mrb[0].mxu0
  %v3095 = vadd.f32 %v3052, %v3094
  %3096 = vdwg.mxu0
  %3097 = vmatprep.subr.bf16.mxu0 %v1862
  %3098 = vmatpush1.bf16.msra.mxu0 %v1861
  %3099 = vmatprep.subr.bf16.mxu0 %v1870
  %3100 = vmatpush1.bf16.msra.mxu0 %v1869
  %3101 = vmatprep.subr.bf16.mxu0 %v1878
  %3102 = vmatpush1.bf16.msra.mxu0 %v1877
  %3103 = vmatprep.subr.bf16.mxu0 %v1886
  %3104 = vmatpush1.bf16.msra.mxu0 %v1885
  %3105 = vmatprep.subr.bf16.mxu0 %v1894
  %3106 = vmatpush1.bf16.msra.mxu0 %v1893
  %3107 = vmatprep.subr.bf16.mxu0 %v1902
  %3108 = vmatpush1.bf16.msra.mxu0 %v1901
  %3109 = vmatprep.subr.bf16.mxu0 %v1910
  %3110 = vmatpush1.bf16.msra.mxu0 %v1909
  %3111 = vmatprep.subr.bf16.mxu0 %v1918
  %3112 = vmatpush1.bf16.msra.mxu0 %v1917
  %3113 = vmatprep.subr.bf16.mxu0 %v1926
  %3114 = vmatpush1.bf16.msra.mxu0 %v1925
  %3115 = vmatprep.subr.bf16.mxu0 %v1934
  %3116 = vmatpush1.bf16.msra.mxu0 %v1933
  %3117 = vmatprep.subr.bf16.mxu0 %v1942
  %3118 = vmatpush1.bf16.msra.mxu0 %v1941
  %3119 = vmatprep.subr.bf16.mxu0 %v1950
  %3120 = vmatpush1.bf16.msra.mxu0 %v1949
  %3121 = vmatprep.subr.bf16.mxu0 %v1958
  %3122 = vmatpush1.bf16.msra.mxu0 %v1957
  %3123 = vmatprep.subr.bf16.mxu0 %v1966
  %3124 = vmatpush1.bf16.msra.mxu0 %v1965
  %3125 = vmatprep.subr.bf16.mxu0 %v1974
  %3126 = vmatpush1.bf16.msra.mxu0 %v1973
  %3127 = vmatprep.subr.bf16.mxu0 %v1982
  %3128 = vmatpush1.bf16.msra.mxu0 %v1981
  %3129 = vmatprep.mubr.bf16.mxu0 %v500
  %3130 = vmatmul.mubr.bf16.gmra.mrb[0].mxu0 %v499
  %v3131 = vpop.f32.mrb[0].mxu0
  %v3132 = vadd.f32 0.0, %v3131
  %v3133 = vpop.f32.mrb[0].mxu0
  %v3134 = vadd.f32 0.0, %v3133
  %v3135 = vpop.f32.mrb[0].mxu0
  %v3136 = vadd.f32 0.0, %v3135
  %v3137 = vpop.f32.mrb[0].mxu0
  %v3138 = vadd.f32 0.0, %v3137
  %3139 = vdwg.mxu0
  %3140 = vmatprep.subr.bf16.mxu0 %v1990
  %3141 = vmatpush1.bf16.msra.mxu0 %v1989
  %3142 = vmatprep.subr.bf16.mxu0 %v1998
  %3143 = vmatpush1.bf16.msra.mxu0 %v1997
  %3144 = vmatprep.subr.bf16.mxu0 %v2006
  %3145 = vmatpush1.bf16.msra.mxu0 %v2005
  %3146 = vmatprep.subr.bf16.mxu0 %v2014
  %3147 = vmatpush1.bf16.msra.mxu0 %v2013
  %3148 = vmatprep.subr.bf16.mxu0 %v2022
  %3149 = vmatpush1.bf16.msra.mxu0 %v2021
  %3150 = vmatprep.subr.bf16.mxu0 %v2030
  %3151 = vmatpush1.bf16.msra.mxu0 %v2029
  %3152 = vmatprep.subr.bf16.mxu0 %v2038
  %3153 = vmatpush1.bf16.msra.mxu0 %v2037
  %3154 = vmatprep.subr.bf16.mxu0 %v2046
  %3155 = vmatpush1.bf16.msra.mxu0 %v2045
  %3156 = vmatprep.subr.bf16.mxu0 %v2054
  %3157 = vmatpush1.bf16.msra.mxu0 %v2053
  %3158 = vmatprep.subr.bf16.mxu0 %v2062
  %3159 = vmatpush1.bf16.msra.mxu0 %v2061
  %3160 = vmatprep.subr.bf16.mxu0 %v2070
  %3161 = vmatpush1.bf16.msra.mxu0 %v2069
  %3162 = vmatprep.subr.bf16.mxu0 %v2078
  %3163 = vmatpush1.bf16.msra.mxu0 %v2077
  %3164 = vmatprep.subr.bf16.mxu0 %v2086
  %3165 = vmatpush1.bf16.msra.mxu0 %v2085
  %3166 = vmatprep.subr.bf16.mxu0 %v2094
  %3167 = vmatpush1.bf16.msra.mxu0 %v2093
  %3168 = vmatprep.subr.bf16.mxu0 %v2102
  %3169 = vmatpush1.bf16.msra.mxu0 %v2101
  %3170 = vmatprep.subr.bf16.mxu0 %v2110
  %3171 = vmatpush1.bf16.msra.mxu0 %v2109
  %3172 = vmatprep.mubr.bf16.mxu0 %v502
  %3173 = vmatmul.mubr.bf16.gmra.mrb[0].mxu0 %v501
  %v3174 = vpop.f32.mrb[0].mxu0
  %v3175 = vadd.f32 %v3132, %v3174
  %v3176 = vpop.f32.mrb[0].mxu0
  %v3177 = vadd.f32 %v3134, %v3176
  %v3178 = vpop.f32.mrb[0].mxu0
  %v3179 = vadd.f32 %v3136, %v3178
  %v3180 = vpop.f32.mrb[0].mxu0
  %v3181 = vadd.f32 %v3138, %v3180
  %3182 = vdwg.mxu0
  %3183 = vmatprep.subr.bf16.mxu0 %v2118
  %3184 = vmatpush1.bf16.msra.mxu0 %v2117
  %3185 = vmatprep.subr.bf16.mxu0 %v2126
  %3186 = vmatpush1.bf16.msra.mxu0 %v2125
  %3187 = vmatprep.subr.bf16.mxu0 %v2134
  %3188 = vmatpush1.bf16.msra.mxu0 %v2133
  %3189 = vmatprep.subr.bf16.mxu0 %v2142
  %3190 = vmatpush1.bf16.msra.mxu0 %v2141
  %3191 = vmatprep.subr.bf16.mxu0 %v2150
  %3192 = vmatpush1.bf16.msra.mxu0 %v2149
  %3193 = vmatprep.subr.bf16.mxu0 %v2158
  %3194 = vmatpush1.bf16.msra.mxu0 %v2157
  %3195 = vmatprep.subr.bf16.mxu0 %v2166
  %3196 = vmatpush1.bf16.msra.mxu0 %v2165
  %3197 = vmatprep.subr.bf16.mxu0 %v2174
  %3198 = vmatpush1.bf16.msra.mxu0 %v2173
  %3199 = vmatprep.subr.bf16.mxu0 %v2182
  %3200 = vmatpush1.bf16.msra.mxu0 %v2181
  %3201 = vmatprep.subr.bf16.mxu0 %v2190
  %3202 = vmatpush1.bf16.msra.mxu0 %v2189
  %3203 = vmatprep.subr.bf16.mxu0 %v2198
  %3204 = vmatpush1.bf16.msra.mxu0 %v2197
  %3205 = vmatprep.subr.bf16.mxu0 %v2206
  %3206 = vmatpush1.bf16.msra.mxu0 %v2205
  %3207 = vmatprep.subr.bf16.mxu0 %v2214
  %3208 = vmatpush1.bf16.msra.mxu0 %v2213
  %3209 = vmatprep.subr.bf16.mxu0 %v2222
  %3210 = vmatpush1.bf16.msra.mxu0 %v2221
  %3211 = vmatprep.subr.bf16.mxu0 %v2230
  %3212 = vmatpush1.bf16.msra.mxu0 %v2229
  %3213 = vmatprep.subr.bf16.mxu0 %v2238
  %3214 = vmatpush1.bf16.msra.mxu0 %v2237
  %3215 = vmatprep.mubr.bf16.mxu0 %v504
  %3216 = vmatmul.mubr.bf16.gmra.mrb[0].mxu0 %v503
  %v3217 = vpop.f32.mrb[0].mxu0
  %v3218 = vadd.f32 %v3175, %v3217
  %v3219 = vpop.f32.mrb[0].mxu0
  %v3220 = vadd.f32 %v3177, %v3219
  %v3221 = vpop.f32.mrb[0].mxu0
  %v3222 = vadd.f32 %v3179, %v3221
  %v3223 = vpop.f32.mrb[0].mxu0
  %v3224 = vadd.f32 %v3181, %v3223
  %3225 = vdwg.mxu0
  %3226 = vmatprep.subr.bf16.mxu0 %v2246
  %3227 = vmatpush1.bf16.msra.mxu0 %v2245
  %3228 = vmatprep.subr.bf16.mxu0 %v2254
  %3229 = vmatpush1.bf16.msra.mxu0 %v2253
  %3230 = vmatprep.subr.bf16.mxu0 %v2262
  %3231 = vmatpush1.bf16.msra.mxu0 %v2261
  %3232 = vmatprep.subr.bf16.mxu0 %v2270
  %3233 = vmatpush1.bf16.msra.mxu0 %v2269
  %3234 = vmatprep.subr.bf16.mxu0 %v2278
  %3235 = vmatpush1.bf16.msra.mxu0 %v2277
  %3236 = vmatprep.subr.bf16.mxu0 %v2286
  %3237 = vmatpush1.bf16.msra.mxu0 %v2285
  %3238 = vmatprep.subr.bf16.mxu0 %v2294
  %3239 = vmatpush1.bf16.msra.mxu0 %v2293
  %3240 = vmatprep.subr.bf16.mxu0 %v2302
  %3241 = vmatpush1.bf16.msra.mxu0 %v2301
  %3242 = vmatprep.subr.bf16.mxu0 0
  %3243 = vmatpush1.bf16.msra.mxu0 0
  %3244 = vmatprep.subr.bf16.mxu0 0
  %3245 = vmatpush1.bf16.msra.mxu0 0
  %3246 = vmatprep.subr.bf16.mxu0 0
  %3247 = vmatpush1.bf16.msra.mxu0 0
  %3248 = vmatprep.subr.bf16.mxu0 0
  %3249 = vmatpush1.bf16.msra.mxu0 0
  %3250 = vmatprep.subr.bf16.mxu0 0
  %3251 = vmatpush1.bf16.msra.mxu0 0
  %3252 = vmatprep.subr.bf16.mxu0 0
  %3253 = vmatpush1.bf16.msra.mxu0 0
  %3254 = vmatprep.subr.bf16.mxu0 0
  %3255 = vmatpush1.bf16.msra.mxu0 0
  %3256 = vmatprep.subr.bf16.mxu0 0
  %3257 = vmatpush1.bf16.msra.mxu0 0
  %3258 = vmatprep.mubr.bf16.mxu0 0
  %3259 = vmatmul.mubr.bf16.gmra.mrb[0].mxu0 %v505
  %v3260 = vpop.f32.mrb[0].mxu0
  %v3261 = vadd.f32 %v3218, %v3260
  %v3262 = vpop.f32.mrb[0].mxu0
  %v3263 = vadd.f32 %v3220, %v3262
  %v3264 = vpop.f32.mrb[0].mxu0
  %v3265 = vadd.f32 %v3222, %v3264
  %v3266 = vpop.f32.mrb[0].mxu0
  %v3267 = vadd.f32 %v3224, %v3266
  %3268 = vdwg.mxu0
  %3269 = vmatprep.subr.bf16.mxu0 %v1864
  %3270 = vmatpush1.bf16.msra.mxu0 %v1863
  %3271 = vmatprep.subr.bf16.mxu0 %v1872
  %3272 = vmatpush1.bf16.msra.mxu0 %v1871
  %3273 = vmatprep.subr.bf16.mxu0 %v1880
  %3274 = vmatpush1.bf16.msra.mxu0 %v1879
  %3275 = vmatprep.subr.bf16.mxu0 %v1888
  %3276 = vmatpush1.bf16.msra.mxu0 %v1887
  %3277 = vmatprep.subr.bf16.mxu0 %v1896
  %3278 = vmatpush1.bf16.msra.mxu0 %v1895
  %3279 = vmatprep.subr.bf16.mxu0 %v1904
  %3280 = vmatpush1.bf16.msra.mxu0 %v1903
  %3281 = vmatprep.subr.bf16.mxu0 %v1912
  %3282 = vmatpush1.bf16.msra.mxu0 %v1911
  %3283 = vmatprep.subr.bf16.mxu0 %v1920
  %3284 = vmatpush1.bf16.msra.mxu0 %v1919
  %3285 = vmatprep.subr.bf16.mxu0 %v1928
  %3286 = vmatpush1.bf16.msra.mxu0 %v1927
  %3287 = vmatprep.subr.bf16.mxu0 %v1936
  %3288 = vmatpush1.bf16.msra.mxu0 %v1935
  %3289 = vmatprep.subr.bf16.mxu0 %v1944
  %3290 = vmatpush1.bf16.msra.mxu0 %v1943
  %3291 = vmatprep.subr.bf16.mxu0 %v1952
  %3292 = vmatpush1.bf16.msra.mxu0 %v1951
  %3293 = vmatprep.subr.bf16.mxu0 %v1960
  %3294 = vmatpush1.bf16.msra.mxu0 %v1959
  %3295 = vmatprep.subr.bf16.mxu0 %v1968
  %3296 = vmatpush1.bf16.msra.mxu0 %v1967
  %3297 = vmatprep.subr.bf16.mxu0 %v1976
  %3298 = vmatpush1.bf16.msra.mxu0 %v1975
  %3299 = vmatprep.subr.bf16.mxu0 %v1984
  %3300 = vmatpush1.bf16.msra.mxu0 %v1983
  %3301 = vmatprep.mubr.bf16.mxu0 %v500
  %3302 = vmatmul.mubr.bf16.gmra.mrb[0].mxu0 %v499
  %v3303 = vpop.f32.mrb[0].mxu0
  %v3304 = vadd.f32 0.0, %v3303
  %v3305 = vpop.f32.mrb[0].mxu0
  %v3306 = vadd.f32 0.0, %v3305
  %v3307 = vpop.f32.mrb[0].mxu0
  %v3308 = vadd.f32 0.0, %v3307
  %v3309 = vpop.f32.mrb[0].mxu0
  %v3310 = vadd.f32 0.0, %v3309
  %3311 = vdwg.mxu0
  %3312 = vmatprep.subr.bf16.mxu0 %v1992
  %3313 = vmatpush1.bf16.msra.mxu0 %v1991
  %3314 = vmatprep.subr.bf16.mxu0 %v2000
  %3315 = vmatpush1.bf16.msra.mxu0 %v1999
  %3316 = vmatprep.subr.bf16.mxu0 %v2008
  %3317 = vmatpush1.bf16.msra.mxu0 %v2007
  %3318 = vmatprep.subr.bf16.mxu0 %v2016
  %3319 = vmatpush1.bf16.msra.mxu0 %v2015
  %3320 = vmatprep.subr.bf16.mxu0 %v2024
  %3321 = vmatpush1.bf16.msra.mxu0 %v2023
  %3322 = vmatprep.subr.bf16.mxu0 %v2032
  %3323 = vmatpush1.bf16.msra.mxu0 %v2031
  %3324 = vmatprep.subr.bf16.mxu0 %v2040
  %3325 = vmatpush1.bf16.msra.mxu0 %v2039
  %3326 = vmatprep.subr.bf16.mxu0 %v2048
  %3327 = vmatpush1.bf16.msra.mxu0 %v2047
  %3328 = vmatprep.subr.bf16.mxu0 %v2056
  %3329 = vmatpush1.bf16.msra.mxu0 %v2055
  %3330 = vmatprep.subr.bf16.mxu0 %v2064
  %3331 = vmatpush1.bf16.msra.mxu0 %v2063
  %3332 = vmatprep.subr.bf16.mxu0 %v2072
  %3333 = vmatpush1.bf16.msra.mxu0 %v2071
  %3334 = vmatprep.subr.bf16.mxu0 %v2080
  %3335 = vmatpush1.bf16.msra.mxu0 %v2079
  %3336 = vmatprep.subr.bf16.mxu0 %v2088
  %3337 = vmatpush1.bf16.msra.mxu0 %v2087
  %3338 = vmatprep.subr.bf16.mxu0 %v2096
  %3339 = vmatpush1.bf16.msra.mxu0 %v2095
  %3340 = vmatprep.subr.bf16.mxu0 %v2104
  %3341 = vmatpush1.bf16.msra.mxu0 %v2103
  %3342 = vmatprep.subr.bf16.mxu0 %v2112
  %3343 = vmatpush1.bf16.msra.mxu0 %v2111
  %3344 = vmatprep.mubr.bf16.mxu0 %v502
  %3345 = vmatmul.mubr.bf16.gmra.mrb[0].mxu0 %v501
  %v3346 = vpop.f32.mrb[0].mxu0
  %v3347 = vadd.f32 %v3304, %v3346
  %v3348 = vpop.f32.mrb[0].mxu0
  %v3349 = vadd.f32 %v3306, %v3348
  %v3350 = vpop.f32.mrb[0].mxu0
  %v3351 = vadd.f32 %v3308, %v3350
  %v3352 = vpop.f32.mrb[0].mxu0
  %v3353 = vadd.f32 %v3310, %v3352
  %3354 = vdwg.mxu0
  %3355 = vmatprep.subr.bf16.mxu0 %v2120
  %3356 = vmatpush1.bf16.msra.mxu0 %v2119
  %3357 = vmatprep.subr.bf16.mxu0 %v2128
  %3358 = vmatpush1.bf16.msra.mxu0 %v2127
  %3359 = vmatprep.subr.bf16.mxu0 %v2136
  %3360 = vmatpush1.bf16.msra.mxu0 %v2135
  %3361 = vmatprep.subr.bf16.mxu0 %v2144
  %3362 = vmatpush1.bf16.msra.mxu0 %v2143
  %3363 = vmatprep.subr.bf16.mxu0 %v2152
  %3364 = vmatpush1.bf16.msra.mxu0 %v2151
  %3365 = vmatprep.subr.bf16.mxu0 %v2160
  %3366 = vmatpush1.bf16.msra.mxu0 %v2159
  %3367 = vmatprep.subr.bf16.mxu0 %v2168
  %3368 = vmatpush1.bf16.msra.mxu0 %v2167
  %3369 = vmatprep.subr.bf16.mxu0 %v2176
  %3370 = vmatpush1.bf16.msra.mxu0 %v2175
  %3371 = vmatprep.subr.bf16.mxu0 %v2184
  %3372 = vmatpush1.bf16.msra.mxu0 %v2183
  %3373 = vmatprep.subr.bf16.mxu0 %v2192
  %3374 = vmatpush1.bf16.msra.mxu0 %v2191
  %3375 = vmatprep.subr.bf16.mxu0 %v2200
  %3376 = vmatpush1.bf16.msra.mxu0 %v2199
  %3377 = vmatprep.subr.bf16.mxu0 %v2208
  %3378 = vmatpush1.bf16.msra.mxu0 %v2207
  %3379 = vmatprep.subr.bf16.mxu0 %v2216
  %3380 = vmatpush1.bf16.msra.mxu0 %v2215
  %3381 = vmatprep.subr.bf16.mxu0 %v2224
  %3382 = vmatpush1.bf16.msra.mxu0 %v2223
  %3383 = vmatprep.subr.bf16.mxu0 %v2232
  %3384 = vmatpush1.bf16.msra.mxu0 %v2231
  %3385 = vmatprep.subr.bf16.mxu0 %v2240
  %3386 = vmatpush1.bf16.msra.mxu0 %v2239
  %3387 = vmatprep.mubr.bf16.mxu0 %v504
  %3388 = vmatmul.mubr.bf16.gmra.mrb[0].mxu0 %v503
  %v3389 = vpop.f32.mrb[0].mxu0
  %v3390 = vadd.f32 %v3347, %v3389
  %v3391 = vpop.f32.mrb[0].mxu0
  %v3392 = vadd.f32 %v3349, %v3391
  %v3393 = vpop.f32.mrb[0].mxu0
  %v3394 = vadd.f32 %v3351, %v3393
  %v3395 = vpop.f32.mrb[0].mxu0
  %v3396 = vadd.f32 %v3353, %v3395
  %3397 = vdwg.mxu0
  %3398 = vmatprep.subr.bf16.mxu0 %v2248
  %3399 = vmatpush1.bf16.msra.mxu0 %v2247
  %3400 = vmatprep.subr.bf16.mxu0 %v2256
  %3401 = vmatpush1.bf16.msra.mxu0 %v2255
  %3402 = vmatprep.subr.bf16.mxu0 %v2264
  %3403 = vmatpush1.bf16.msra.mxu0 %v2263
  %3404 = vmatprep.subr.bf16.mxu0 %v2272
  %3405 = vmatpush1.bf16.msra.mxu0 %v2271
  %3406 = vmatprep.subr.bf16.mxu0 %v2280
  %3407 = vmatpush1.bf16.msra.mxu0 %v2279
  %3408 = vmatprep.subr.bf16.mxu0 %v2288
  %3409 = vmatpush1.bf16.msra.mxu0 %v2287
  %3410 = vmatprep.subr.bf16.mxu0 %v2296
  %3411 = vmatpush1.bf16.msra.mxu0 %v2295
  %3412 = vmatprep.subr.bf16.mxu0 %v2304
  %3413 = vmatpush1.bf16.msra.mxu0 %v2303
  %3414 = vmatprep.subr.bf16.mxu0 0
  %3415 = vmatpush1.bf16.msra.mxu0 0
  %3416 = vmatprep.subr.bf16.mxu0 0
  %3417 = vmatpush1.bf16.msra.mxu0 0
  %3418 = vmatprep.subr.bf16.mxu0 0
  %3419 = vmatpush1.bf16.msra.mxu0 0
  %3420 = vmatprep.subr.bf16.mxu0 0
  %3421 = vmatpush1.bf16.msra.mxu0 0
  %3422 = vmatprep.subr.bf16.mxu0 0
  %3423 = vmatpush1.bf16.msra.mxu0 0
  %3424 = vmatprep.subr.bf16.mxu0 0
  %3425 = vmatpush1.bf16.msra.mxu0 0
  %3426 = vmatprep.subr.bf16.mxu0 0
  %3427 = vmatpush1.bf16.msra.mxu0 0
  %3428 = vmatprep.subr.bf16.mxu0 0
  %3429 = vmatpush1.bf16.msra.mxu0 0
  %3430 = vmatprep.mubr.bf16.mxu0 0
  %3431 = vmatmul.mubr.bf16.gmra.mrb[0].mxu0 %v505
  %v3432 = vpop.f32.mrb[0].mxu0
  %v3433 = vadd.f32 %v3390, %v3432
  %v3434 = vpop.f32.mrb[0].mxu0
  %v3435 = vadd.f32 %v3392, %v3434
  %v3436 = vpop.f32.mrb[0].mxu0
  %v3437 = vadd.f32 %v3394, %v3436
  %v3438 = vpop.f32.mrb[0].mxu0
  %v3439 = vadd.f32 %v3396, %v3438
  %3440 = vdwg.mxu0
  %v3441 = vpack.c.bf16 %v2921, %v2917
  %v3442 = vpack.c.bf16 %v2923, %v2919
  %v3443 = vpack.c.bf16 %v3093, %v3089
  %v3444 = vpack.c.bf16 %v3095, %v3091
  %v3445 = vpack.c.bf16 %v3265, %v3261
  %v3446 = vpack.c.bf16 %v3267, %v3263
  %v3447 = vpack.c.bf16 %v3437, %v3433
  %v3448 = vpack.c.bf16 %v3439, %v3435
  %v3449 = vmax.bf16 %v3441, 0
  %v3450 = vmax.bf16 %v3442, 0
  %v3451 = vmax.bf16 %v3443, 0
  %v3452 = vmax.bf16 %v3444, 0
  %v3453 = vmax.bf16 %v3445, 0
  %v3454 = vmax.bf16 %v3446, 0
  %v3455 = vmax.bf16 %v3447, 0
  %v3456 = vmax.bf16 %v3448, 0
  %v3457 = vld [vmem:[%s2] sm:$0xff]
  %v3458 = vld [vmem:[%s2 + $0x8] sm:$0xff]
  %v3459 = vld [vmem:[%s2 + $0x10] sm:$0xff]
  %v3460 = vld [vmem:[%s2 + $0x18] sm:$0xff]
  %v3461 = vld [vmem:[%s2 + $0x20] sm:$0xff]
  %v3462 = vld [vmem:[%s2 + $0x28] sm:$0xff]
  %v3463 = vld [vmem:[%s2 + $0x30] sm:$0xff]
  %v3464 = vld [vmem:[%s2 + $0x38] sm:$0xff]
  %v3465 = vld [vmem:[%s2 + $0x40] sm:$0xff]
  %v3466 = vld [vmem:[%s2 + $0x48] sm:$0xff]
  %v3467 = vld [vmem:[%s2 + $0x50] sm:$0xff]
  %v3468 = vld [vmem:[%s2 + $0x58] sm:$0xff]
  %v3469 = vld [vmem:[%s2 + $0x60] sm:$0xff]
  %v3470 = vld [vmem:[%s2 + $0x68] sm:$0xff]
  %v3471 = vld [vmem:[%s2 + $0x70] sm:$0xff]
  %v3472 = vld [vmem:[%s2 + $0x78] sm:$0xff]
  %v3473 = vld [vmem:[%s2 + $0x80] sm:$0xff]
  %v3474 = vld [vmem:[%s2 + $0x88] sm:$0xff]
  %v3475 = vld [vmem:[%s2 + $0x90] sm:$0xff]
  %v3476 = vld [vmem:[%s2 + $0x98] sm:$0xff]
  %v3477 = vld [vmem:[%s2 + $0xa0] sm:$0xff]
  %v3478 = vld [vmem:[%s2 + $0xa8] sm:$0xff]
  %v3479 = vld [vmem:[%s2 + $0xb0] sm:$0xff]
  %v3480 = vld [vmem:[%s2 + $0xb8] sm:$0xff]
  %v3481 = vld [vmem:[%s2 + $0xc0] sm:$0xff]
  %v3482 = vld [vmem:[%s2 + $0xc8] sm:$0xff]
  %v3483 = vld [vmem:[%s2 + $0xd0] sm:$0xff]
  %v3484 = vld [vmem:[%s2 + $0xd8] sm:$0xff]
  %v3485 = vld [vmem:[%s2 + $0xe0] sm:$0xff]
  %v3486 = vld [vmem:[%s2 + $0xe8] sm:$0xff]
  %v3487 = vld [vmem:[%s2 + $0xf0] sm:$0xff]
  %v3488 = vld [vmem:[%s2 + $0xf8] sm:$0xff]
  %v3489 = vld [vmem:[%s2 + $0x100] sm:$0xff]
  %v3490 = vld [vmem:[%s2 + $0x108] sm:$0xff]
  %v3491 = vld [vmem:[%s2 + $0x110] sm:$0xff]
  %v3492 = vld [vmem:[%s2 + $0x118] sm:$0xff]
  %v3493 = vld [vmem:[%s2 + $0x120] sm:$0xff]
  %v3494 = vld [vmem:[%s2 + $0x128] sm:$0xff]
  %v3495 = vld [vmem:[%s2 + $0x130] sm:$0xff]
  %v3496 = vld [vmem:[%s2 + $0x138] sm:$0xff]
  %v3497 = vld [vmem:[%s2 + $0x140] sm:$0xff]
  %v3498 = vld [vmem:[%s2 + $0x148] sm:$0xff]
  %v3499 = vld [vmem:[%s2 + $0x150] sm:$0xff]
  %v3500 = vld [vmem:[%s2 + $0x158] sm:$0xff]
  %v3501 = vld [vmem:[%s2 + $0x160] sm:$0xff]
  %v3502 = vld [vmem:[%s2 + $0x168] sm:$0xff]
  %v3503 = vld [vmem:[%s2 + $0x170] sm:$0xff]
  %v3504 = vld [vmem:[%s2 + $0x178] sm:$0xff]
  %v3505 = vld [vmem:[%s2 + $0x180] sm:$0xff]
  %v3506 = vld [vmem:[%s2 + $0x188] sm:$0xff]
  %v3507 = vld [vmem:[%s2 + $0x190] sm:$0xff]
  %v3508 = vld [vmem:[%s2 + $0x198] sm:$0xff]
  %v3509 = vld [vmem:[%s2 + $0x1a0] sm:$0xff]
  %v3510 = vld [vmem:[%s2 + $0x1a8] sm:$0xff]
  %v3511 = vld [vmem:[%s2 + $0x1b0] sm:$0xff]
  %v3512 = vld [vmem:[%s2 + $0x1b8] sm:$0xff]
  %v3513 = vld [vmem:[%s2 + $0x1c0] sm:$0xff]
  %v3514 = vld [vmem:[%s2 + $0x1c8] sm:$0xff]
  %v3515 = vld [vmem:[%s2 + $0x1d0] sm:$0xff]
  %v3516 = vld [vmem:[%s2 + $0x1d8] sm:$0xff]
  %v3517 = vld [vmem:[%s2 + $0x1e0] sm:$0xff]
  %v3518 = vld [vmem:[%s2 + $0x1e8] sm:$0xff]
  %v3519 = vld [vmem:[%s2 + $0x1f0] sm:$0xff]
  %v3520 = vld [vmem:[%s2 + $0x1f8] sm:$0xff]
  %v3521 = vld [vmem:[%s2 + $0x200] sm:$0xff]
  %v3522 = vld [vmem:[%s2 + $0x208] sm:$0xff]
  %v3523 = vld [vmem:[%s2 + $0x210] sm:$0xff]
  %v3524 = vld [vmem:[%s2 + $0x218] sm:$0xff]
  %v3525 = vld [vmem:[%s2 + $0x220] sm:$0xff]
  %v3526 = vld [vmem:[%s2 + $0x228] sm:$0xff]
  %v3527 = vld [vmem:[%s2 + $0x230] sm:$0xff]
  %v3528 = vld [vmem:[%s2 + $0x238] sm:$0xff]
  %v3529 = vld [vmem:[%s2 + $0x240] sm:$0xff]
  %v3530 = vld [vmem:[%s2 + $0x248] sm:$0xff]
  %v3531 = vld [vmem:[%s2 + $0x250] sm:$0xff]
  %v3532 = vld [vmem:[%s2 + $0x258] sm:$0xff]
  %v3533 = vld [vmem:[%s2 + $0x260] sm:$0xff]
  %v3534 = vld [vmem:[%s2 + $0x268] sm:$0xff]
  %v3535 = vld [vmem:[%s2 + $0x270] sm:$0xff]
  %v3536 = vld [vmem:[%s2 + $0x278] sm:$0xff]
  %v3537 = vld [vmem:[%s2 + $0x280] sm:$0xff]
  %v3538 = vld [vmem:[%s2 + $0x288] sm:$0xff]
  %v3539 = vld [vmem:[%s2 + $0x290] sm:$0xff]
  %v3540 = vld [vmem:[%s2 + $0x298] sm:$0xff]
  %v3541 = vld [vmem:[%s2 + $0x2a0] sm:$0xff]
  %v3542 = vld [vmem:[%s2 + $0x2a8] sm:$0xff]
  %v3543 = vld [vmem:[%s2 + $0x2b0] sm:$0xff]
  %v3544 = vld [vmem:[%s2 + $0x2b8] sm:$0xff]
  %v3545 = vld [vmem:[%s2 + $0x2c0] sm:$0xff]
  %v3546 = vld [vmem:[%s2 + $0x2c8] sm:$0xff]
  %v3547 = vld [vmem:[%s2 + $0x2d0] sm:$0xff]
  %v3548 = vld [vmem:[%s2 + $0x2d8] sm:$0xff]
  %v3549 = vld [vmem:[%s2 + $0x2e0] sm:$0xff]
  %v3550 = vld [vmem:[%s2 + $0x2e8] sm:$0xff]
  %v3551 = vld [vmem:[%s2 + $0x2f0] sm:$0xff]
  %v3552 = vld [vmem:[%s2 + $0x2f8] sm:$0xff]
  %v3553 = vld [vmem:[%s2 + $0x300] sm:$0xff]
  %v3554 = vld [vmem:[%s2 + $0x308] sm:$0xff]
  %v3555 = vld [vmem:[%s2 + $0x310] sm:$0xff]
  %v3556 = vld [vmem:[%s2 + $0x318] sm:$0xff]
  %v3557 = vld [vmem:[%s2 + $0x320] sm:$0xff]
  %v3558 = vld [vmem:[%s2 + $0x328] sm:$0xff]
  %v3559 = vld [vmem:[%s2 + $0x330] sm:$0xff]
  %v3560 = vld [vmem:[%s2 + $0x338] sm:$0xff]
  %v3561 = vld [vmem:[%s2 + $0x340] sm:$0xff]
  %v3562 = vld [vmem:[%s2 + $0x348] sm:$0xff]
  %v3563 = vld [vmem:[%s2 + $0x350] sm:$0xff]
  %v3564 = vld [vmem:[%s2 + $0x358] sm:$0xff]
  %v3565 = vld [vmem:[%s2 + $0x360] sm:$0xff]
  %v3566 = vld [vmem:[%s2 + $0x368] sm:$0xff]
  %v3567 = vld [vmem:[%s2 + $0x370] sm:$0xff]
  %v3568 = vld [vmem:[%s2 + $0x378] sm:$0xff]
  %v3569 = vld [vmem:[%s2 + $0x380] sm:$0xff]
  %v3570 = vld [vmem:[%s2 + $0x388] sm:$0xff]
  %v3571 = vld [vmem:[%s2 + $0x390] sm:$0xff]
  %v3572 = vld [vmem:[%s2 + $0x398] sm:$0xff]
  %v3573 = vld [vmem:[%s2 + $0x3a0] sm:$0xff]
  %v3574 = vld [vmem:[%s2 + $0x3a8] sm:$0xff]
  %v3575 = vld [vmem:[%s2 + $0x3b0] sm:$0xff]
  %v3576 = vld [vmem:[%s2 + $0x3b8] sm:$0xff]
  %v3577 = vld [vmem:[%s2 + $0x3c0] sm:$0xff]
  %v3578 = vld [vmem:[%s2 + $0x3c8] sm:$0xff]
  %v3579 = vld [vmem:[%s2 + $0x3d0] sm:$0xff]
  %v3580 = vld [vmem:[%s2 + $0x3d8] sm:$0xff]
  %v3581 = vld [vmem:[%s2 + $0x3e0] sm:$0xff]
  %v3582 = vld [vmem:[%s2 + $0x3e8] sm:$0xff]
  %v3583 = vld [vmem:[%s2 + $0x3f0] sm:$0xff]
  %v3584 = vld [vmem:[%s2 + $0x3f8] sm:$0xff]
  %v3585 = vld [vmem:[%s3] sm:$0x3]
  %v3587 = vlaneseq
  %v3588 = vshrl.u32 %v3587, 7
  %v3589 = vsub.s32 0, %v3588
  %v3590 = vrot.slane %v3585, %v3589
  %v3591 = vlaneseq
  %v3592 = vshrl.u32 %v3591, 7
  %v3593 = vsub.s32 1, %v3592
  %v3594 = vrot.slane %v3585, %v3593
  %v3725 = vunpack.c.l.b16 %v3457
  %v3726 = vunpack.c.h.b16 %v3457
  %v3727 = vunpack.c.l.b16 %v3458
  %v3728 = vunpack.c.h.b16 %v3458
  %v3729 = vunpack.c.l.b16 %v3459
  %v3730 = vunpack.c.h.b16 %v3459
  %v3731 = vunpack.c.l.b16 %v3460
  %v3732 = vunpack.c.h.b16 %v3460
  %v3733 = vunpack.c.l.b16 %v3461
  %v3734 = vunpack.c.h.b16 %v3461
  %v3735 = vunpack.c.l.b16 %v3462
  %v3736 = vunpack.c.h.b16 %v3462
  %v3737 = vunpack.c.l.b16 %v3463
  %v3738 = vunpack.c.h.b16 %v3463
  %v3739 = vunpack.c.l.b16 %v3464
  %v3740 = vunpack.c.h.b16 %v3464
  %v3741 = vunpack.c.l.b16 %v3465
  %v3742 = vunpack.c.h.b16 %v3465
  %v3743 = vunpack.c.l.b16 %v3466
  %v3744 = vunpack.c.h.b16 %v3466
  %v3745 = vunpack.c.l.b16 %v3467
  %v3746 = vunpack.c.h.b16 %v3467
  %v3747 = vunpack.c.l.b16 %v3468
  %v3748 = vunpack.c.h.b16 %v3468
  %v3749 = vunpack.c.l.b16 %v3469
  %v3750 = vunpack.c.h.b16 %v3469
  %v3751 = vunpack.c.l.b16 %v3470
  %v3752 = vunpack.c.h.b16 %v3470
  %v3753 = vunpack.c.l.b16 %v3471
  %v3754 = vunpack.c.h.b16 %v3471
  %v3755 = vunpack.c.l.b16 %v3472
  %v3756 = vunpack.c.h.b16 %v3472
  %v3757 = vunpack.c.l.b16 %v3473
  %v3758 = vunpack.c.h.b16 %v3473
  %v3759 = vunpack.c.l.b16 %v3474
  %v3760 = vunpack.c.h.b16 %v3474
  %v3761 = vunpack.c.l.b16 %v3475
  %v3762 = vunpack.c.h.b16 %v3475
  %v3763 = vunpack.c.l.b16 %v3476
  %v3764 = vunpack.c.h.b16 %v3476
  %v3765 = vunpack.c.l.b16 %v3477
  %v3766 = vunpack.c.h.b16 %v3477
  %v3767 = vunpack.c.l.b16 %v3478
  %v3768 = vunpack.c.h.b16 %v3478
  %v3769 = vunpack.c.l.b16 %v3479
  %v3770 = vunpack.c.h.b16 %v3479
  %v3771 = vunpack.c.l.b16 %v3480
  %v3772 = vunpack.c.h.b16 %v3480
  %v3773 = vunpack.c.l.b16 %v3481
  %v3774 = vunpack.c.h.b16 %v3481
  %v3775 = vunpack.c.l.b16 %v3482
  %v3776 = vunpack.c.h.b16 %v3482
  %v3777 = vunpack.c.l.b16 %v3483
  %v3778 = vunpack.c.h.b16 %v3483
  %v3779 = vunpack.c.l.b16 %v3484
  %v3780 = vunpack.c.h.b16 %v3484
  %v3781 = vunpack.c.l.b16 %v3485
  %v3782 = vunpack.c.h.b16 %v3485
  %v3783 = vunpack.c.l.b16 %v3486
  %v3784 = vunpack.c.h.b16 %v3486
  %v3785 = vunpack.c.l.b16 %v3487
  %v3786 = vunpack.c.h.b16 %v3487
  %v3787 = vunpack.c.l.b16 %v3488
  %v3788 = vunpack.c.h.b16 %v3488
  %v3789 = vunpack.c.l.b16 %v3489
  %v3790 = vunpack.c.h.b16 %v3489
  %v3791 = vunpack.c.l.b16 %v3490
  %v3792 = vunpack.c.h.b16 %v3490
  %v3793 = vunpack.c.l.b16 %v3491
  %v3794 = vunpack.c.h.b16 %v3491
  %v3795 = vunpack.c.l.b16 %v3492
  %v3796 = vunpack.c.h.b16 %v3492
  %v3797 = vunpack.c.l.b16 %v3493
  %v3798 = vunpack.c.h.b16 %v3493
  %v3799 = vunpack.c.l.b16 %v3494
  %v3800 = vunpack.c.h.b16 %v3494
  %v3801 = vunpack.c.l.b16 %v3495
  %v3802 = vunpack.c.h.b16 %v3495
  %v3803 = vunpack.c.l.b16 %v3496
  %v3804 = vunpack.c.h.b16 %v3496
  %v3805 = vunpack.c.l.b16 %v3497
  %v3806 = vunpack.c.h.b16 %v3497
  %v3807 = vunpack.c.l.b16 %v3498
  %v3808 = vunpack.c.h.b16 %v3498
  %v3809 = vunpack.c.l.b16 %v3499
  %v3810 = vunpack.c.h.b16 %v3499
  %v3811 = vunpack.c.l.b16 %v3500
  %v3812 = vunpack.c.h.b16 %v3500
  %v3813 = vunpack.c.l.b16 %v3501
  %v3814 = vunpack.c.h.b16 %v3501
  %v3815 = vunpack.c.l.b16 %v3502
  %v3816 = vunpack.c.h.b16 %v3502
  %v3817 = vunpack.c.l.b16 %v3503
  %v3818 = vunpack.c.h.b16 %v3503
  %v3819 = vunpack.c.l.b16 %v3504
  %v3820 = vunpack.c.h.b16 %v3504
  %v3821 = vunpack.c.l.b16 %v3505
  %v3822 = vunpack.c.h.b16 %v3505
  %v3823 = vunpack.c.l.b16 %v3506
  %v3824 = vunpack.c.h.b16 %v3506
  %v3825 = vunpack.c.l.b16 %v3507
  %v3826 = vunpack.c.h.b16 %v3507
  %v3827 = vunpack.c.l.b16 %v3508
  %v3828 = vunpack.c.h.b16 %v3508
  %v3829 = vunpack.c.l.b16 %v3509
  %v3830 = vunpack.c.h.b16 %v3509
  %v3831 = vunpack.c.l.b16 %v3510
  %v3832 = vunpack.c.h.b16 %v3510
  %v3833 = vunpack.c.l.b16 %v3511
  %v3834 = vunpack.c.h.b16 %v3511
  %v3835 = vunpack.c.l.b16 %v3512
  %v3836 = vunpack.c.h.b16 %v3512
  %v3837 = vunpack.c.l.b16 %v3513
  %v3838 = vunpack.c.h.b16 %v3513
  %v3839 = vunpack.c.l.b16 %v3514
  %v3840 = vunpack.c.h.b16 %v3514
  %v3841 = vunpack.c.l.b16 %v3515
  %v3842 = vunpack.c.h.b16 %v3515
  %v3843 = vunpack.c.l.b16 %v3516
  %v3844 = vunpack.c.h.b16 %v3516
  %v3845 = vunpack.c.l.b16 %v3517
  %v3846 = vunpack.c.h.b16 %v3517
  %v3847 = vunpack.c.l.b16 %v3518
  %v3848 = vunpack.c.h.b16 %v3518
  %v3849 = vunpack.c.l.b16 %v3519
  %v3850 = vunpack.c.h.b16 %v3519
  %v3851 = vunpack.c.l.b16 %v3520
  %v3852 = vunpack.c.h.b16 %v3520
  %v3853 = vunpack.c.l.b16 %v3521
  %v3854 = vunpack.c.h.b16 %v3521
  %v3855 = vunpack.c.l.b16 %v3522
  %v3856 = vunpack.c.h.b16 %v3522
  %v3857 = vunpack.c.l.b16 %v3523
  %v3858 = vunpack.c.h.b16 %v3523
  %v3859 = vunpack.c.l.b16 %v3524
  %v3860 = vunpack.c.h.b16 %v3524
  %v3861 = vunpack.c.l.b16 %v3525
  %v3862 = vunpack.c.h.b16 %v3525
  %v3863 = vunpack.c.l.b16 %v3526
  %v3864 = vunpack.c.h.b16 %v3526
  %v3865 = vunpack.c.l.b16 %v3527
  %v3866 = vunpack.c.h.b16 %v3527
  %v3867 = vunpack.c.l.b16 %v3528
  %v3868 = vunpack.c.h.b16 %v3528
  %v3869 = vunpack.c.l.b16 %v3529
  %v3870 = vunpack.c.h.b16 %v3529
  %v3871 = vunpack.c.l.b16 %v3530
  %v3872 = vunpack.c.h.b16 %v3530
  %v3873 = vunpack.c.l.b16 %v3531
  %v3874 = vunpack.c.h.b16 %v3531
  %v3875 = vunpack.c.l.b16 %v3532
  %v3876 = vunpack.c.h.b16 %v3532
  %v3877 = vunpack.c.l.b16 %v3533
  %v3878 = vunpack.c.h.b16 %v3533
  %v3879 = vunpack.c.l.b16 %v3534
  %v3880 = vunpack.c.h.b16 %v3534
  %v3881 = vunpack.c.l.b16 %v3535
  %v3882 = vunpack.c.h.b16 %v3535
  %v3883 = vunpack.c.l.b16 %v3536
  %v3884 = vunpack.c.h.b16 %v3536
  %v3885 = vunpack.c.l.b16 %v3537
  %v3886 = vunpack.c.h.b16 %v3537
  %v3887 = vunpack.c.l.b16 %v3538
  %v3888 = vunpack.c.h.b16 %v3538
  %v3889 = vunpack.c.l.b16 %v3539
  %v3890 = vunpack.c.h.b16 %v3539
  %v3891 = vunpack.c.l.b16 %v3540
  %v3892 = vunpack.c.h.b16 %v3540
  %v3893 = vunpack.c.l.b16 %v3541
  %v3894 = vunpack.c.h.b16 %v3541
  %v3895 = vunpack.c.l.b16 %v3542
  %v3896 = vunpack.c.h.b16 %v3542
  %v3897 = vunpack.c.l.b16 %v3543
  %v3898 = vunpack.c.h.b16 %v3543
  %v3899 = vunpack.c.l.b16 %v3544
  %v3900 = vunpack.c.h.b16 %v3544
  %v3901 = vunpack.c.l.b16 %v3545
  %v3902 = vunpack.c.h.b16 %v3545
  %v3903 = vunpack.c.l.b16 %v3546
  %v3904 = vunpack.c.h.b16 %v3546
  %v3905 = vunpack.c.l.b16 %v3547
  %v3906 = vunpack.c.h.b16 %v3547
  %v3907 = vunpack.c.l.b16 %v3548
  %v3908 = vunpack.c.h.b16 %v3548
  %v3909 = vunpack.c.l.b16 %v3549
  %v3910 = vunpack.c.h.b16 %v3549
  %v3911 = vunpack.c.l.b16 %v3550
  %v3912 = vunpack.c.h.b16 %v3550
  %v3913 = vunpack.c.l.b16 %v3551
  %v3914 = vunpack.c.h.b16 %v3551
  %v3915 = vunpack.c.l.b16 %v3552
  %v3916 = vunpack.c.h.b16 %v3552
  %v3917 = vunpack.c.l.b16 %v3553
  %v3918 = vunpack.c.h.b16 %v3553
  %v3919 = vunpack.c.l.b16 %v3554
  %v3920 = vunpack.c.h.b16 %v3554
  %v3921 = vunpack.c.l.b16 %v3555
  %v3922 = vunpack.c.h.b16 %v3555
  %v3923 = vunpack.c.l.b16 %v3556
  %v3924 = vunpack.c.h.b16 %v3556
  %v3925 = vunpack.c.l.b16 %v3557
  %v3926 = vunpack.c.h.b16 %v3557
  %v3927 = vunpack.c.l.b16 %v3558
  %v3928 = vunpack.c.h.b16 %v3558
  %v3929 = vunpack.c.l.b16 %v3559
  %v3930 = vunpack.c.h.b16 %v3559
  %v3931 = vunpack.c.l.b16 %v3560
  %v3932 = vunpack.c.h.b16 %v3560
  %v3933 = vunpack.c.l.b16 %v3561
  %v3934 = vunpack.c.h.b16 %v3561
  %v3935 = vunpack.c.l.b16 %v3562
  %v3936 = vunpack.c.h.b16 %v3562
  %v3937 = vunpack.c.l.b16 %v3563
  %v3938 = vunpack.c.h.b16 %v3563
  %v3939 = vunpack.c.l.b16 %v3564
  %v3940 = vunpack.c.h.b16 %v3564
  %v3941 = vunpack.c.l.b16 %v3565
  %v3942 = vunpack.c.h.b16 %v3565
  %v3943 = vunpack.c.l.b16 %v3566
  %v3944 = vunpack.c.h.b16 %v3566
  %v3945 = vunpack.c.l.b16 %v3567
  %v3946 = vunpack.c.h.b16 %v3567
  %v3947 = vunpack.c.l.b16 %v3568
  %v3948 = vunpack.c.h.b16 %v3568
  %v3949 = vunpack.c.l.b16 %v3569
  %v3950 = vunpack.c.h.b16 %v3569
  %v3951 = vunpack.c.l.b16 %v3570
  %v3952 = vunpack.c.h.b16 %v3570
  %v3953 = vunpack.c.l.b16 %v3571
  %v3954 = vunpack.c.h.b16 %v3571
  %v3955 = vunpack.c.l.b16 %v3572
  %v3956 = vunpack.c.h.b16 %v3572
  %v3957 = vunpack.c.l.b16 %v3573
  %v3958 = vunpack.c.h.b16 %v3573
  %v3959 = vunpack.c.l.b16 %v3574
  %v3960 = vunpack.c.h.b16 %v3574
  %v3961 = vunpack.c.l.b16 %v3575
  %v3962 = vunpack.c.h.b16 %v3575
  %v3963 = vunpack.c.l.b16 %v3576
  %v3964 = vunpack.c.h.b16 %v3576
  %v3965 = vunpack.c.l.b16 %v3577
  %v3966 = vunpack.c.h.b16 %v3577
  %v3967 = vunpack.c.l.b16 %v3578
  %v3968 = vunpack.c.h.b16 %v3578
  %v3969 = vunpack.c.l.b16 %v3579
  %v3970 = vunpack.c.h.b16 %v3579
  %v3971 = vunpack.c.l.b16 %v3580
  %v3972 = vunpack.c.h.b16 %v3580
  %v3973 = vunpack.c.l.b16 %v3581
  %v3974 = vunpack.c.h.b16 %v3581
  %v3975 = vunpack.c.l.b16 %v3582
  %v3976 = vunpack.c.h.b16 %v3582
  %v3977 = vunpack.c.l.b16 %v3583
  %v3978 = vunpack.c.h.b16 %v3583
  %v3979 = vunpack.c.l.b16 %v3584
  %v3980 = vunpack.c.h.b16 %v3584
  %v3981 = vpack.c.b16 %v3727, %v3725
  %v3982 = vpack.c.b16 %v3728, %v3726
  %v3983 = vpack.c.b16 %v3731, %v3729
  %v3984 = vpack.c.b16 %v3732, %v3730
  %v3985 = vpack.c.b16 %v3735, %v3733
  %v3986 = vpack.c.b16 %v3736, %v3734
  %v3987 = vpack.c.b16 %v3739, %v3737
  %v3988 = vpack.c.b16 %v3740, %v3738
  %v3989 = vpack.c.b16 %v3743, %v3741
  %v3990 = vpack.c.b16 %v3744, %v3742
  %v3991 = vpack.c.b16 %v3747, %v3745
  %v3992 = vpack.c.b16 %v3748, %v3746
  %v3993 = vpack.c.b16 %v3751, %v3749
  %v3994 = vpack.c.b16 %v3752, %v3750
  %v3995 = vpack.c.b16 %v3755, %v3753
  %v3996 = vpack.c.b16 %v3756, %v3754
  %v3997 = vpack.c.b16 %v3759, %v3757
  %v3998 = vpack.c.b16 %v3760, %v3758
  %v3999 = vpack.c.b16 %v3763, %v3761
  %v4000 = vpack.c.b16 %v3764, %v3762
  %v4001 = vpack.c.b16 %v3767, %v3765
  %v4002 = vpack.c.b16 %v3768, %v3766
  %v4003 = vpack.c.b16 %v3771, %v3769
  %v4004 = vpack.c.b16 %v3772, %v3770
  %v4005 = vpack.c.b16 %v3775, %v3773
  %v4006 = vpack.c.b16 %v3776, %v3774
  %v4007 = vpack.c.b16 %v3779, %v3777
  %v4008 = vpack.c.b16 %v3780, %v3778
  %v4009 = vpack.c.b16 %v3783, %v3781
  %v4010 = vpack.c.b16 %v3784, %v3782
  %v4011 = vpack.c.b16 %v3787, %v3785
  %v4012 = vpack.c.b16 %v3788, %v3786
  %v4013 = vpack.c.b16 %v3791, %v3789
  %v4014 = vpack.c.b16 %v3792, %v3790
  %v4015 = vpack.c.b16 %v3795, %v3793
  %v4016 = vpack.c.b16 %v3796, %v3794
  %v4017 = vpack.c.b16 %v3799, %v3797
  %v4018 = vpack.c.b16 %v3800, %v3798
  %v4019 = vpack.c.b16 %v3803, %v3801
  %v4020 = vpack.c.b16 %v3804, %v3802
  %v4021 = vpack.c.b16 %v3807, %v3805
  %v4022 = vpack.c.b16 %v3808, %v3806
  %v4023 = vpack.c.b16 %v3811, %v3809
  %v4024 = vpack.c.b16 %v3812, %v3810
  %v4025 = vpack.c.b16 %v3815, %v3813
  %v4026 = vpack.c.b16 %v3816, %v3814
  %v4027 = vpack.c.b16 %v3819, %v3817
  %v4028 = vpack.c.b16 %v3820, %v3818
  %v4029 = vpack.c.b16 %v3823, %v3821
  %v4030 = vpack.c.b16 %v3824, %v3822
  %v4031 = vpack.c.b16 %v3827, %v3825
  %v4032 = vpack.c.b16 %v3828, %v3826
  %v4033 = vpack.c.b16 %v3831, %v3829
  %v4034 = vpack.c.b16 %v3832, %v3830
  %v4035 = vpack.c.b16 %v3835, %v3833
  %v4036 = vpack.c.b16 %v3836, %v3834
  %v4037 = vpack.c.b16 %v3839, %v3837
  %v4038 = vpack.c.b16 %v3840, %v3838
  %v4039 = vpack.c.b16 %v3843, %v3841
  %v4040 = vpack.c.b16 %v3844, %v3842
  %v4041 = vpack.c.b16 %v3847, %v3845
  %v4042 = vpack.c.b16 %v3848, %v3846
  %v4043 = vpack.c.b16 %v3851, %v3849
  %v4044 = vpack.c.b16 %v3852, %v3850
  %v4045 = vpack.c.b16 %v3855, %v3853
  %v4046 = vpack.c.b16 %v3856, %v3854
  %v4047 = vpack.c.b16 %v3859, %v3857
  %v4048 = vpack.c.b16 %v3860, %v3858
  %v4049 = vpack.c.b16 %v3863, %v3861
  %v4050 = vpack.c.b16 %v3864, %v3862
  %v4051 = vpack.c.b16 %v3867, %v3865
  %v4052 = vpack.c.b16 %v3868, %v3866
  %v4053 = vpack.c.b16 %v3871, %v3869
  %v4054 = vpack.c.b16 %v3872, %v3870
  %v4055 = vpack.c.b16 %v3875, %v3873
  %v4056 = vpack.c.b16 %v3876, %v3874
  %v4057 = vpack.c.b16 %v3879, %v3877
  %v4058 = vpack.c.b16 %v3880, %v3878
  %v4059 = vpack.c.b16 %v3883, %v3881
  %v4060 = vpack.c.b16 %v3884, %v3882
  %v4061 = vpack.c.b16 %v3887, %v3885
  %v4062 = vpack.c.b16 %v3888, %v3886
  %v4063 = vpack.c.b16 %v3891, %v3889
  %v4064 = vpack.c.b16 %v3892, %v3890
  %v4065 = vpack.c.b16 %v3895, %v3893
  %v4066 = vpack.c.b16 %v3896, %v3894
  %v4067 = vpack.c.b16 %v3899, %v3897
  %v4068 = vpack.c.b16 %v3900, %v3898
  %v4069 = vpack.c.b16 %v3903, %v3901
  %v4070 = vpack.c.b16 %v3904, %v3902
  %v4071 = vpack.c.b16 %v3907, %v3905
  %v4072 = vpack.c.b16 %v3908, %v3906
  %v4073 = vpack.c.b16 %v3911, %v3909
  %v4074 = vpack.c.b16 %v3912, %v3910
  %v4075 = vpack.c.b16 %v3915, %v3913
  %v4076 = vpack.c.b16 %v3916, %v3914
  %v4077 = vpack.c.b16 %v3919, %v3917
  %v4078 = vpack.c.b16 %v3920, %v3918
  %v4079 = vpack.c.b16 %v3923, %v3921
  %v4080 = vpack.c.b16 %v3924, %v3922
  %v4081 = vpack.c.b16 %v3927, %v3925
  %v4082 = vpack.c.b16 %v3928, %v3926
  %v4083 = vpack.c.b16 %v3931, %v3929
  %v4084 = vpack.c.b16 %v3932, %v3930
  %v4085 = vpack.c.b16 %v3935, %v3933
  %v4086 = vpack.c.b16 %v3936, %v3934
  %v4087 = vpack.c.b16 %v3939, %v3937
  %v4088 = vpack.c.b16 %v3940, %v3938
  %v4089 = vpack.c.b16 %v3943, %v3941
  %v4090 = vpack.c.b16 %v3944, %v3942
  %v4091 = vpack.c.b16 %v3947, %v3945
  %v4092 = vpack.c.b16 %v3948, %v3946
  %v4093 = vpack.c.b16 %v3951, %v3949
  %v4094 = vpack.c.b16 %v3952, %v3950
  %v4095 = vpack.c.b16 %v3955, %v3953
  %v4096 = vpack.c.b16 %v3956, %v3954
  %v4097 = vpack.c.b16 %v3959, %v3957
  %v4098 = vpack.c.b16 %v3960, %v3958
  %v4099 = vpack.c.b16 %v3963, %v3961
  %v4100 = vpack.c.b16 %v3964, %v3962
  %v4101 = vpack.c.b16 %v3967, %v3965
  %v4102 = vpack.c.b16 %v3968, %v3966
  %v4103 = vpack.c.b16 %v3971, %v3969
  %v4104 = vpack.c.b16 %v3972, %v3970
  %v4105 = vpack.c.b16 %v3975, %v3973
  %v4106 = vpack.c.b16 %v3976, %v3974
  %v4107 = vpack.c.b16 %v3979, %v3977
  %v4108 = vpack.c.b16 %v3980, %v3978
  %4237 = vmatprep.subr.bf16.mxu0 %v3982
  %4238 = vmatpush1.bf16.msra.mxu0 %v3981
  %4239 = vmatprep.subr.bf16.mxu0 %v3984
  %4240 = vmatpush1.bf16.msra.mxu0 %v3983
  %4241 = vmatprep.subr.bf16.mxu0 %v3986
  %4242 = vmatpush1.bf16.msra.mxu0 %v3985
  %4243 = vmatprep.subr.bf16.mxu0 %v3988
  %4244 = vmatpush1.bf16.msra.mxu0 %v3987
  %4245 = vmatprep.subr.bf16.mxu0 %v3990
  %4246 = vmatpush1.bf16.msra.mxu0 %v3989
  %4247 = vmatprep.subr.bf16.mxu0 %v3992
  %4248 = vmatpush1.bf16.msra.mxu0 %v3991
  %4249 = vmatprep.subr.bf16.mxu0 %v3994
  %4250 = vmatpush1.bf16.msra.mxu0 %v3993
  %4251 = vmatprep.subr.bf16.mxu0 %v3996
  %4252 = vmatpush1.bf16.msra.mxu0 %v3995
  %4253 = vmatprep.subr.bf16.mxu0 %v3998
  %4254 = vmatpush1.bf16.msra.mxu0 %v3997
  %4255 = vmatprep.subr.bf16.mxu0 %v4000
  %4256 = vmatpush1.bf16.msra.mxu0 %v3999
  %4257 = vmatprep.subr.bf16.mxu0 %v4002
  %4258 = vmatpush1.bf16.msra.mxu0 %v4001
  %4259 = vmatprep.subr.bf16.mxu0 %v4004
  %4260 = vmatpush1.bf16.msra.mxu0 %v4003
  %4261 = vmatprep.subr.bf16.mxu0 %v4006
  %4262 = vmatpush1.bf16.msra.mxu0 %v4005
  %4263 = vmatprep.subr.bf16.mxu0 %v4008
  %4264 = vmatpush1.bf16.msra.mxu0 %v4007
  %4265 = vmatprep.subr.bf16.mxu0 %v4010
  %4266 = vmatpush1.bf16.msra.mxu0 %v4009
  %4267 = vmatprep.subr.bf16.mxu0 %v4012
  %4268 = vmatpush1.bf16.msra.mxu0 %v4011
  %4269 = vmatprep.mubr.bf16.mxu0 %v3450
  %4270 = vmatmul.mubr.bf16.gmra.mrb[0].mxu0 %v3449
  %v4271 = vpop.f32.mrb[0].mxu0
  %v4272 = vadd.f32 %v3590, %v4271
  %v4273 = vpop.f32.mrb[0].mxu0
  %v4274 = vadd.f32 %v3594, %v4273
  %v4275 = vpop.f32.mrb[0].mxu0
  %v4276 = vadd.f32 %v3590, %v4275
  %v4277 = vpop.f32.mrb[0].mxu0
  %v4278 = vadd.f32 %v3594, %v4277
  %4279 = vdwg.mxu0
  %4280 = vmatprep.subr.bf16.mxu0 %v4014
  %4281 = vmatpush1.bf16.msra.mxu0 %v4013
  %4282 = vmatprep.subr.bf16.mxu0 %v4016
  %4283 = vmatpush1.bf16.msra.mxu0 %v4015
  %4284 = vmatprep.subr.bf16.mxu0 %v4018
  %4285 = vmatpush1.bf16.msra.mxu0 %v4017
  %4286 = vmatprep.subr.bf16.mxu0 %v4020
  %4287 = vmatpush1.bf16.msra.mxu0 %v4019
  %4288 = vmatprep.subr.bf16.mxu0 %v4022
  %4289 = vmatpush1.bf16.msra.mxu0 %v4021
  %4290 = vmatprep.subr.bf16.mxu0 %v4024
  %4291 = vmatpush1.bf16.msra.mxu0 %v4023
  %4292 = vmatprep.subr.bf16.mxu0 %v4026
  %4293 = vmatpush1.bf16.msra.mxu0 %v4025
  %4294 = vmatprep.subr.bf16.mxu0 %v4028
  %4295 = vmatpush1.bf16.msra.mxu0 %v4027
  %4296 = vmatprep.subr.bf16.mxu0 %v4030
  %4297 = vmatpush1.bf16.msra.mxu0 %v4029
  %4298 = vmatprep.subr.bf16.mxu0 %v4032
  %4299 = vmatpush1.bf16.msra.mxu0 %v4031
  %4300 = vmatprep.subr.bf16.mxu0 %v4034
  %4301 = vmatpush1.bf16.msra.mxu0 %v4033
  %4302 = vmatprep.subr.bf16.mxu0 %v4036
  %4303 = vmatpush1.bf16.msra.mxu0 %v4035
  %4304 = vmatprep.subr.bf16.mxu0 %v4038
  %4305 = vmatpush1.bf16.msra.mxu0 %v4037
  %4306 = vmatprep.subr.bf16.mxu0 %v4040
  %4307 = vmatpush1.bf16.msra.mxu0 %v4039
  %4308 = vmatprep.subr.bf16.mxu0 %v4042
  %4309 = vmatpush1.bf16.msra.mxu0 %v4041
  %4310 = vmatprep.subr.bf16.mxu0 %v4044
  %4311 = vmatpush1.bf16.msra.mxu0 %v4043
  %4312 = vmatprep.mubr.bf16.mxu0 %v3452
  %4313 = vmatmul.mubr.bf16.gmra.mrb[0].mxu0 %v3451
  %v4314 = vpop.f32.mrb[0].mxu0
  %v4315 = vadd.f32 %v4272, %v4314
  %v4316 = vpop.f32.mrb[0].mxu0
  %v4317 = vadd.f32 %v4274, %v4316
  %v4318 = vpop.f32.mrb[0].mxu0
  %v4319 = vadd.f32 %v4276, %v4318
  %v4320 = vpop.f32.mrb[0].mxu0
  %v4321 = vadd.f32 %v4278, %v4320
  %4322 = vdwg.mxu0
  %4323 = vmatprep.subr.bf16.mxu0 %v4046
  %4324 = vmatpush1.bf16.msra.mxu0 %v4045
  %4325 = vmatprep.subr.bf16.mxu0 %v4048
  %4326 = vmatpush1.bf16.msra.mxu0 %v4047
  %4327 = vmatprep.subr.bf16.mxu0 %v4050
  %4328 = vmatpush1.bf16.msra.mxu0 %v4049
  %4329 = vmatprep.subr.bf16.mxu0 %v4052
  %4330 = vmatpush1.bf16.msra.mxu0 %v4051
  %4331 = vmatprep.subr.bf16.mxu0 %v4054
  %4332 = vmatpush1.bf16.msra.mxu0 %v4053
  %4333 = vmatprep.subr.bf16.mxu0 %v4056
  %4334 = vmatpush1.bf16.msra.mxu0 %v4055
  %4335 = vmatprep.subr.bf16.mxu0 %v4058
  %4336 = vmatpush1.bf16.msra.mxu0 %v4057
  %4337 = vmatprep.subr.bf16.mxu0 %v4060
  %4338 = vmatpush1.bf16.msra.mxu0 %v4059
  %4339 = vmatprep.subr.bf16.mxu0 %v4062
  %4340 = vmatpush1.bf16.msra.mxu0 %v4061
  %4341 = vmatprep.subr.bf16.mxu0 %v4064
  %4342 = vmatpush1.bf16.msra.mxu0 %v4063
  %4343 = vmatprep.subr.bf16.mxu0 %v4066
  %4344 = vmatpush1.bf16.msra.mxu0 %v4065
  %4345 = vmatprep.subr.bf16.mxu0 %v4068
  %4346 = vmatpush1.bf16.msra.mxu0 %v4067
  %4347 = vmatprep.subr.bf16.mxu0 %v4070
  %4348 = vmatpush1.bf16.msra.mxu0 %v4069
  %4349 = vmatprep.subr.bf16.mxu0 %v4072
  %4350 = vmatpush1.bf16.msra.mxu0 %v4071
  %4351 = vmatprep.subr.bf16.mxu0 %v4074
  %4352 = vmatpush1.bf16.msra.mxu0 %v4073
  %4353 = vmatprep.subr.bf16.mxu0 %v4076
  %4354 = vmatpush1.bf16.msra.mxu0 %v4075
  %4355 = vmatprep.mubr.bf16.mxu0 %v3454
  %4356 = vmatmul.mubr.bf16.gmra.mrb[0].mxu0 %v3453
  %v4357 = vpop.f32.mrb[0].mxu0
  %v4358 = vadd.f32 %v4315, %v4357
  %v4359 = vpop.f32.mrb[0].mxu0
  %v4360 = vadd.f32 %v4317, %v4359
  %v4361 = vpop.f32.mrb[0].mxu0
  %v4362 = vadd.f32 %v4319, %v4361
  %v4363 = vpop.f32.mrb[0].mxu0
  %v4364 = vadd.f32 %v4321, %v4363
  %4365 = vdwg.mxu0
  %4366 = vmatprep.subr.bf16.mxu0 %v4078
  %4367 = vmatpush1.bf16.msra.mxu0 %v4077
  %4368 = vmatprep.subr.bf16.mxu0 %v4080
  %4369 = vmatpush1.bf16.msra.mxu0 %v4079
  %4370 = vmatprep.subr.bf16.mxu0 %v4082
  %4371 = vmatpush1.bf16.msra.mxu0 %v4081
  %4372 = vmatprep.subr.bf16.mxu0 %v4084
  %4373 = vmatpush1.bf16.msra.mxu0 %v4083
  %4374 = vmatprep.subr.bf16.mxu0 %v4086
  %4375 = vmatpush1.bf16.msra.mxu0 %v4085
  %4376 = vmatprep.subr.bf16.mxu0 %v4088
  %4377 = vmatpush1.bf16.msra.mxu0 %v4087
  %4378 = vmatprep.subr.bf16.mxu0 %v4090
  %4379 = vmatpush1.bf16.msra.mxu0 %v4089
  %4380 = vmatprep.subr.bf16.mxu0 %v4092
  %4381 = vmatpush1.bf16.msra.mxu0 %v4091
  %4382 = vmatprep.subr.bf16.mxu0 %v4094
  %4383 = vmatpush1.bf16.msra.mxu0 %v4093
  %4384 = vmatprep.subr.bf16.mxu0 %v4096
  %4385 = vmatpush1.bf16.msra.mxu0 %v4095
  %4386 = vmatprep.subr.bf16.mxu0 %v4098
  %4387 = vmatpush1.bf16.msra.mxu0 %v4097
  %4388 = vmatprep.subr.bf16.mxu0 %v4100
  %4389 = vmatpush1.bf16.msra.mxu0 %v4099
  %4390 = vmatprep.subr.bf16.mxu0 %v4102
  %4391 = vmatpush1.bf16.msra.mxu0 %v4101
  %4392 = vmatprep.subr.bf16.mxu0 %v4104
  %4393 = vmatpush1.bf16.msra.mxu0 %v4103
  %4394 = vmatprep.subr.bf16.mxu0 %v4106
  %4395 = vmatpush1.bf16.msra.mxu0 %v4105
  %4396 = vmatprep.subr.bf16.mxu0 %v4108
  %4397 = vmatpush1.bf16.msra.mxu0 %v4107
  %4398 = vmatprep.mubr.bf16.mxu0 %v3456
  %4399 = vmatmul.mubr.bf16.gmra.mrb[0].mxu0 %v3455
  %v4400 = vpop.f32.mrb[0].mxu0
  %v4401 = vadd.f32 %v4358, %v4400
  %v4402 = vpop.f32.mrb[0].mxu0
  %v4403 = vadd.f32 %v4360, %v4402
  %v4404 = vpop.f32.mrb[0].mxu0
  %v4405 = vadd.f32 %v4362, %v4404
  %v4406 = vpop.f32.mrb[0].mxu0
  %v4407 = vadd.f32 %v4364, %v4406
  %4408 = vdwg.mxu0
  %v4409 = vpack.c.bf16 %v4405, %v4401
  %v4410 = vpack.c.bf16 %v4407, %v4403
  %v4411 = vmax.bf16 %v4409, 0
  %v4412 = vmax.bf16 %v4410, 0
  %v4413 = vld [vmem:[%s4] sm:$0xf]
  %v4414 = vld [vmem:[%s4 + $0x4] sm:$0xf]
  %v4415 = vld [vmem:[%s4 + $0x8] sm:$0xf]
  %v4416 = vld [vmem:[%s4 + $0xc] sm:$0xf]
  %v4417 = vld [vmem:[%s4 + $0x10] sm:$0xf]
  %v4418 = vld [vmem:[%s4 + $0x14] sm:$0xf]
  %v4419 = vld [vmem:[%s4 + $0x18] sm:$0xf]
  %v4420 = vld [vmem:[%s4 + $0x1c] sm:$0xf]
  %v4421 = vld [vmem:[%s4 + $0x20] sm:$0xf]
  %v4422 = vld [vmem:[%s4 + $0x24] sm:$0xf]
  %v4423 = vld [vmem:[%s4 + $0x28] sm:$0xf]
  %v4424 = vld [vmem:[%s4 + $0x2c] sm:$0xf]
  %v4425 = vld [vmem:[%s4 + $0x30] sm:$0xf]
  %v4426 = vld [vmem:[%s4 + $0x34] sm:$0xf]
  %v4427 = vld [vmem:[%s4 + $0x38] sm:$0xf]
  %v4428 = vld [vmem:[%s4 + $0x3c] sm:$0xf]
  %v4429 = vld [vmem:[%s4 + $0x40] sm:$0xf]
  %v4430 = vld [vmem:[%s4 + $0x44] sm:$0xf]
  %v4431 = vld [vmem:[%s4 + $0x48] sm:$0xf]
  %v4432 = vld [vmem:[%s4 + $0x4c] sm:$0xf]
  %v4433 = vld [vmem:[%s4 + $0x50] sm:$0xf]
  %v4434 = vld [vmem:[%s4 + $0x54] sm:$0xf]
  %v4435 = vld [vmem:[%s4 + $0x58] sm:$0xf]
  %v4436 = vld [vmem:[%s4 + $0x5c] sm:$0xf]
  %v4437 = vld [vmem:[%s4 + $0x60] sm:$0xf]
  %v4438 = vld [vmem:[%s4 + $0x64] sm:$0xf]
  %v4439 = vld [vmem:[%s4 + $0x68] sm:$0xf]
  %v4440 = vld [vmem:[%s4 + $0x6c] sm:$0xf]
  %v4441 = vld [vmem:[%s4 + $0x70] sm:$0xf]
  %v4442 = vld [vmem:[%s4 + $0x74] sm:$0xf]
  %v4443 = vld [vmem:[%s4 + $0x78] sm:$0xf]
  %v4444 = vld [vmem:[%s4 + $0x7c] sm:$0xf]
  %v4477 = vunpack.c.l.b16 %v4413
  %v4478 = vunpack.c.l.b16 %v4414
  %v4479 = vunpack.c.l.b16 %v4415
  %v4480 = vunpack.c.l.b16 %v4416
  %v4481 = vunpack.c.l.b16 %v4417
  %v4482 = vunpack.c.l.b16 %v4418
  %v4483 = vunpack.c.l.b16 %v4419
  %v4484 = vunpack.c.l.b16 %v4420
  %v4485 = vunpack.c.l.b16 %v4421
  %v4486 = vunpack.c.l.b16 %v4422
  %v4487 = vunpack.c.l.b16 %v4423
  %v4488 = vunpack.c.l.b16 %v4424
  %v4489 = vunpack.c.l.b16 %v4425
  %v4490 = vunpack.c.l.b16 %v4426
  %v4491 = vunpack.c.l.b16 %v4427
  %v4492 = vunpack.c.l.b16 %v4428
  %v4493 = vunpack.c.l.b16 %v4429
  %v4494 = vunpack.c.l.b16 %v4430
  %v4495 = vunpack.c.l.b16 %v4431
  %v4496 = vunpack.c.l.b16 %v4432
  %v4497 = vunpack.c.l.b16 %v4433
  %v4498 = vunpack.c.l.b16 %v4434
  %v4499 = vunpack.c.l.b16 %v4435
  %v4500 = vunpack.c.l.b16 %v4436
  %v4501 = vunpack.c.l.b16 %v4437
  %v4502 = vunpack.c.l.b16 %v4438
  %v4503 = vunpack.c.l.b16 %v4439
  %v4504 = vunpack.c.l.b16 %v4440
  %v4505 = vunpack.c.l.b16 %v4441
  %v4506 = vunpack.c.l.b16 %v4442
  %v4507 = vunpack.c.l.b16 %v4443
  %v4508 = vunpack.c.l.b16 %v4444
  %v4509 = vpack.c.b16 %v4478, %v4477
  %v4510 = vpack.c.b16 %v4480, %v4479
  %v4511 = vpack.c.b16 %v4482, %v4481
  %v4512 = vpack.c.b16 %v4484, %v4483
  %v4513 = vpack.c.b16 %v4486, %v4485
  %v4514 = vpack.c.b16 %v4488, %v4487
  %v4515 = vpack.c.b16 %v4490, %v4489
  %v4516 = vpack.c.b16 %v4492, %v4491
  %v4517 = vpack.c.b16 %v4494, %v4493
  %v4518 = vpack.c.b16 %v4496, %v4495
  %v4519 = vpack.c.b16 %v4498, %v4497
  %v4520 = vpack.c.b16 %v4500, %v4499
  %v4521 = vpack.c.b16 %v4502, %v4501
  %v4522 = vpack.c.b16 %v4504, %v4503
  %v4523 = vpack.c.b16 %v4506, %v4505
  %v4524 = vpack.c.b16 %v4508, %v4507
  %4541 = vmatprep.subr.bf16.mxu0 0
  %4542 = vmatpush1.bf16.msra.mxu0 %v4509
  %4543 = vmatprep.subr.bf16.mxu0 0
  %4544 = vmatpush1.bf16.msra.mxu0 %v4510
  %4545 = vmatprep.subr.bf16.mxu0 0
  %4546 = vmatpush1.bf16.msra.mxu0 %v4511
  %4547 = vmatprep.subr.bf16.mxu0 0
  %4548 = vmatpush1.bf16.msra.mxu0 %v4512
  %4549 = vmatprep.subr.bf16.mxu0 0
  %4550 = vmatpush1.bf16.msra.mxu0 %v4513
  %4551 = vmatprep.subr.bf16.mxu0 0
  %4552 = vmatpush1.bf16.msra.mxu0 %v4514
  %4553 = vmatprep.subr.bf16.mxu0 0
  %4554 = vmatpush1.bf16.msra.mxu0 %v4515
  %4555 = vmatprep.subr.bf16.mxu0 0
  %4556 = vmatpush1.bf16.msra.mxu0 %v4516
  %4557 = vmatprep.subr.bf16.mxu0 0
  %4558 = vmatpush1.bf16.msra.mxu0 %v4517
  %4559 = vmatprep.subr.bf16.mxu0 0
  %4560 = vmatpush1.bf16.msra.mxu0 %v4518
  %4561 = vmatprep.subr.bf16.mxu0 0
  %4562 = vmatpush1.bf16.msra.mxu0 %v4519
  %4563 = vmatprep.subr.bf16.mxu0 0
  %4564 = vmatpush1.bf16.msra.mxu0 %v4520
  %4565 = vmatprep.subr.bf16.mxu0 0
  %4566 = vmatpush1.bf16.msra.mxu0 %v4521
  %4567 = vmatprep.subr.bf16.mxu0 0
  %4568 = vmatpush1.bf16.msra.mxu0 %v4522
  %4569 = vmatprep.subr.bf16.mxu0 0
  %4570 = vmatpush1.bf16.msra.mxu0 %v4523
  %4571 = vmatprep.subr.bf16.mxu0 0
  %4572 = vmatpush1.bf16.msra.mxu0 %v4524
  %4573 = vmatprep.mubr.bf16.mxu0 %v4412
  %4574 = vmatmul.mubr.bf16.gmra.mrb[0].mxu0 %v4411
  %v4575 = vpop.f32.mrb[0].mxu0
  %v4576 = vadd.f32 0.0, %v4575
  %v4577 = vpop.f32.mrb[0].mxu0
  %v4578 = vpop.f32.mrb[0].mxu0
  %v4579 = vadd.f32 0.0, %v4578
  %v4580 = vpop.f32.mrb[0].mxu0
  %4581 = vdwg.mxu0
  %4582 = vst [vmem:[%s5] sm:$0xff] %v4576
  %4583 = vst [vmem:[%s5 + $0x8] sm:$0xff] %v4579
  // Predicated region
  $region22: #{discriminator_forward.1} parent=0 // pred_check
    _
  $region23: #{discriminator_forward.1} parent=0 // pred_check_branch
    %4585 = sbr.rel (0) target = $region25
  $region24: #{discriminator_forward.1} parent=0 // pred_region
    _
  $region25: #{discriminator_forward.1} parent=0 // pred_fallthru
    _
  // Predicated region
  $region26: #{discriminator_forward.1} parent=0 // pred_check
    _
  $region27: #{discriminator_forward.1} parent=0 // pred_check_branch
    %4587 = sbr.rel (0) target = $region29
  $region28: #{discriminator_forward.1} parent=0 // pred_region
    _
  $region29: #{discriminator_forward.1} parent=0 // pred_fallthru
    _

</llo_original>
